<compile_context>
chip_gen: v6e
topology: v6e:2x2x1
jax: 0.10.0
libtpu: 0.0.40
codegen_flags: <defaults>
</compile_context>

<pallas_src>
import functools

import jax
import jax.numpy as jnp
from jax.experimental import pallas as pl
from jax.experimental.pallas import tpu as pltpu  # noqa: F401  (TPU backend)


# ----------------------------------------------------------------------------
# Shared math helpers (pure jnp; traced both inside the kernel and in the
# pure-JAX reference used for the correctness check).
# ----------------------------------------------------------------------------
def _layernorm(x, gamma, beta, eps):
    mu = jnp.mean(x, axis=-1, keepdims=True)
    var = jnp.mean((x - mu) ** 2, axis=-1, keepdims=True)
    return (x - mu) * jax.lax.rsqrt(var + eps) * gamma + beta


def _gelu(x):
    # tanh-approx GELU (as used in BERT-pytorch)
    return 0.5 * x * (1.0 + jnp.tanh(0.7978845608028654 * (x + 0.044715 * x * x * x)))


# ----------------------------------------------------------------------------
# Fused kernel: embedding -> n_layers encoder layers -> classifier head.
# Per-layer weights are stacked along dim 0; the layer/head loops are
# statically unrolled and the activation never leaves VMEM.
# ----------------------------------------------------------------------------
def fused_bert_kernel(
    x_ref, w_in_ref, emb_bias_ref,
    ln1g_ref, ln1b_ref, wqkv_ref, bqkv_ref, wo_ref, bo_ref,
    ln2g_ref, ln2b_ref, w1_ref, b1_ref, w2_ref, b2_ref,
    wfc_ref, bfc_ref,
    distr_ref, logits_ref,
    *, n_layers, n_heads, B, S, H, eps,
):
    BS = B * S
    hd = H // n_heads

    # ---- embedding: (B*S, F) @ (F, H), then (+ input-bias + positional) ----
    # (input bias was folded into emb_bias at parameter-prep time)
    xin = x_ref[...].reshape(BS, -1)
    x = jnp.dot(xin, w_in_ref[...], preferred_element_type=jnp.float32)
    x = (x.reshape(B, S, H) + emb_bias_ref[...]).reshape(BS, H)

    # ---- transformer encoder layers (statically unrolled) ----
    for li in range(n_layers):
        # --- multi-head self-attention sublayer (pre-norm) ---
        h = _layernorm(x, ln1g_ref[li], ln1b_ref[li], eps)
        # packed QKV: one (BS, H) @ (H, 3H) matmul; 1/sqrt(hd) already folded
        # into the Q columns at parameter-prep time.
        qkv = jnp.dot(h, wqkv_ref[li], preferred_element_type=jnp.float32) + bqkv_ref[li]
        q3 = qkv[:, 0 * H:1 * H].reshape(B, S, H)
        k3 = qkv[:, 1 * H:2 * H].reshape(B, S, H)
        v3 = qkv[:, 2 * H:3 * H].reshape(B, S, H)
        wo = wo_ref[li]

        # TODO(synk): no attention / padding mask (not present in given source).
        attn = jnp.zeros((BS, H), jnp.float32)
        for hi in range(n_heads):
            sl = slice(hi * hd, (hi + 1) * hd)
            qh, kh, vh = q3[:, :, sl], k3[:, :, sl], v3[:, :, sl]
            # batched over B; contraction consumes K directly (no explicit .T)
            s = jnp.einsum('bqd,bkd->bqk', qh, kh,
                           preferred_element_type=jnp.float32)
            s = s - jnp.max(s, axis=-1, keepdims=True)
            p = jnp.exp(s)
            p = p * pl.reciprocal(jnp.sum(p, axis=-1, keepdims=True), approx=True)
            oh = jnp.einsum('bqk,bkd->bqd', p, vh,
                            preferred_element_type=jnp.float32)
            # fold the per-head slice of the output projection in here
            # (replaces jnp.concatenate over heads)
            attn = attn + jnp.dot(oh.reshape(BS, hd), wo[sl, :],
                                  preferred_element_type=jnp.float32)
        x = x + attn + bo_ref[li]

        # --- feed-forward sublayer (pre-norm) ---
        h2 = _layernorm(x, ln2g_ref[li], ln2b_ref[li], eps)
        ff = _gelu(jnp.dot(h2, w1_ref[li], preferred_element_type=jnp.float32)
                   + b1_ref[li])
        ff = jnp.dot(ff, w2_ref[li], preferred_element_type=jnp.float32) + b2_ref[li]
        x = x + ff

    # ---- encoder output (== distr / x1 in the PyTorch forward) ----
    x3 = x.reshape(B, S, H)
    distr_ref[...] = x3

    # ---- classifier head: logits[b] = sum_s x[b, s, :] @ Wfc[s]  (+ bias) ----
    # Equivalent to flatten(x3) @ Wfc; expressed as an S-step accumulation of
    # lane-preserving (B, H) @ (H, 128) matmuls so no lane-merging reshape is
    # needed.  Wfc is pre-reshaped to (S, H, 128) with zero padding so the
    # output slab store is lane-dense (unmasked vst).
    logits = jnp.zeros((B, logits_ref.shape[-1]), jnp.float32)
    for s in range(S):
        logits = logits + jnp.dot(x3[:, s, :], wfc_ref[s],
                                  preferred_element_type=jnp.float32)
    logits_ref[...] = logits + bfc_ref[...]


# ----------------------------------------------------------------------------
# Wrapper
# ----------------------------------------------------------------------------
def semg_bert_forward(x, packed, *, n_heads, eps=1e-6):
    B, S, _ = x.shape
    H = packed["w_in"].shape[1]
    L = packed["wqkv"].shape[0]
    n_out = packed["n_out"]
    out_pad = packed["wfc"].shape[-1]

    kernel = functools.partial(
        fused_bert_kernel, n_layers=L, n_heads=n_heads, B=B, S=S, H=H, eps=eps)

    distr, logits_pad = pl.pallas_call(
        kernel,
        out_shape=(
            jax.ShapeDtypeStruct((B, S, H), jnp.float32),
            jax.ShapeDtypeStruct((B, out_pad), jnp.float32),
        ),
    )(
        x, packed["w_in"], packed["emb_bias"],
        packed["ln1_g"], packed["ln1_b"], packed["wqkv"], packed["bqkv"],
        packed["wo"], packed["bo"], packed["ln2_g"], packed["ln2_b"],
        packed["w1"], packed["b1"], packed["w2"], packed["b2"],
        packed["wfc"], packed["bfc"],
    )

    output = logits_pad[:, :n_out].reshape(B, 1, n_out)
    return output, distr


# ----------------------------------------------------------------------------
# Parameter packing: stack per-layer weights, pack QKV (fold 1/sqrt(hd) into
# Q), fold the input bias into the positional table, zero-pad the classifier
# to a lane-dense (S, H, 128) tensor.
# ----------------------------------------------------------------------------
def prepare_params(params, *, n_heads):
    H = params["w_in"].shape[1]
    S = params["pos"].shape[0]
    hd = H // n_heads
    scale = 1.0 / float(hd) ** 0.5

    def stack(name):
        return jnp.stack([lp[name] for lp in params["layers"]])

    wqkv = jnp.concatenate([stack("wq") * scale, stack("wk"), stack("wv")], axis=-1)
    bqkv = jnp.concatenate([stack("bq") * scale, stack("bk"), stack("bv")], axis=-1)

    wfc = params["w_fc"]                       # (S*H, n_out)
    n_out = wfc.shape[1]
    out_pad = ((n_out + 127) // 128) * 128     # lane-dense classifier output
    wfc_pad = jnp.pad(wfc, ((0, 0), (0, out_pad - n_out))).reshape(S, H, out_pad)
    bfc_pad = jnp.pad(params["b_fc"], ((0, 0), (0, out_pad - n_out)))

    return dict(
        w_in=params["w_in"],
        emb_bias=params["pos"] + params["b_in"],   # (S, H)
        ln1_g=stack("ln1_g"), ln1_b=stack("ln1_b"),
        wqkv=wqkv, bqkv=bqkv,
        wo=stack("wo"), bo=stack("bo"),
        ln2_g=stack("ln2_g"), ln2_b=stack("ln2_b"),
        w1=stack("w1"), b1=stack("b1"), w2=stack("w2"), b2=stack("b2"),
        wfc=wfc_pad, bfc=bfc_pad, n_out=n_out,
    )


# ----------------------------------------------------------------------------
# Pure-JAX reference (same reconstructed forward) for a correctness check.
# ----------------------------------------------------------------------------
def semg_bert_reference(x, params, *, n_heads, eps=1e-6):
    B, S, F = x.shape
    H = params["w_in"].shape[1]
    hd = H // n_heads
    scale = 1.0 / float(hd) ** 0.5

    h = x.reshape(B * S, F) @ params["w_in"] + params["b_in"]
    h = (h.reshape(B, S, H) + params["pos"]).reshape(B * S, H)
    for lp in params["layers"]:
        y = _layernorm(h, lp["ln1_g"], lp["ln1_b"], eps)
        q = ((y @ lp["wq"] + lp["bq"]) * scale).reshape(B, S, n_heads, hd)
        k = (y @ lp["wk"] + lp["bk"]).reshape(B, S, n_heads, hd)
        v = (y @ lp["wv"] + lp["bv"]).reshape(B, S, n_heads, hd)
        q, k, v = (t.transpose(0, 2, 1, 3) for t in (q, k, v))   # (B, nh, S, hd)
        s = jnp.einsum('bhqd,bhkd->bhqk', q, k)
        p = jax.nn.softmax(s, axis=-1)
        o = jnp.einsum('bhqk,bhkd->bhqd', p, v).transpose(0, 2, 1, 3).reshape(B * S, H)
        h = h + o @ lp["wo"] + lp["bo"]
        y2 = _layernorm(h, lp["ln2_g"], lp["ln2_b"], eps)
        ff = _gelu(y2 @ lp["w1"] + lp["b1"]) @ lp["w2"] + lp["b2"]
        h = h + ff
    distr = h.reshape(B, S, H)
    logits = distr.reshape(B, -1) @ params["w_fc"] + params["b_fc"]
    return logits.reshape(B, 1, -1), distr


# ----------------------------------------------------------------------------
# Deterministic parameter init (synthetic — shapes follow the module __init__)
# ----------------------------------------------------------------------------
def init_params(key, *, vocab_size, hidden, feature_dim, n_layers):
    ff = 4 * hidden
    keys = jax.random.split(key, 4 + n_layers)

    def w(k, shape, std=0.02):
        return (std * jax.random.normal(k, shape)).astype(jnp.float32)

    params = {
        "w_in": w(keys[0], (feature_dim, hidden)),
        "b_in": jnp.zeros((1, hidden), jnp.float32),
        "pos": w(keys[1], (vocab_size, hidden)),
        "w_fc": w(keys[2], (vocab_size * hidden, 10)),
        "b_fc": jnp.zeros((1, 10), jnp.float32),
        "layers": [],
    }
    for li in range(n_layers):
        lk = jax.random.split(keys[4 + li], 6)
        params["layers"].append({
            "ln1_g": jnp.ones((1, hidden), jnp.float32),
            "ln1_b": jnp.zeros((1, hidden), jnp.float32),
            "wq": w(lk[0], (hidden, hidden)), "bq": jnp.zeros((1, hidden), jnp.float32),
            "wk": w(lk[1], (hidden, hidden)), "bk": jnp.zeros((1, hidden), jnp.float32),
            "wv": w(lk[2], (hidden, hidden)), "bv": jnp.zeros((1, hidden), jnp.float32),
            "wo": w(lk[3], (hidden, hidden)), "bo": jnp.zeros((1, hidden), jnp.float32),
            "ln2_g": jnp.ones((1, hidden), jnp.float32),
            "ln2_b": jnp.zeros((1, hidden), jnp.float32),
            "w1": w(lk[4], (hidden, ff)), "b1": jnp.zeros((1, ff), jnp.float32),
            "w2": w(lk[5], (ff, hidden)), "b2": jnp.zeros((1, hidden), jnp.float32),
        })
    return params


if __name__ == "__main__":
    # Small shapes consistent with the module:
    #   vocab_size (= seq length) = 8, feature_dim = 6, hidden = 32,
    #   n_layers = 2, attn_heads = 4, batch = 2.
    B, VOCAB, FEAT, HIDDEN, N_LAYERS, N_HEADS = 2, 8, 6, 32, 2, 4

    key = jax.random.PRNGKey(0)
    k_x, k_p = jax.random.split(key)
    x = jax.random.normal(k_x, (B, VOCAB, FEAT), dtype=jnp.float32)
    params = init_params(
        k_p, vocab_size=VOCAB, hidden=HIDDEN, feature_dim=FEAT, n_layers=N_LAYERS
    )
    packed = prepare_params(params, n_heads=N_HEADS)

    output, distr = semg_bert_forward(x, packed, n_heads=N_HEADS)
    jax.block_until_ready((output, distr))

    assert output.shape == (B, 1, 10), output.shape
    assert distr.shape == (B, VOCAB, HIDDEN), distr.shape

    # Correctness check against a pure-JAX reference (loose tolerance covers
    # the approx-reciprocal softmax denominator used in-kernel).
    ref_out, ref_distr = semg_bert_reference(x, params, n_heads=N_HEADS)
    assert jnp.allclose(output, ref_out, atol=2e-3, rtol=2e-2), \
        float(jnp.max(jnp.abs(output - ref_out)))
    assert jnp.allclose(distr, ref_distr, atol=2e-3, rtol=2e-2), \
        float(jnp.max(jnp.abs(distr - ref_distr)))

    print("KERNEL_OK")
</pallas_src>

<mosaic_0001>
module attributes {stable_mosaic.version = 11 : i64} {
  func.func @fused_bert_kernel(%arg0: memref<2x8x6xf32, #tpu.memory_space<vmem>>, %arg1: memref<6x32xf32, #tpu.memory_space<vmem>>, %arg2: memref<8x32xf32, #tpu.memory_space<vmem>>, %arg3: memref<2x1x32xf32, #tpu.memory_space<vmem>>, %arg4: memref<2x1x32xf32, #tpu.memory_space<vmem>>, %arg5: memref<2x32x96xf32, #tpu.memory_space<vmem>>, %arg6: memref<2x1x96xf32, #tpu.memory_space<vmem>>, %arg7: memref<2x32x32xf32, #tpu.memory_space<vmem>>, %arg8: memref<2x1x32xf32, #tpu.memory_space<vmem>>, %arg9: memref<2x1x32xf32, #tpu.memory_space<vmem>>, %arg10: memref<2x1x32xf32, #tpu.memory_space<vmem>>, %arg11: memref<2x32x128xf32, #tpu.memory_space<vmem>>, %arg12: memref<2x1x128xf32, #tpu.memory_space<vmem>>, %arg13: memref<2x128x32xf32, #tpu.memory_space<vmem>>, %arg14: memref<2x1x32xf32, #tpu.memory_space<vmem>>, %arg15: memref<8x32x128xf32, #tpu.memory_space<vmem>>, %arg16: memref<1x128xf32, #tpu.memory_space<vmem>>, %arg17: memref<2x8x32xf32, #tpu.memory_space<vmem>>, %arg18: memref<2x128xf32, #tpu.memory_space<vmem>>) attributes {dimension_semantics = [], scalar_prefetch = 0 : i64, scratch_operands = 0 : i64, tpu.core_type = #tpu.core_type<tc>} {
    %c0 = arith.constant 0 : index
    %c0_0 = arith.constant 0 : index
    %c0_1 = arith.constant 0 : index
    %0 = vector.load %arg0[%c0, %c0_0, %c0_1] : memref<2x8x6xf32, #tpu.memory_space<vmem>>, vector<2x8x6xf32>
    %1 = vector.shape_cast %0 : vector<2x8x6xf32> to vector<16x6xf32>
    %c0_2 = arith.constant 0 : index
    %c0_3 = arith.constant 0 : index
    %2 = vector.load %arg1[%c0_2, %c0_3] : memref<6x32xf32, #tpu.memory_space<vmem>>, vector<6x32xf32>
    %cst = arith.constant dense<0.000000e+00> : vector<16x32xf32>
    %3 = tpu.matmul %1, %2, %cst {dimension_numbers = #tpu.dot_dimension_numbers<[1], [0], [0], [1], [0, 0, 1, 1], [], []>} : vector<16x6xf32>, vector<6x32xf32>, vector<16x32xf32> -> vector<16x32xf32>
    %4 = vector.shape_cast %3 : vector<16x32xf32> to vector<2x8x32xf32>
    %c0_4 = arith.constant 0 : index
    %c0_5 = arith.constant 0 : index
    %5 = vector.load %arg2[%c0_4, %c0_5] : memref<8x32xf32, #tpu.memory_space<vmem>>, vector<8x32xf32>
    %6 = vector.shape_cast %5 : vector<8x32xf32> to vector<1x8x32xf32>
    %7 = vector.broadcast %6 : vector<1x8x32xf32> to vector<2x8x32xf32>
    %8 = arith.addf %4, %7 : vector<2x8x32xf32>
    %9 = vector.shape_cast %8 : vector<2x8x32xf32> to vector<16x32xf32>
    %c0_6 = arith.constant 0 : index
    %c0_7 = arith.constant 0 : index
    %c0_8 = arith.constant 0 : index
    %10 = vector.load %arg3[%c0_6, %c0_7, %c0_8] : memref<2x1x32xf32, #tpu.memory_space<vmem>>, vector<1x1x32xf32>
    %11 = vector.shape_cast %10 : vector<1x1x32xf32> to vector<1x32xf32>
    %c0_9 = arith.constant 0 : index
    %c0_10 = arith.constant 0 : index
    %c0_11 = arith.constant 0 : index
    %12 = vector.load %arg4[%c0_9, %c0_10, %c0_11] : memref<2x1x32xf32, #tpu.memory_space<vmem>>, vector<1x1x32xf32>
    %13 = vector.shape_cast %12 : vector<1x1x32xf32> to vector<1x32xf32>
    %cst_12 = arith.constant dense<0.000000e+00> : vector<16xf32>
    %14 = vector.multi_reduction <add>, %9, %cst_12 [1] : vector<16x32xf32> to vector<16xf32>
    %15 = vector.shape_cast %14 : vector<16xf32> to vector<16x1xf32>
    %cst_13 = arith.constant 3.200000e+01 : f32
    %16 = vector.broadcast %cst_13 : f32 to vector<16x1xf32>
    %17 = arith.divf %15, %16 : vector<16x1xf32>
    %18 = vector.broadcast %17 : vector<16x1xf32> to vector<16x32xf32>
    %19 = arith.subf %9, %18 : vector<16x32xf32>
    %20 = arith.mulf %19, %19 : vector<16x32xf32>
    %cst_14 = arith.constant dense<0.000000e+00> : vector<16xf32>
    %21 = vector.multi_reduction <add>, %20, %cst_14 [1] : vector<16x32xf32> to vector<16xf32>
    %22 = vector.shape_cast %21 : vector<16xf32> to vector<16x1xf32>
    %cst_15 = arith.constant 3.200000e+01 : f32
    %23 = vector.broadcast %cst_15 : f32 to vector<16x1xf32>
    %24 = arith.divf %22, %23 : vector<16x1xf32>
    %25 = vector.broadcast %17 : vector<16x1xf32> to vector<16x32xf32>
    %26 = arith.subf %9, %25 : vector<16x32xf32>
    %cst_16 = arith.constant 9.99999997E-7 : f32
    %27 = vector.broadcast %cst_16 : f32 to vector<16x1xf32>
    %28 = arith.addf %24, %27 : vector<16x1xf32>
    %29 = math.rsqrt %28 : vector<16x1xf32>
    %30 = vector.broadcast %29 : vector<16x1xf32> to vector<16x32xf32>
    %31 = arith.mulf %26, %30 : vector<16x32xf32>
    %32 = vector.broadcast %11 : vector<1x32xf32> to vector<16x32xf32>
    %33 = arith.mulf %31, %32 : vector<16x32xf32>
    %34 = vector.broadcast %13 : vector<1x32xf32> to vector<16x32xf32>
    %35 = arith.addf %33, %34 : vector<16x32xf32>
    %c0_17 = arith.constant 0 : index
    %c0_18 = arith.constant 0 : index
    %c0_19 = arith.constant 0 : index
    %36 = vector.load %arg5[%c0_17, %c0_18, %c0_19] : memref<2x32x96xf32, #tpu.memory_space<vmem>>, vector<1x32x96xf32>
    %37 = vector.shape_cast %36 : vector<1x32x96xf32> to vector<32x96xf32>
    %cst_20 = arith.constant dense<0.000000e+00> : vector<16x96xf32>
    %38 = tpu.matmul %35, %37, %cst_20 {dimension_numbers = #tpu.dot_dimension_numbers<[1], [0], [0], [1], [0, 0, 1, 1], [], []>} : vector<16x32xf32>, vector<32x96xf32>, vector<16x96xf32> -> vector<16x96xf32>
    %c0_21 = arith.constant 0 : index
    %c0_22 = arith.constant 0 : index
    %c0_23 = arith.constant 0 : index
    %39 = vector.load %arg6[%c0_21, %c0_22, %c0_23] : memref<2x1x96xf32, #tpu.memory_space<vmem>>, vector<1x1x96xf32>
    %40 = vector.shape_cast %39 : vector<1x1x96xf32> to vector<1x96xf32>
    %41 = vector.broadcast %40 : vector<1x96xf32> to vector<16x96xf32>
    %42 = arith.addf %38, %41 : vector<16x96xf32>
    %43 = vector.extract_strided_slice %42 {offsets = [0, 0], sizes = [16, 32], strides = [1, 1]} : vector<16x96xf32> to vector<16x32xf32>
    %44 = vector.shape_cast %43 : vector<16x32xf32> to vector<2x8x32xf32>
    %45 = vector.extract_strided_slice %42 {offsets = [0, 32], sizes = [16, 32], strides = [1, 1]} : vector<16x96xf32> to vector<16x32xf32>
    %46 = vector.shape_cast %45 : vector<16x32xf32> to vector<2x8x32xf32>
    %47 = vector.extract_strided_slice %42 {offsets = [0, 64], sizes = [16, 32], strides = [1, 1]} : vector<16x96xf32> to vector<16x32xf32>
    %48 = vector.shape_cast %47 : vector<16x32xf32> to vector<2x8x32xf32>
    %c0_24 = arith.constant 0 : index
    %c0_25 = arith.constant 0 : index
    %c0_26 = arith.constant 0 : index
    %49 = vector.load %arg7[%c0_24, %c0_25, %c0_26] : memref<2x32x32xf32, #tpu.memory_space<vmem>>, vector<1x32x32xf32>
    %50 = vector.shape_cast %49 : vector<1x32x32xf32> to vector<32x32xf32>
    %cst_27 = arith.constant 0.000000e+00 : f32
    %51 = vector.broadcast %cst_27 : f32 to vector<16x32xf32>
    %52 = vector.extract_strided_slice %44 {offsets = [0, 0, 0], sizes = [2, 8, 8], strides = [1, 1, 1]} : vector<2x8x32xf32> to vector<2x8x8xf32>
    %53 = vector.extract_strided_slice %46 {offsets = [0, 0, 0], sizes = [2, 8, 8], strides = [1, 1, 1]} : vector<2x8x32xf32> to vector<2x8x8xf32>
    %54 = vector.extract_strided_slice %48 {offsets = [0, 0, 0], sizes = [2, 8, 8], strides = [1, 1, 1]} : vector<2x8x32xf32> to vector<2x8x8xf32>
    "tpu.trace_start"() <{level = 10 : i32, message = "bqd,bkd->bqk"}> : () -> ()
    %cst_28 = arith.constant dense<0.000000e+00> : vector<2x8x8xf32>
    %55 = tpu.matmul %52, %53, %cst_28 {dimension_numbers = #tpu.dot_dimension_numbers<[2], [2], [1], [1], [0, 0, 0, 1, 1, 1], [0], [0]>} : vector<2x8x8xf32>, vector<2x8x8xf32>, vector<2x8x8xf32> -> vector<2x8x8xf32>
    "tpu.trace_stop"() : () -> ()
    %cst_29 = arith.constant dense<0xFF800000> : vector<2x8xf32>
    %56 = vector.multi_reduction <maximumf>, %55, %cst_29 [2] : vector<2x8x8xf32> to vector<2x8xf32>
    %57 = vector.shape_cast %56 : vector<2x8xf32> to vector<2x8x1xf32>
    %58 = vector.broadcast %57 : vector<2x8x1xf32> to vector<2x8x8xf32>
    %59 = arith.subf %55, %58 : vector<2x8x8xf32>
    %60 = math.exp %59 : vector<2x8x8xf32>
    %cst_30 = arith.constant dense<0.000000e+00> : vector<2x8xf32>
    %61 = vector.multi_reduction <add>, %60, %cst_30 [2] : vector<2x8x8xf32> to vector<2x8xf32>
    %62 = vector.shape_cast %61 : vector<2x8xf32> to vector<2x8x1xf32>
    %63 = tpu.reciprocal %62 {approx = true} : vector<2x8x1xf32> -> vector<2x8x1xf32>
    %64 = vector.broadcast %63 : vector<2x8x1xf32> to vector<2x8x8xf32>
    %65 = arith.mulf %60, %64 : vector<2x8x8xf32>
    "tpu.trace_start"() <{level = 10 : i32, message = "bqk,bkd->bqd"}> : () -> ()
    %cst_31 = arith.constant dense<0.000000e+00> : vector<2x8x8xf32>
    %66 = tpu.matmul %65, %54, %cst_31 {dimension_numbers = #tpu.dot_dimension_numbers<[2], [1], [1], [2], [0, 0, 0, 1, 1, 2], [0], [0]>} : vector<2x8x8xf32>, vector<2x8x8xf32>, vector<2x8x8xf32> -> vector<2x8x8xf32>
    "tpu.trace_stop"() : () -> ()
    %67 = vector.shape_cast %66 : vector<2x8x8xf32> to vector<16x8xf32>
    %68 = vector.extract_strided_slice %50 {offsets = [0, 0], sizes = [8, 32], strides = [1, 1]} : vector<32x32xf32> to vector<8x32xf32>
    %cst_32 = arith.constant dense<0.000000e+00> : vector<16x32xf32>
    %69 = tpu.matmul %67, %68, %cst_32 {dimension_numbers = #tpu.dot_dimension_numbers<[1], [0], [0], [1], [0, 0, 1, 1], [], []>} : vector<16x8xf32>, vector<8x32xf32>, vector<16x32xf32> -> vector<16x32xf32>
    %70 = arith.addf %51, %69 : vector<16x32xf32>
    %71 = vector.extract_strided_slice %44 {offsets = [0, 0, 8], sizes = [2, 8, 8], strides = [1, 1, 1]} : vector<2x8x32xf32> to vector<2x8x8xf32>
    %72 = vector.extract_strided_slice %46 {offsets = [0, 0, 8], sizes = [2, 8, 8], strides = [1, 1, 1]} : vector<2x8x32xf32> to vector<2x8x8xf32>
    %73 = vector.extract_strided_slice %48 {offsets = [0, 0, 8], sizes = [2, 8, 8], strides = [1, 1, 1]} : vector<2x8x32xf32> to vector<2x8x8xf32>
    "tpu.trace_start"() <{level = 10 : i32, message = "bqd,bkd->bqk"}> : () -> ()
    %cst_33 = arith.constant dense<0.000000e+00> : vector<2x8x8xf32>
    %74 = tpu.matmul %71, %72, %cst_33 {dimension_numbers = #tpu.dot_dimension_numbers<[2], [2], [1], [1], [0, 0, 0, 1, 1, 1], [0], [0]>} : vector<2x8x8xf32>, vector<2x8x8xf32>, vector<2x8x8xf32> -> vector<2x8x8xf32>
    "tpu.trace_stop"() : () -> ()
    %cst_34 = arith.constant dense<0xFF800000> : vector<2x8xf32>
    %75 = vector.multi_reduction <maximumf>, %74, %cst_34 [2] : vector<2x8x8xf32> to vector<2x8xf32>
    %76 = vector.shape_cast %75 : vector<2x8xf32> to vector<2x8x1xf32>
    %77 = vector.broadcast %76 : vector<2x8x1xf32> to vector<2x8x8xf32>
    %78 = arith.subf %74, %77 : vector<2x8x8xf32>
    %79 = math.exp %78 : vector<2x8x8xf32>
    %cst_35 = arith.constant dense<0.000000e+00> : vector<2x8xf32>
    %80 = vector.multi_reduction <add>, %79, %cst_35 [2] : vector<2x8x8xf32> to vector<2x8xf32>
    %81 = vector.shape_cast %80 : vector<2x8xf32> to vector<2x8x1xf32>
    %82 = tpu.reciprocal %81 {approx = true} : vector<2x8x1xf32> -> vector<2x8x1xf32>
    %83 = vector.broadcast %82 : vector<2x8x1xf32> to vector<2x8x8xf32>
    %84 = arith.mulf %79, %83 : vector<2x8x8xf32>
    "tpu.trace_start"() <{level = 10 : i32, message = "bqk,bkd->bqd"}> : () -> ()
    %cst_36 = arith.constant dense<0.000000e+00> : vector<2x8x8xf32>
    %85 = tpu.matmul %84, %73, %cst_36 {dimension_numbers = #tpu.dot_dimension_numbers<[2], [1], [1], [2], [0, 0, 0, 1, 1, 2], [0], [0]>} : vector<2x8x8xf32>, vector<2x8x8xf32>, vector<2x8x8xf32> -> vector<2x8x8xf32>
    "tpu.trace_stop"() : () -> ()
    %86 = vector.shape_cast %85 : vector<2x8x8xf32> to vector<16x8xf32>
    %87 = vector.extract_strided_slice %50 {offsets = [8, 0], sizes = [8, 32], strides = [1, 1]} : vector<32x32xf32> to vector<8x32xf32>
    %cst_37 = arith.constant dense<0.000000e+00> : vector<16x32xf32>
    %88 = tpu.matmul %86, %87, %cst_37 {dimension_numbers = #tpu.dot_dimension_numbers<[1], [0], [0], [1], [0, 0, 1, 1], [], []>} : vector<16x8xf32>, vector<8x32xf32>, vector<16x32xf32> -> vector<16x32xf32>
    %89 = arith.addf %70, %88 : vector<16x32xf32>
    %90 = vector.extract_strided_slice %44 {offsets = [0, 0, 16], sizes = [2, 8, 8], strides = [1, 1, 1]} : vector<2x8x32xf32> to vector<2x8x8xf32>
    %91 = vector.extract_strided_slice %46 {offsets = [0, 0, 16], sizes = [2, 8, 8], strides = [1, 1, 1]} : vector<2x8x32xf32> to vector<2x8x8xf32>
    %92 = vector.extract_strided_slice %48 {offsets = [0, 0, 16], sizes = [2, 8, 8], strides = [1, 1, 1]} : vector<2x8x32xf32> to vector<2x8x8xf32>
    "tpu.trace_start"() <{level = 10 : i32, message = "bqd,bkd->bqk"}> : () -> ()
    %cst_38 = arith.constant dense<0.000000e+00> : vector<2x8x8xf32>
    %93 = tpu.matmul %90, %91, %cst_38 {dimension_numbers = #tpu.dot_dimension_numbers<[2], [2], [1], [1], [0, 0, 0, 1, 1, 1], [0], [0]>} : vector<2x8x8xf32>, vector<2x8x8xf32>, vector<2x8x8xf32> -> vector<2x8x8xf32>
    "tpu.trace_stop"() : () -> ()
    %cst_39 = arith.constant dense<0xFF800000> : vector<2x8xf32>
    %94 = vector.multi_reduction <maximumf>, %93, %cst_39 [2] : vector<2x8x8xf32> to vector<2x8xf32>
    %95 = vector.shape_cast %94 : vector<2x8xf32> to vector<2x8x1xf32>
    %96 = vector.broadcast %95 : vector<2x8x1xf32> to vector<2x8x8xf32>
    %97 = arith.subf %93, %96 : vector<2x8x8xf32>
    %98 = math.exp %97 : vector<2x8x8xf32>
    %cst_40 = arith.constant dense<0.000000e+00> : vector<2x8xf32>
    %99 = vector.multi_reduction <add>, %98, %cst_40 [2] : vector<2x8x8xf32> to vector<2x8xf32>
    %100 = vector.shape_cast %99 : vector<2x8xf32> to vector<2x8x1xf32>
    %101 = tpu.reciprocal %100 {approx = true} : vector<2x8x1xf32> -> vector<2x8x1xf32>
    %102 = vector.broadcast %101 : vector<2x8x1xf32> to vector<2x8x8xf32>
    %103 = arith.mulf %98, %102 : vector<2x8x8xf32>
    "tpu.trace_start"() <{level = 10 : i32, message = "bqk,bkd->bqd"}> : () -> ()
    %cst_41 = arith.constant dense<0.000000e+00> : vector<2x8x8xf32>
    %104 = tpu.matmul %103, %92, %cst_41 {dimension_numbers = #tpu.dot_dimension_numbers<[2], [1], [1], [2], [0, 0, 0, 1, 1, 2], [0], [0]>} : vector<2x8x8xf32>, vector<2x8x8xf32>, vector<2x8x8xf32> -> vector<2x8x8xf32>
    "tpu.trace_stop"() : () -> ()
    %105 = vector.shape_cast %104 : vector<2x8x8xf32> to vector<16x8xf32>
    %106 = vector.extract_strided_slice %50 {offsets = [16, 0], sizes = [8, 32], strides = [1, 1]} : vector<32x32xf32> to vector<8x32xf32>
    %cst_42 = arith.constant dense<0.000000e+00> : vector<16x32xf32>
    %107 = tpu.matmul %105, %106, %cst_42 {dimension_numbers = #tpu.dot_dimension_numbers<[1], [0], [0], [1], [0, 0, 1, 1], [], []>} : vector<16x8xf32>, vector<8x32xf32>, vector<16x32xf32> -> vector<16x32xf32>
    %108 = arith.addf %89, %107 : vector<16x32xf32>
    %109 = vector.extract_strided_slice %44 {offsets = [0, 0, 24], sizes = [2, 8, 8], strides = [1, 1, 1]} : vector<2x8x32xf32> to vector<2x8x8xf32>
    %110 = vector.extract_strided_slice %46 {offsets = [0, 0, 24], sizes = [2, 8, 8], strides = [1, 1, 1]} : vector<2x8x32xf32> to vector<2x8x8xf32>
    %111 = vector.extract_strided_slice %48 {offsets = [0, 0, 24], sizes = [2, 8, 8], strides = [1, 1, 1]} : vector<2x8x32xf32> to vector<2x8x8xf32>
    "tpu.trace_start"() <{level = 10 : i32, message = "bqd,bkd->bqk"}> : () -> ()
    %cst_43 = arith.constant dense<0.000000e+00> : vector<2x8x8xf32>
    %112 = tpu.matmul %109, %110, %cst_43 {dimension_numbers = #tpu.dot_dimension_numbers<[2], [2], [1], [1], [0, 0, 0, 1, 1, 1], [0], [0]>} : vector<2x8x8xf32>, vector<2x8x8xf32>, vector<2x8x8xf32> -> vector<2x8x8xf32>
    "tpu.trace_stop"() : () -> ()
    %cst_44 = arith.constant dense<0xFF800000> : vector<2x8xf32>
    %113 = vector.multi_reduction <maximumf>, %112, %cst_44 [2] : vector<2x8x8xf32> to vector<2x8xf32>
    %114 = vector.shape_cast %113 : vector<2x8xf32> to vector<2x8x1xf32>
    %115 = vector.broadcast %114 : vector<2x8x1xf32> to vector<2x8x8xf32>
    %116 = arith.subf %112, %115 : vector<2x8x8xf32>
    %117 = math.exp %116 : vector<2x8x8xf32>
    %cst_45 = arith.constant dense<0.000000e+00> : vector<2x8xf32>
    %118 = vector.multi_reduction <add>, %117, %cst_45 [2] : vector<2x8x8xf32> to vector<2x8xf32>
    %119 = vector.shape_cast %118 : vector<2x8xf32> to vector<2x8x1xf32>
    %120 = tpu.reciprocal %119 {approx = true} : vector<2x8x1xf32> -> vector<2x8x1xf32>
    %121 = vector.broadcast %120 : vector<2x8x1xf32> to vector<2x8x8xf32>
    %122 = arith.mulf %117, %121 : vector<2x8x8xf32>
    "tpu.trace_start"() <{level = 10 : i32, message = "bqk,bkd->bqd"}> : () -> ()
    %cst_46 = arith.constant dense<0.000000e+00> : vector<2x8x8xf32>
    %123 = tpu.matmul %122, %111, %cst_46 {dimension_numbers = #tpu.dot_dimension_numbers<[2], [1], [1], [2], [0, 0, 0, 1, 1, 2], [0], [0]>} : vector<2x8x8xf32>, vector<2x8x8xf32>, vector<2x8x8xf32> -> vector<2x8x8xf32>
    "tpu.trace_stop"() : () -> ()
    %124 = vector.shape_cast %123 : vector<2x8x8xf32> to vector<16x8xf32>
    %125 = vector.extract_strided_slice %50 {offsets = [24, 0], sizes = [8, 32], strides = [1, 1]} : vector<32x32xf32> to vector<8x32xf32>
    %cst_47 = arith.constant dense<0.000000e+00> : vector<16x32xf32>
    %126 = tpu.matmul %124, %125, %cst_47 {dimension_numbers = #tpu.dot_dimension_numbers<[1], [0], [0], [1], [0, 0, 1, 1], [], []>} : vector<16x8xf32>, vector<8x32xf32>, vector<16x32xf32> -> vector<16x32xf32>
    %127 = arith.addf %108, %126 : vector<16x32xf32>
    %128 = arith.addf %9, %127 : vector<16x32xf32>
    %c0_48 = arith.constant 0 : index
    %c0_49 = arith.constant 0 : index
    %c0_50 = arith.constant 0 : index
    %129 = vector.load %arg8[%c0_48, %c0_49, %c0_50] : memref<2x1x32xf32, #tpu.memory_space<vmem>>, vector<1x1x32xf32>
    %130 = vector.shape_cast %129 : vector<1x1x32xf32> to vector<1x32xf32>
    %131 = vector.broadcast %130 : vector<1x32xf32> to vector<16x32xf32>
    %132 = arith.addf %128, %131 : vector<16x32xf32>
    %c0_51 = arith.constant 0 : index
    %c0_52 = arith.constant 0 : index
    %c0_53 = arith.constant 0 : index
    %133 = vector.load %arg9[%c0_51, %c0_52, %c0_53] : memref<2x1x32xf32, #tpu.memory_space<vmem>>, vector<1x1x32xf32>
    %134 = vector.shape_cast %133 : vector<1x1x32xf32> to vector<1x32xf32>
    %c0_54 = arith.constant 0 : index
    %c0_55 = arith.constant 0 : index
    %c0_56 = arith.constant 0 : index
    %135 = vector.load %arg10[%c0_54, %c0_55, %c0_56] : memref<2x1x32xf32, #tpu.memory_space<vmem>>, vector<1x1x32xf32>
    %136 = vector.shape_cast %135 : vector<1x1x32xf32> to vector<1x32xf32>
    %cst_57 = arith.constant dense<0.000000e+00> : vector<16xf32>
    %137 = vector.multi_reduction <add>, %132, %cst_57 [1] : vector<16x32xf32> to vector<16xf32>
    %138 = vector.shape_cast %137 : vector<16xf32> to vector<16x1xf32>
    %cst_58 = arith.constant 3.200000e+01 : f32
    %139 = vector.broadcast %cst_58 : f32 to vector<16x1xf32>
    %140 = arith.divf %138, %139 : vector<16x1xf32>
    %141 = vector.broadcast %140 : vector<16x1xf32> to vector<16x32xf32>
    %142 = arith.subf %132, %141 : vector<16x32xf32>
    %143 = arith.mulf %142, %142 : vector<16x32xf32>
    %cst_59 = arith.constant dense<0.000000e+00> : vector<16xf32>
    %144 = vector.multi_reduction <add>, %143, %cst_59 [1] : vector<16x32xf32> to vector<16xf32>
    %145 = vector.shape_cast %144 : vector<16xf32> to vector<16x1xf32>
    %cst_60 = arith.constant 3.200000e+01 : f32
    %146 = vector.broadcast %cst_60 : f32 to vector<16x1xf32>
    %147 = arith.divf %145, %146 : vector<16x1xf32>
    %148 = vector.broadcast %140 : vector<16x1xf32> to vector<16x32xf32>
    %149 = arith.subf %132, %148 : vector<16x32xf32>
    %cst_61 = arith.constant 9.99999997E-7 : f32
    %150 = vector.broadcast %cst_61 : f32 to vector<16x1xf32>
    %151 = arith.addf %147, %150 : vector<16x1xf32>
    %152 = math.rsqrt %151 : vector<16x1xf32>
    %153 = vector.broadcast %152 : vector<16x1xf32> to vector<16x32xf32>
    %154 = arith.mulf %149, %153 : vector<16x32xf32>
    %155 = vector.broadcast %134 : vector<1x32xf32> to vector<16x32xf32>
    %156 = arith.mulf %154, %155 : vector<16x32xf32>
    %157 = vector.broadcast %136 : vector<1x32xf32> to vector<16x32xf32>
    %158 = arith.addf %156, %157 : vector<16x32xf32>
    %c0_62 = arith.constant 0 : index
    %c0_63 = arith.constant 0 : index
    %c0_64 = arith.constant 0 : index
    %159 = vector.load %arg11[%c0_62, %c0_63, %c0_64] : memref<2x32x128xf32, #tpu.memory_space<vmem>>, vector<1x32x128xf32>
    %160 = vector.shape_cast %159 : vector<1x32x128xf32> to vector<32x128xf32>
    %cst_65 = arith.constant dense<0.000000e+00> : vector<16x128xf32>
    %161 = tpu.matmul %158, %160, %cst_65 {dimension_numbers = #tpu.dot_dimension_numbers<[1], [0], [0], [1], [0, 0, 1, 1], [], []>} : vector<16x32xf32>, vector<32x128xf32>, vector<16x128xf32> -> vector<16x128xf32>
    %c0_66 = arith.constant 0 : index
    %c0_67 = arith.constant 0 : index
    %c0_68 = arith.constant 0 : index
    %162 = vector.load %arg12[%c0_66, %c0_67, %c0_68] : memref<2x1x128xf32, #tpu.memory_space<vmem>>, vector<1x1x128xf32>
    %163 = vector.shape_cast %162 : vector<1x1x128xf32> to vector<1x128xf32>
    %164 = vector.broadcast %163 : vector<1x128xf32> to vector<16x128xf32>
    %165 = arith.addf %161, %164 : vector<16x128xf32>
    %cst_69 = arith.constant 5.000000e-01 : f32
    %166 = vector.broadcast %cst_69 : f32 to vector<16x128xf32>
    %167 = arith.mulf %166, %165 : vector<16x128xf32>
    %cst_70 = arith.constant 4.471500e-02 : f32
    %168 = vector.broadcast %cst_70 : f32 to vector<16x128xf32>
    %169 = arith.mulf %168, %165 : vector<16x128xf32>
    %170 = arith.mulf %169, %165 : vector<16x128xf32>
    %171 = arith.mulf %170, %165 : vector<16x128xf32>
    %172 = arith.addf %165, %171 : vector<16x128xf32>
    %cst_71 = arith.constant 0.797884583 : f32
    %173 = vector.broadcast %cst_71 : f32 to vector<16x128xf32>
    %174 = arith.mulf %173, %172 : vector<16x128xf32>
    %175 = math.tanh %174 : vector<16x128xf32>
    %cst_72 = arith.constant 1.000000e+00 : f32
    %176 = vector.broadcast %cst_72 : f32 to vector<16x128xf32>
    %177 = arith.addf %176, %175 : vector<16x128xf32>
    %178 = arith.mulf %167, %177 : vector<16x128xf32>
    %c0_73 = arith.constant 0 : index
    %c0_74 = arith.constant 0 : index
    %c0_75 = arith.constant 0 : index
    %179 = vector.load %arg13[%c0_73, %c0_74, %c0_75] : memref<2x128x32xf32, #tpu.memory_space<vmem>>, vector<1x128x32xf32>
    %180 = vector.shape_cast %179 : vector<1x128x32xf32> to vector<128x32xf32>
    %cst_76 = arith.constant dense<0.000000e+00> : vector<16x32xf32>
    %181 = tpu.matmul %178, %180, %cst_76 {dimension_numbers = #tpu.dot_dimension_numbers<[1], [0], [0], [1], [0, 0, 1, 1], [], []>} : vector<16x128xf32>, vector<128x32xf32>, vector<16x32xf32> -> vector<16x32xf32>
    %c0_77 = arith.constant 0 : index
    %c0_78 = arith.constant 0 : index
    %c0_79 = arith.constant 0 : index
    %182 = vector.load %arg14[%c0_77, %c0_78, %c0_79] : memref<2x1x32xf32, #tpu.memory_space<vmem>>, vector<1x1x32xf32>
    %183 = vector.shape_cast %182 : vector<1x1x32xf32> to vector<1x32xf32>
    %184 = vector.broadcast %183 : vector<1x32xf32> to vector<16x32xf32>
    %185 = arith.addf %181, %184 : vector<16x32xf32>
    %186 = arith.addf %132, %185 : vector<16x32xf32>
    %c1 = arith.constant 1 : index
    %c0_80 = arith.constant 0 : index
    %c0_81 = arith.constant 0 : index
    %187 = vector.load %arg3[%c1, %c0_80, %c0_81] : memref<2x1x32xf32, #tpu.memory_space<vmem>>, vector<1x1x32xf32>
    %188 = vector.shape_cast %187 : vector<1x1x32xf32> to vector<1x32xf32>
    %c1_82 = arith.constant 1 : index
    %c0_83 = arith.constant 0 : index
    %c0_84 = arith.constant 0 : index
    %189 = vector.load %arg4[%c1_82, %c0_83, %c0_84] : memref<2x1x32xf32, #tpu.memory_space<vmem>>, vector<1x1x32xf32>
    %190 = vector.shape_cast %189 : vector<1x1x32xf32> to vector<1x32xf32>
    %cst_85 = arith.constant dense<0.000000e+00> : vector<16xf32>
    %191 = vector.multi_reduction <add>, %186, %cst_85 [1] : vector<16x32xf32> to vector<16xf32>
    %192 = vector.shape_cast %191 : vector<16xf32> to vector<16x1xf32>
    %cst_86 = arith.constant 3.200000e+01 : f32
    %193 = vector.broadcast %cst_86 : f32 to vector<16x1xf32>
    %194 = arith.divf %192, %193 : vector<16x1xf32>
    %195 = vector.broadcast %194 : vector<16x1xf32> to vector<16x32xf32>
    %196 = arith.subf %186, %195 : vector<16x32xf32>
    %197 = arith.mulf %196, %196 : vector<16x32xf32>
    %cst_87 = arith.constant dense<0.000000e+00> : vector<16xf32>
    %198 = vector.multi_reduction <add>, %197, %cst_87 [1] : vector<16x32xf32> to vector<16xf32>
    %199 = vector.shape_cast %198 : vector<16xf32> to vector<16x1xf32>
    %cst_88 = arith.constant 3.200000e+01 : f32
    %200 = vector.broadcast %cst_88 : f32 to vector<16x1xf32>
    %201 = arith.divf %199, %200 : vector<16x1xf32>
    %202 = vector.broadcast %194 : vector<16x1xf32> to vector<16x32xf32>
    %203 = arith.subf %186, %202 : vector<16x32xf32>
    %cst_89 = arith.constant 9.99999997E-7 : f32
    %204 = vector.broadcast %cst_89 : f32 to vector<16x1xf32>
    %205 = arith.addf %201, %204 : vector<16x1xf32>
    %206 = math.rsqrt %205 : vector<16x1xf32>
    %207 = vector.broadcast %206 : vector<16x1xf32> to vector<16x32xf32>
    %208 = arith.mulf %203, %207 : vector<16x32xf32>
    %209 = vector.broadcast %188 : vector<1x32xf32> to vector<16x32xf32>
    %210 = arith.mulf %208, %209 : vector<16x32xf32>
    %211 = vector.broadcast %190 : vector<1x32xf32> to vector<16x32xf32>
    %212 = arith.addf %210, %211 : vector<16x32xf32>
    %c1_90 = arith.constant 1 : index
    %c0_91 = arith.constant 0 : index
    %c0_92 = arith.constant 0 : index
    %213 = vector.load %arg5[%c1_90, %c0_91, %c0_92] : memref<2x32x96xf32, #tpu.memory_space<vmem>>, vector<1x32x96xf32>
    %214 = vector.shape_cast %213 : vector<1x32x96xf32> to vector<32x96xf32>
    %cst_93 = arith.constant dense<0.000000e+00> : vector<16x96xf32>
    %215 = tpu.matmul %212, %214, %cst_93 {dimension_numbers = #tpu.dot_dimension_numbers<[1], [0], [0], [1], [0, 0, 1, 1], [], []>} : vector<16x32xf32>, vector<32x96xf32>, vector<16x96xf32> -> vector<16x96xf32>
    %c1_94 = arith.constant 1 : index
    %c0_95 = arith.constant 0 : index
    %c0_96 = arith.constant 0 : index
    %216 = vector.load %arg6[%c1_94, %c0_95, %c0_96] : memref<2x1x96xf32, #tpu.memory_space<vmem>>, vector<1x1x96xf32>
    %217 = vector.shape_cast %216 : vector<1x1x96xf32> to vector<1x96xf32>
    %218 = vector.broadcast %217 : vector<1x96xf32> to vector<16x96xf32>
    %219 = arith.addf %215, %218 : vector<16x96xf32>
    %220 = vector.extract_strided_slice %219 {offsets = [0, 0], sizes = [16, 32], strides = [1, 1]} : vector<16x96xf32> to vector<16x32xf32>
    %221 = vector.shape_cast %220 : vector<16x32xf32> to vector<2x8x32xf32>
    %222 = vector.extract_strided_slice %219 {offsets = [0, 32], sizes = [16, 32], strides = [1, 1]} : vector<16x96xf32> to vector<16x32xf32>
    %223 = vector.shape_cast %222 : vector<16x32xf32> to vector<2x8x32xf32>
    %224 = vector.extract_strided_slice %219 {offsets = [0, 64], sizes = [16, 32], strides = [1, 1]} : vector<16x96xf32> to vector<16x32xf32>
    %225 = vector.shape_cast %224 : vector<16x32xf32> to vector<2x8x32xf32>
    %c1_97 = arith.constant 1 : index
    %c0_98 = arith.constant 0 : index
    %c0_99 = arith.constant 0 : index
    %226 = vector.load %arg7[%c1_97, %c0_98, %c0_99] : memref<2x32x32xf32, #tpu.memory_space<vmem>>, vector<1x32x32xf32>
    %227 = vector.shape_cast %226 : vector<1x32x32xf32> to vector<32x32xf32>
    %cst_100 = arith.constant 0.000000e+00 : f32
    %228 = vector.broadcast %cst_100 : f32 to vector<16x32xf32>
    %229 = vector.extract_strided_slice %221 {offsets = [0, 0, 0], sizes = [2, 8, 8], strides = [1, 1, 1]} : vector<2x8x32xf32> to vector<2x8x8xf32>
    %230 = vector.extract_strided_slice %223 {offsets = [0, 0, 0], sizes = [2, 8, 8], strides = [1, 1, 1]} : vector<2x8x32xf32> to vector<2x8x8xf32>
    %231 = vector.extract_strided_slice %225 {offsets = [0, 0, 0], sizes = [2, 8, 8], strides = [1, 1, 1]} : vector<2x8x32xf32> to vector<2x8x8xf32>
    "tpu.trace_start"() <{level = 10 : i32, message = "bqd,bkd->bqk"}> : () -> ()
    %cst_101 = arith.constant dense<0.000000e+00> : vector<2x8x8xf32>
    %232 = tpu.matmul %229, %230, %cst_101 {dimension_numbers = #tpu.dot_dimension_numbers<[2], [2], [1], [1], [0, 0, 0, 1, 1, 1], [0], [0]>} : vector<2x8x8xf32>, vector<2x8x8xf32>, vector<2x8x8xf32> -> vector<2x8x8xf32>
    "tpu.trace_stop"() : () -> ()
    %cst_102 = arith.constant dense<0xFF800000> : vector<2x8xf32>
    %233 = vector.multi_reduction <maximumf>, %232, %cst_102 [2] : vector<2x8x8xf32> to vector<2x8xf32>
    %234 = vector.shape_cast %233 : vector<2x8xf32> to vector<2x8x1xf32>
    %235 = vector.broadcast %234 : vector<2x8x1xf32> to vector<2x8x8xf32>
    %236 = arith.subf %232, %235 : vector<2x8x8xf32>
    %237 = math.exp %236 : vector<2x8x8xf32>
    %cst_103 = arith.constant dense<0.000000e+00> : vector<2x8xf32>
    %238 = vector.multi_reduction <add>, %237, %cst_103 [2] : vector<2x8x8xf32> to vector<2x8xf32>
    %239 = vector.shape_cast %238 : vector<2x8xf32> to vector<2x8x1xf32>
    %240 = tpu.reciprocal %239 {approx = true} : vector<2x8x1xf32> -> vector<2x8x1xf32>
    %241 = vector.broadcast %240 : vector<2x8x1xf32> to vector<2x8x8xf32>
    %242 = arith.mulf %237, %241 : vector<2x8x8xf32>
    "tpu.trace_start"() <{level = 10 : i32, message = "bqk,bkd->bqd"}> : () -> ()
    %cst_104 = arith.constant dense<0.000000e+00> : vector<2x8x8xf32>
    %243 = tpu.matmul %242, %231, %cst_104 {dimension_numbers = #tpu.dot_dimension_numbers<[2], [1], [1], [2], [0, 0, 0, 1, 1, 2], [0], [0]>} : vector<2x8x8xf32>, vector<2x8x8xf32>, vector<2x8x8xf32> -> vector<2x8x8xf32>
    "tpu.trace_stop"() : () -> ()
    %244 = vector.shape_cast %243 : vector<2x8x8xf32> to vector<16x8xf32>
    %245 = vector.extract_strided_slice %227 {offsets = [0, 0], sizes = [8, 32], strides = [1, 1]} : vector<32x32xf32> to vector<8x32xf32>
    %cst_105 = arith.constant dense<0.000000e+00> : vector<16x32xf32>
    %246 = tpu.matmul %244, %245, %cst_105 {dimension_numbers = #tpu.dot_dimension_numbers<[1], [0], [0], [1], [0, 0, 1, 1], [], []>} : vector<16x8xf32>, vector<8x32xf32>, vector<16x32xf32> -> vector<16x32xf32>
    %247 = arith.addf %228, %246 : vector<16x32xf32>
    %248 = vector.extract_strided_slice %221 {offsets = [0, 0, 8], sizes = [2, 8, 8], strides = [1, 1, 1]} : vector<2x8x32xf32> to vector<2x8x8xf32>
    %249 = vector.extract_strided_slice %223 {offsets = [0, 0, 8], sizes = [2, 8, 8], strides = [1, 1, 1]} : vector<2x8x32xf32> to vector<2x8x8xf32>
    %250 = vector.extract_strided_slice %225 {offsets = [0, 0, 8], sizes = [2, 8, 8], strides = [1, 1, 1]} : vector<2x8x32xf32> to vector<2x8x8xf32>
    "tpu.trace_start"() <{level = 10 : i32, message = "bqd,bkd->bqk"}> : () -> ()
    %cst_106 = arith.constant dense<0.000000e+00> : vector<2x8x8xf32>
    %251 = tpu.matmul %248, %249, %cst_106 {dimension_numbers = #tpu.dot_dimension_numbers<[2], [2], [1], [1], [0, 0, 0, 1, 1, 1], [0], [0]>} : vector<2x8x8xf32>, vector<2x8x8xf32>, vector<2x8x8xf32> -> vector<2x8x8xf32>
    "tpu.trace_stop"() : () -> ()
    %cst_107 = arith.constant dense<0xFF800000> : vector<2x8xf32>
    %252 = vector.multi_reduction <maximumf>, %251, %cst_107 [2] : vector<2x8x8xf32> to vector<2x8xf32>
    %253 = vector.shape_cast %252 : vector<2x8xf32> to vector<2x8x1xf32>
    %254 = vector.broadcast %253 : vector<2x8x1xf32> to vector<2x8x8xf32>
    %255 = arith.subf %251, %254 : vector<2x8x8xf32>
    %256 = math.exp %255 : vector<2x8x8xf32>
    %cst_108 = arith.constant dense<0.000000e+00> : vector<2x8xf32>
    %257 = vector.multi_reduction <add>, %256, %cst_108 [2] : vector<2x8x8xf32> to vector<2x8xf32>
    %258 = vector.shape_cast %257 : vector<2x8xf32> to vector<2x8x1xf32>
    %259 = tpu.reciprocal %258 {approx = true} : vector<2x8x1xf32> -> vector<2x8x1xf32>
    %260 = vector.broadcast %259 : vector<2x8x1xf32> to vector<2x8x8xf32>
    %261 = arith.mulf %256, %260 : vector<2x8x8xf32>
    "tpu.trace_start"() <{level = 10 : i32, message = "bqk,bkd->bqd"}> : () -> ()
    %cst_109 = arith.constant dense<0.000000e+00> : vector<2x8x8xf32>
    %262 = tpu.matmul %261, %250, %cst_109 {dimension_numbers = #tpu.dot_dimension_numbers<[2], [1], [1], [2], [0, 0, 0, 1, 1, 2], [0], [0]>} : vector<2x8x8xf32>, vector<2x8x8xf32>, vector<2x8x8xf32> -> vector<2x8x8xf32>
    "tpu.trace_stop"() : () -> ()
    %263 = vector.shape_cast %262 : vector<2x8x8xf32> to vector<16x8xf32>
    %264 = vector.extract_strided_slice %227 {offsets = [8, 0], sizes = [8, 32], strides = [1, 1]} : vector<32x32xf32> to vector<8x32xf32>
    %cst_110 = arith.constant dense<0.000000e+00> : vector<16x32xf32>
    %265 = tpu.matmul %263, %264, %cst_110 {dimension_numbers = #tpu.dot_dimension_numbers<[1], [0], [0], [1], [0, 0, 1, 1], [], []>} : vector<16x8xf32>, vector<8x32xf32>, vector<16x32xf32> -> vector<16x32xf32>
    %266 = arith.addf %247, %265 : vector<16x32xf32>
    %267 = vector.extract_strided_slice %221 {offsets = [0, 0, 16], sizes = [2, 8, 8], strides = [1, 1, 1]} : vector<2x8x32xf32> to vector<2x8x8xf32>
    %268 = vector.extract_strided_slice %223 {offsets = [0, 0, 16], sizes = [2, 8, 8], strides = [1, 1, 1]} : vector<2x8x32xf32> to vector<2x8x8xf32>
    %269 = vector.extract_strided_slice %225 {offsets = [0, 0, 16], sizes = [2, 8, 8], strides = [1, 1, 1]} : vector<2x8x32xf32> to vector<2x8x8xf32>
    "tpu.trace_start"() <{level = 10 : i32, message = "bqd,bkd->bqk"}> : () -> ()
    %cst_111 = arith.constant dense<0.000000e+00> : vector<2x8x8xf32>
    %270 = tpu.matmul %267, %268, %cst_111 {dimension_numbers = #tpu.dot_dimension_numbers<[2], [2], [1], [1], [0, 0, 0, 1, 1, 1], [0], [0]>} : vector<2x8x8xf32>, vector<2x8x8xf32>, vector<2x8x8xf32> -> vector<2x8x8xf32>
    "tpu.trace_stop"() : () -> ()
    %cst_112 = arith.constant dense<0xFF800000> : vector<2x8xf32>
    %271 = vector.multi_reduction <maximumf>, %270, %cst_112 [2] : vector<2x8x8xf32> to vector<2x8xf32>
    %272 = vector.shape_cast %271 : vector<2x8xf32> to vector<2x8x1xf32>
    %273 = vector.broadcast %272 : vector<2x8x1xf32> to vector<2x8x8xf32>
    %274 = arith.subf %270, %273 : vector<2x8x8xf32>
    %275 = math.exp %274 : vector<2x8x8xf32>
    %cst_113 = arith.constant dense<0.000000e+00> : vector<2x8xf32>
    %276 = vector.multi_reduction <add>, %275, %cst_113 [2] : vector<2x8x8xf32> to vector<2x8xf32>
    %277 = vector.shape_cast %276 : vector<2x8xf32> to vector<2x8x1xf32>
    %278 = tpu.reciprocal %277 {approx = true} : vector<2x8x1xf32> -> vector<2x8x1xf32>
    %279 = vector.broadcast %278 : vector<2x8x1xf32> to vector<2x8x8xf32>
    %280 = arith.mulf %275, %279 : vector<2x8x8xf32>
    "tpu.trace_start"() <{level = 10 : i32, message = "bqk,bkd->bqd"}> : () -> ()
    %cst_114 = arith.constant dense<0.000000e+00> : vector<2x8x8xf32>
    %281 = tpu.matmul %280, %269, %cst_114 {dimension_numbers = #tpu.dot_dimension_numbers<[2], [1], [1], [2], [0, 0, 0, 1, 1, 2], [0], [0]>} : vector<2x8x8xf32>, vector<2x8x8xf32>, vector<2x8x8xf32> -> vector<2x8x8xf32>
    "tpu.trace_stop"() : () -> ()
    %282 = vector.shape_cast %281 : vector<2x8x8xf32> to vector<16x8xf32>
    %283 = vector.extract_strided_slice %227 {offsets = [16, 0], sizes = [8, 32], strides = [1, 1]} : vector<32x32xf32> to vector<8x32xf32>
    %cst_115 = arith.constant dense<0.000000e+00> : vector<16x32xf32>
    %284 = tpu.matmul %282, %283, %cst_115 {dimension_numbers = #tpu.dot_dimension_numbers<[1], [0], [0], [1], [0, 0, 1, 1], [], []>} : vector<16x8xf32>, vector<8x32xf32>, vector<16x32xf32> -> vector<16x32xf32>
    %285 = arith.addf %266, %284 : vector<16x32xf32>
    %286 = vector.extract_strided_slice %221 {offsets = [0, 0, 24], sizes = [2, 8, 8], strides = [1, 1, 1]} : vector<2x8x32xf32> to vector<2x8x8xf32>
    %287 = vector.extract_strided_slice %223 {offsets = [0, 0, 24], sizes = [2, 8, 8], strides = [1, 1, 1]} : vector<2x8x32xf32> to vector<2x8x8xf32>
    %288 = vector.extract_strided_slice %225 {offsets = [0, 0, 24], sizes = [2, 8, 8], strides = [1, 1, 1]} : vector<2x8x32xf32> to vector<2x8x8xf32>
    "tpu.trace_start"() <{level = 10 : i32, message = "bqd,bkd->bqk"}> : () -> ()
    %cst_116 = arith.constant dense<0.000000e+00> : vector<2x8x8xf32>
    %289 = tpu.matmul %286, %287, %cst_116 {dimension_numbers = #tpu.dot_dimension_numbers<[2], [2], [1], [1], [0, 0, 0, 1, 1, 1], [0], [0]>} : vector<2x8x8xf32>, vector<2x8x8xf32>, vector<2x8x8xf32> -> vector<2x8x8xf32>
    "tpu.trace_stop"() : () -> ()
    %cst_117 = arith.constant dense<0xFF800000> : vector<2x8xf32>
    %290 = vector.multi_reduction <maximumf>, %289, %cst_117 [2] : vector<2x8x8xf32> to vector<2x8xf32>
    %291 = vector.shape_cast %290 : vector<2x8xf32> to vector<2x8x1xf32>
    %292 = vector.broadcast %291 : vector<2x8x1xf32> to vector<2x8x8xf32>
    %293 = arith.subf %289, %292 : vector<2x8x8xf32>
    %294 = math.exp %293 : vector<2x8x8xf32>
    %cst_118 = arith.constant dense<0.000000e+00> : vector<2x8xf32>
    %295 = vector.multi_reduction <add>, %294, %cst_118 [2] : vector<2x8x8xf32> to vector<2x8xf32>
    %296 = vector.shape_cast %295 : vector<2x8xf32> to vector<2x8x1xf32>
    %297 = tpu.reciprocal %296 {approx = true} : vector<2x8x1xf32> -> vector<2x8x1xf32>
    %298 = vector.broadcast %297 : vector<2x8x1xf32> to vector<2x8x8xf32>
    %299 = arith.mulf %294, %298 : vector<2x8x8xf32>
    "tpu.trace_start"() <{level = 10 : i32, message = "bqk,bkd->bqd"}> : () -> ()
    %cst_119 = arith.constant dense<0.000000e+00> : vector<2x8x8xf32>
    %300 = tpu.matmul %299, %288, %cst_119 {dimension_numbers = #tpu.dot_dimension_numbers<[2], [1], [1], [2], [0, 0, 0, 1, 1, 2], [0], [0]>} : vector<2x8x8xf32>, vector<2x8x8xf32>, vector<2x8x8xf32> -> vector<2x8x8xf32>
    "tpu.trace_stop"() : () -> ()
    %301 = vector.shape_cast %300 : vector<2x8x8xf32> to vector<16x8xf32>
    %302 = vector.extract_strided_slice %227 {offsets = [24, 0], sizes = [8, 32], strides = [1, 1]} : vector<32x32xf32> to vector<8x32xf32>
    %cst_120 = arith.constant dense<0.000000e+00> : vector<16x32xf32>
    %303 = tpu.matmul %301, %302, %cst_120 {dimension_numbers = #tpu.dot_dimension_numbers<[1], [0], [0], [1], [0, 0, 1, 1], [], []>} : vector<16x8xf32>, vector<8x32xf32>, vector<16x32xf32> -> vector<16x32xf32>
    %304 = arith.addf %285, %303 : vector<16x32xf32>
    %305 = arith.addf %186, %304 : vector<16x32xf32>
    %c1_121 = arith.constant 1 : index
    %c0_122 = arith.constant 0 : index
    %c0_123 = arith.constant 0 : index
    %306 = vector.load %arg8[%c1_121, %c0_122, %c0_123] : memref<2x1x32xf32, #tpu.memory_space<vmem>>, vector<1x1x32xf32>
    %307 = vector.shape_cast %306 : vector<1x1x32xf32> to vector<1x32xf32>
    %308 = vector.broadcast %307 : vector<1x32xf32> to vector<16x32xf32>
    %309 = arith.addf %305, %308 : vector<16x32xf32>
    %c1_124 = arith.constant 1 : index
    %c0_125 = arith.constant 0 : index
    %c0_126 = arith.constant 0 : index
    %310 = vector.load %arg9[%c1_124, %c0_125, %c0_126] : memref<2x1x32xf32, #tpu.memory_space<vmem>>, vector<1x1x32xf32>
    %311 = vector.shape_cast %310 : vector<1x1x32xf32> to vector<1x32xf32>
    %c1_127 = arith.constant 1 : index
    %c0_128 = arith.constant 0 : index
    %c0_129 = arith.constant 0 : index
    %312 = vector.load %arg10[%c1_127, %c0_128, %c0_129] : memref<2x1x32xf32, #tpu.memory_space<vmem>>, vector<1x1x32xf32>
    %313 = vector.shape_cast %312 : vector<1x1x32xf32> to vector<1x32xf32>
    %cst_130 = arith.constant dense<0.000000e+00> : vector<16xf32>
    %314 = vector.multi_reduction <add>, %309, %cst_130 [1] : vector<16x32xf32> to vector<16xf32>
    %315 = vector.shape_cast %314 : vector<16xf32> to vector<16x1xf32>
    %cst_131 = arith.constant 3.200000e+01 : f32
    %316 = vector.broadcast %cst_131 : f32 to vector<16x1xf32>
    %317 = arith.divf %315, %316 : vector<16x1xf32>
    %318 = vector.broadcast %317 : vector<16x1xf32> to vector<16x32xf32>
    %319 = arith.subf %309, %318 : vector<16x32xf32>
    %320 = arith.mulf %319, %319 : vector<16x32xf32>
    %cst_132 = arith.constant dense<0.000000e+00> : vector<16xf32>
    %321 = vector.multi_reduction <add>, %320, %cst_132 [1] : vector<16x32xf32> to vector<16xf32>
    %322 = vector.shape_cast %321 : vector<16xf32> to vector<16x1xf32>
    %cst_133 = arith.constant 3.200000e+01 : f32
    %323 = vector.broadcast %cst_133 : f32 to vector<16x1xf32>
    %324 = arith.divf %322, %323 : vector<16x1xf32>
    %325 = vector.broadcast %317 : vector<16x1xf32> to vector<16x32xf32>
    %326 = arith.subf %309, %325 : vector<16x32xf32>
    %cst_134 = arith.constant 9.99999997E-7 : f32
    %327 = vector.broadcast %cst_134 : f32 to vector<16x1xf32>
    %328 = arith.addf %324, %327 : vector<16x1xf32>
    %329 = math.rsqrt %328 : vector<16x1xf32>
    %330 = vector.broadcast %329 : vector<16x1xf32> to vector<16x32xf32>
    %331 = arith.mulf %326, %330 : vector<16x32xf32>
    %332 = vector.broadcast %311 : vector<1x32xf32> to vector<16x32xf32>
    %333 = arith.mulf %331, %332 : vector<16x32xf32>
    %334 = vector.broadcast %313 : vector<1x32xf32> to vector<16x32xf32>
    %335 = arith.addf %333, %334 : vector<16x32xf32>
    %c1_135 = arith.constant 1 : index
    %c0_136 = arith.constant 0 : index
    %c0_137 = arith.constant 0 : index
    %336 = vector.load %arg11[%c1_135, %c0_136, %c0_137] : memref<2x32x128xf32, #tpu.memory_space<vmem>>, vector<1x32x128xf32>
    %337 = vector.shape_cast %336 : vector<1x32x128xf32> to vector<32x128xf32>
    %cst_138 = arith.constant dense<0.000000e+00> : vector<16x128xf32>
    %338 = tpu.matmul %335, %337, %cst_138 {dimension_numbers = #tpu.dot_dimension_numbers<[1], [0], [0], [1], [0, 0, 1, 1], [], []>} : vector<16x32xf32>, vector<32x128xf32>, vector<16x128xf32> -> vector<16x128xf32>
    %c1_139 = arith.constant 1 : index
    %c0_140 = arith.constant 0 : index
    %c0_141 = arith.constant 0 : index
    %339 = vector.load %arg12[%c1_139, %c0_140, %c0_141] : memref<2x1x128xf32, #tpu.memory_space<vmem>>, vector<1x1x128xf32>
    %340 = vector.shape_cast %339 : vector<1x1x128xf32> to vector<1x128xf32>
    %341 = vector.broadcast %340 : vector<1x128xf32> to vector<16x128xf32>
    %342 = arith.addf %338, %341 : vector<16x128xf32>
    %cst_142 = arith.constant 5.000000e-01 : f32
    %343 = vector.broadcast %cst_142 : f32 to vector<16x128xf32>
    %344 = arith.mulf %343, %342 : vector<16x128xf32>
    %cst_143 = arith.constant 4.471500e-02 : f32
    %345 = vector.broadcast %cst_143 : f32 to vector<16x128xf32>
    %346 = arith.mulf %345, %342 : vector<16x128xf32>
    %347 = arith.mulf %346, %342 : vector<16x128xf32>
    %348 = arith.mulf %347, %342 : vector<16x128xf32>
    %349 = arith.addf %342, %348 : vector<16x128xf32>
    %cst_144 = arith.constant 0.797884583 : f32
    %350 = vector.broadcast %cst_144 : f32 to vector<16x128xf32>
    %351 = arith.mulf %350, %349 : vector<16x128xf32>
    %352 = math.tanh %351 : vector<16x128xf32>
    %cst_145 = arith.constant 1.000000e+00 : f32
    %353 = vector.broadcast %cst_145 : f32 to vector<16x128xf32>
    %354 = arith.addf %353, %352 : vector<16x128xf32>
    %355 = arith.mulf %344, %354 : vector<16x128xf32>
    %c1_146 = arith.constant 1 : index
    %c0_147 = arith.constant 0 : index
    %c0_148 = arith.constant 0 : index
    %356 = vector.load %arg13[%c1_146, %c0_147, %c0_148] : memref<2x128x32xf32, #tpu.memory_space<vmem>>, vector<1x128x32xf32>
    %357 = vector.shape_cast %356 : vector<1x128x32xf32> to vector<128x32xf32>
    %cst_149 = arith.constant dense<0.000000e+00> : vector<16x32xf32>
    %358 = tpu.matmul %355, %357, %cst_149 {dimension_numbers = #tpu.dot_dimension_numbers<[1], [0], [0], [1], [0, 0, 1, 1], [], []>} : vector<16x128xf32>, vector<128x32xf32>, vector<16x32xf32> -> vector<16x32xf32>
    %c1_150 = arith.constant 1 : index
    %c0_151 = arith.constant 0 : index
    %c0_152 = arith.constant 0 : index
    %359 = vector.load %arg14[%c1_150, %c0_151, %c0_152] : memref<2x1x32xf32, #tpu.memory_space<vmem>>, vector<1x1x32xf32>
    %360 = vector.shape_cast %359 : vector<1x1x32xf32> to vector<1x32xf32>
    %361 = vector.broadcast %360 : vector<1x32xf32> to vector<16x32xf32>
    %362 = arith.addf %358, %361 : vector<16x32xf32>
    %363 = arith.addf %309, %362 : vector<16x32xf32>
    %364 = vector.shape_cast %363 : vector<16x32xf32> to vector<2x8x32xf32>
    %c0_153 = arith.constant 0 : index
    %c0_154 = arith.constant 0 : index
    %c0_155 = arith.constant 0 : index
    %365 = vector.load %arg17[%c0_153, %c0_154, %c0_155] : memref<2x8x32xf32, #tpu.memory_space<vmem>>, vector<2x8x32xf32>
    tpu.vector_store %arg17[%c0_153, %c0_154, %c0_155], %364 {strides = array<i32>} : memref<2x8x32xf32, #tpu.memory_space<vmem>>, vector<2x8x32xf32>,
    %cst_156 = arith.constant 0.000000e+00 : f32
    %366 = vector.broadcast %cst_156 : f32 to vector<2x128xf32>
    %367 = vector.extract_strided_slice %364 {offsets = [0, 0, 0], sizes = [2, 1, 32], strides = [1, 1, 1]} : vector<2x8x32xf32> to vector<2x1x32xf32>
    %368 = vector.shape_cast %367 : vector<2x1x32xf32> to vector<2x32xf32>
    %c0_157 = arith.constant 0 : index
    %c0_158 = arith.constant 0 : index
    %c0_159 = arith.constant 0 : index
    %369 = vector.load %arg15[%c0_157, %c0_158, %c0_159] : memref<8x32x128xf32, #tpu.memory_space<vmem>>, vector<1x32x128xf32>
    %370 = vector.shape_cast %369 : vector<1x32x128xf32> to vector<32x128xf32>
    %cst_160 = arith.constant dense<0.000000e+00> : vector<2x128xf32>
    %371 = tpu.matmul %368, %370, %cst_160 {dimension_numbers = #tpu.dot_dimension_numbers<[1], [0], [0], [1], [0, 0, 1, 1], [], []>} : vector<2x32xf32>, vector<32x128xf32>, vector<2x128xf32> -> vector<2x128xf32>
    %372 = arith.addf %366, %371 : vector<2x128xf32>
    %373 = vector.extract_strided_slice %364 {offsets = [0, 1, 0], sizes = [2, 1, 32], strides = [1, 1, 1]} : vector<2x8x32xf32> to vector<2x1x32xf32>
    %374 = vector.shape_cast %373 : vector<2x1x32xf32> to vector<2x32xf32>
    %c1_161 = arith.constant 1 : index
    %c0_162 = arith.constant 0 : index
    %c0_163 = arith.constant 0 : index
    %375 = vector.load %arg15[%c1_161, %c0_162, %c0_163] : memref<8x32x128xf32, #tpu.memory_space<vmem>>, vector<1x32x128xf32>
    %376 = vector.shape_cast %375 : vector<1x32x128xf32> to vector<32x128xf32>
    %cst_164 = arith.constant dense<0.000000e+00> : vector<2x128xf32>
    %377 = tpu.matmul %374, %376, %cst_164 {dimension_numbers = #tpu.dot_dimension_numbers<[1], [0], [0], [1], [0, 0, 1, 1], [], []>} : vector<2x32xf32>, vector<32x128xf32>, vector<2x128xf32> -> vector<2x128xf32>
    %378 = arith.addf %372, %377 : vector<2x128xf32>
    %379 = vector.extract_strided_slice %364 {offsets = [0, 2, 0], sizes = [2, 1, 32], strides = [1, 1, 1]} : vector<2x8x32xf32> to vector<2x1x32xf32>
    %380 = vector.shape_cast %379 : vector<2x1x32xf32> to vector<2x32xf32>
    %c2 = arith.constant 2 : index
    %c0_165 = arith.constant 0 : index
    %c0_166 = arith.constant 0 : index
    %381 = vector.load %arg15[%c2, %c0_165, %c0_166] : memref<8x32x128xf32, #tpu.memory_space<vmem>>, vector<1x32x128xf32>
    %382 = vector.shape_cast %381 : vector<1x32x128xf32> to vector<32x128xf32>
    %cst_167 = arith.constant dense<0.000000e+00> : vector<2x128xf32>
    %383 = tpu.matmul %380, %382, %cst_167 {dimension_numbers = #tpu.dot_dimension_numbers<[1], [0], [0], [1], [0, 0, 1, 1], [], []>} : vector<2x32xf32>, vector<32x128xf32>, vector<2x128xf32> -> vector<2x128xf32>
    %384 = arith.addf %378, %383 : vector<2x128xf32>
    %385 = vector.extract_strided_slice %364 {offsets = [0, 3, 0], sizes = [2, 1, 32], strides = [1, 1, 1]} : vector<2x8x32xf32> to vector<2x1x32xf32>
    %386 = vector.shape_cast %385 : vector<2x1x32xf32> to vector<2x32xf32>
    %c3 = arith.constant 3 : index
    %c0_168 = arith.constant 0 : index
    %c0_169 = arith.constant 0 : index
    %387 = vector.load %arg15[%c3, %c0_168, %c0_169] : memref<8x32x128xf32, #tpu.memory_space<vmem>>, vector<1x32x128xf32>
    %388 = vector.shape_cast %387 : vector<1x32x128xf32> to vector<32x128xf32>
    %cst_170 = arith.constant dense<0.000000e+00> : vector<2x128xf32>
    %389 = tpu.matmul %386, %388, %cst_170 {dimension_numbers = #tpu.dot_dimension_numbers<[1], [0], [0], [1], [0, 0, 1, 1], [], []>} : vector<2x32xf32>, vector<32x128xf32>, vector<2x128xf32> -> vector<2x128xf32>
    %390 = arith.addf %384, %389 : vector<2x128xf32>
    %391 = vector.extract_strided_slice %364 {offsets = [0, 4, 0], sizes = [2, 1, 32], strides = [1, 1, 1]} : vector<2x8x32xf32> to vector<2x1x32xf32>
    %392 = vector.shape_cast %391 : vector<2x1x32xf32> to vector<2x32xf32>
    %c4 = arith.constant 4 : index
    %c0_171 = arith.constant 0 : index
    %c0_172 = arith.constant 0 : index
    %393 = vector.load %arg15[%c4, %c0_171, %c0_172] : memref<8x32x128xf32, #tpu.memory_space<vmem>>, vector<1x32x128xf32>
    %394 = vector.shape_cast %393 : vector<1x32x128xf32> to vector<32x128xf32>
    %cst_173 = arith.constant dense<0.000000e+00> : vector<2x128xf32>
    %395 = tpu.matmul %392, %394, %cst_173 {dimension_numbers = #tpu.dot_dimension_numbers<[1], [0], [0], [1], [0, 0, 1, 1], [], []>} : vector<2x32xf32>, vector<32x128xf32>, vector<2x128xf32> -> vector<2x128xf32>
    %396 = arith.addf %390, %395 : vector<2x128xf32>
    %397 = vector.extract_strided_slice %364 {offsets = [0, 5, 0], sizes = [2, 1, 32], strides = [1, 1, 1]} : vector<2x8x32xf32> to vector<2x1x32xf32>
    %398 = vector.shape_cast %397 : vector<2x1x32xf32> to vector<2x32xf32>
    %c5 = arith.constant 5 : index
    %c0_174 = arith.constant 0 : index
    %c0_175 = arith.constant 0 : index
    %399 = vector.load %arg15[%c5, %c0_174, %c0_175] : memref<8x32x128xf32, #tpu.memory_space<vmem>>, vector<1x32x128xf32>
    %400 = vector.shape_cast %399 : vector<1x32x128xf32> to vector<32x128xf32>
    %cst_176 = arith.constant dense<0.000000e+00> : vector<2x128xf32>
    %401 = tpu.matmul %398, %400, %cst_176 {dimension_numbers = #tpu.dot_dimension_numbers<[1], [0], [0], [1], [0, 0, 1, 1], [], []>} : vector<2x32xf32>, vector<32x128xf32>, vector<2x128xf32> -> vector<2x128xf32>
    %402 = arith.addf %396, %401 : vector<2x128xf32>
    %403 = vector.extract_strided_slice %364 {offsets = [0, 6, 0], sizes = [2, 1, 32], strides = [1, 1, 1]} : vector<2x8x32xf32> to vector<2x1x32xf32>
    %404 = vector.shape_cast %403 : vector<2x1x32xf32> to vector<2x32xf32>
    %c6 = arith.constant 6 : index
    %c0_177 = arith.constant 0 : index
    %c0_178 = arith.constant 0 : index
    %405 = vector.load %arg15[%c6, %c0_177, %c0_178] : memref<8x32x128xf32, #tpu.memory_space<vmem>>, vector<1x32x128xf32>
    %406 = vector.shape_cast %405 : vector<1x32x128xf32> to vector<32x128xf32>
    %cst_179 = arith.constant dense<0.000000e+00> : vector<2x128xf32>
    %407 = tpu.matmul %404, %406, %cst_179 {dimension_numbers = #tpu.dot_dimension_numbers<[1], [0], [0], [1], [0, 0, 1, 1], [], []>} : vector<2x32xf32>, vector<32x128xf32>, vector<2x128xf32> -> vector<2x128xf32>
    %408 = arith.addf %402, %407 : vector<2x128xf32>
    %409 = vector.extract_strided_slice %364 {offsets = [0, 7, 0], sizes = [2, 1, 32], strides = [1, 1, 1]} : vector<2x8x32xf32> to vector<2x1x32xf32>
    %410 = vector.shape_cast %409 : vector<2x1x32xf32> to vector<2x32xf32>
    %c7 = arith.constant 7 : index
    %c0_180 = arith.constant 0 : index
    %c0_181 = arith.constant 0 : index
    %411 = vector.load %arg15[%c7, %c0_180, %c0_181] : memref<8x32x128xf32, #tpu.memory_space<vmem>>, vector<1x32x128xf32>
    %412 = vector.shape_cast %411 : vector<1x32x128xf32> to vector<32x128xf32>
    %cst_182 = arith.constant dense<0.000000e+00> : vector<2x128xf32>
    %413 = tpu.matmul %410, %412, %cst_182 {dimension_numbers = #tpu.dot_dimension_numbers<[1], [0], [0], [1], [0, 0, 1, 1], [], []>} : vector<2x32xf32>, vector<32x128xf32>, vector<2x128xf32> -> vector<2x128xf32>
    %414 = arith.addf %408, %413 : vector<2x128xf32>
    %c0_183 = arith.constant 0 : index
    %c0_184 = arith.constant 0 : index
    %415 = vector.load %arg16[%c0_183, %c0_184] : memref<1x128xf32, #tpu.memory_space<vmem>>, vector<1x128xf32>
    %416 = vector.broadcast %415 : vector<1x128xf32> to vector<2x128xf32>
    %417 = arith.addf %414, %416 : vector<2x128xf32>
    %c0_185 = arith.constant 0 : index
    %c0_186 = arith.constant 0 : index
    %418 = vector.load %arg18[%c0_185, %c0_186] : memref<2x128xf32, #tpu.memory_space<vmem>>, vector<2x128xf32>
    tpu.vector_store %arg18[%c0_185, %c0_186], %417 {strides = array<i32>} : memref<2x128xf32, #tpu.memory_space<vmem>>, vector<2x128xf32>,
    return
  }
}

</mosaic_0001>

<llo_original>
// kernel: tpu_custom_call.1
$region0: #{tpu_custom_call.1}
  #allocation0 [shape = 'u32[]', space=smem, size = 0x4, offset = 0x4, fixed_abs, tag = 'smem constant byte address 0x4 - core index']
  #allocation1 [shape = 'u32[144,128]{1,0:T(1,128)}', space=vmem, size = 0x12000, scoped, tag = 'internal scratch']
  %s0 = inlined_call_operand.vmem [shape: f32[2,8,6], index: 0, kind: input, shape index: {}]
  %s1 = inlined_call_operand.vmem [shape: f32[6,32], index: 1, kind: input, shape index: {}]
  %s2 = inlined_call_operand.vmem [shape: f32[8,32], index: 2, kind: input, shape index: {}]
  %s3 = inlined_call_operand.vmem [shape: f32[2,1,32], index: 3, kind: input, shape index: {}]
  %s4 = inlined_call_operand.vmem [shape: f32[2,1,32], index: 4, kind: input, shape index: {}]
  %s5 = inlined_call_operand.vmem [shape: f32[2,32,96], index: 5, kind: input, shape index: {}]
  %s6 = inlined_call_operand.vmem [shape: f32[2,1,96], index: 6, kind: input, shape index: {}]
  %s7 = inlined_call_operand.hbm [shape: f32[2,32,32], index: 7, kind: input, shape index: {}]
  %s8 = inlined_call_operand.vmem [shape: f32[2,1,32], index: 8, kind: input, shape index: {}]
  %s9 = inlined_call_operand.vmem [shape: f32[2,1,32], index: 9, kind: input, shape index: {}]
  %s10 = inlined_call_operand.vmem [shape: f32[2,1,32], index: 10, kind: input, shape index: {}]
  %s11 = inlined_call_operand.hbm [shape: f32[2,32,128], index: 11, kind: input, shape index: {}]
  %s12 = inlined_call_operand.vmem [shape: f32[2,1,128], index: 12, kind: input, shape index: {}]
  %s13 = inlined_call_operand.vmem [shape: f32[2,128,32], index: 13, kind: input, shape index: {}]
  %s14 = inlined_call_operand.vmem [shape: f32[2,1,32], index: 14, kind: input, shape index: {}]
  %s15 = inlined_call_operand.vmem [shape: f32[8,32,128], index: 15, kind: input, shape index: {}]
  %s16 = inlined_call_operand.vmem [shape: f32[1,128], index: 16, kind: input, shape index: {}]
  %s17 = inlined_call_operand.hbm [shape: f32[2,8,32], index: 17, kind: output, shape index: {0}]
  %s18 = inlined_call_operand.hbm [shape: f32[2,128], index: 18, kind: output, shape index: {1}]
  %19 = xla_tuple %s17, %s18
  %s20 = sld [smem:[#allocation0]]
  $region94: #{tpu_custom_call.1} parent=0
    _
  %s22 = ssub.s32 1, %s20
  %s23 = scalar_select 0, %s22, %s20
  $region1: #{tpu_custom_call.1} parent=0
    #allocation2 [shape = 'u8[32768]{0}', space=vmem, size = 0x8000, scoped, tag = 'input window, operand 7, single buffered']
    #allocation3 [shape = 's32[1]{0}', space=sflag, size = 0x4, scoped, tag = 'scoped memory for tpu_custom_call.1']
    #allocation4 [shape = 's32[1]{0}', space=sflag, size = 0x4, scoped, tag = 'scoped memory for tpu_custom_call.1']
    #allocation5 [shape = 'u8[32768]{0}', space=vmem, size = 0x8000, scoped, tag = 'input window, operand 11, single buffered']
    #allocation6 [shape = 's32[1]{0}', space=sflag, size = 0x4, scoped, tag = 'scoped memory for tpu_custom_call.1']
    #allocation7 [shape = 'u8[8192]{0}', space=vmem, size = 0x2000, scoped, tag = 'output window, operand 0, single buffered']
    #allocation8 [shape = 'u8[1024]{0}', space=vmem, size = 0x400, scoped, tag = 'output window, operand 1, single buffered']
    #allocation9 [shape = 's32[1]{0}', space=sflag, size = 0x4, scoped, tag = 'scoped memory for tpu_custom_call.1']
    %24 = vsyncpa [#allocation3], 0
    %25 = vsyncpa [#allocation6], 0
    %26 = vsyncpa [#allocation4], 0
    %27 = vsyncpa [#allocation9], 0
    // Predicated region
    $region2: #{tpu_custom_call.1} parent=1 // pred_check
      _
    $region3: #{tpu_custom_call.1} parent=1 // pred_check_branch
      %29 = sbr.rel (0) target = $region5
    $region4: #{tpu_custom_call.1} parent=1 // pred_region
      _
    $region5: #{tpu_custom_call.1} parent=1 // pred_fallthru
      _
    // Predicated region
    $region6: #{tpu_custom_call.1} parent=1 // pred_check
      _
    $region7: #{tpu_custom_call.1} parent=1 // pred_check_branch
      %31 = sbr.rel (0) target = $region9
    $region8: #{tpu_custom_call.1} parent=1 // pred_region
      _
    $region9: #{tpu_custom_call.1} parent=1 // pred_fallthru
      _
    // Predicated region
    $region10: #{tpu_custom_call.1} parent=1 // pred_check
      _
    $region11: #{tpu_custom_call.1} parent=1 // pred_check_branch
      %33 = sbr.rel (0) target = $region13
    $region12: #{tpu_custom_call.1} parent=1 // pred_region
      _
    $region13: #{tpu_custom_call.1} parent=1 // pred_fallthru
      _
    // Predicated region
    $region14: #{tpu_custom_call.1} parent=1 // pred_check
      _
    $region15: #{tpu_custom_call.1} parent=1 // pred_check_branch
      %35 = sbr.rel (0) target = $region17
    $region16: #{tpu_custom_call.1} parent=1 // pred_region
      _
    $region17: #{tpu_custom_call.1} parent=1 // pred_fallthru
      _
    // Predicated region
    $region18: #{tpu_custom_call.1} parent=1 // pred_check
      _
    $region19: #{tpu_custom_call.1} parent=1 // pred_check_branch
      %37 = sbr.rel (0) target = $region21
    $region20: #{tpu_custom_call.1} parent=1 // pred_region
      _
    $region21: #{tpu_custom_call.1} parent=1 // pred_fallthru
      _
    // Predicated region
    $region22: #{tpu_custom_call.1} parent=1 // pred_check
      _
    $region23: #{tpu_custom_call.1} parent=1 // pred_check_branch
      %39 = sbr.rel (0) target = $region25
    $region24: #{tpu_custom_call.1} parent=1 // pred_region
      _
    $region25: #{tpu_custom_call.1} parent=1 // pred_fallthru
      _
    // Predicated region
    $region26: #{tpu_custom_call.1} parent=1 // pred_check
      _
    $region27: #{tpu_custom_call.1} parent=1 // pred_check_branch
      %41 = sbr.rel (0) target = $region29
    $region28: #{tpu_custom_call.1} parent=1 // pred_region
      _
    $region29: #{tpu_custom_call.1} parent=1 // pred_fallthru
      _
    // Predicated region
    $region30: #{tpu_custom_call.1} parent=1 // pred_check
      _
    $region31: #{tpu_custom_call.1} parent=1 // pred_check_branch
      %43 = sbr.rel (0) target = $region33
    $region32: #{tpu_custom_call.1} parent=1 // pred_region
      %s45 = ssub.s32 1024, 1024
      %46 = vsyncadd [#allocation3], %s45
      %s47 = sshll.u32 [#allocation2], 4
      %s48 = int_to_ptr.vmem [resolvable:$true] %s47
      %53 = dma.hbm_to_vmem [thread:$0]  %s7, 1024, %s48, [#allocation3], 128, 128, 8
    $region33: #{tpu_custom_call.1} parent=1 // pred_fallthru
      _
    // Predicated region
    $region34: #{tpu_custom_call.1} parent=1 // pred_check
      _
    $region35: #{tpu_custom_call.1} parent=1 // pred_check_branch
      %55 = sbr.rel (0) target = $region37
    $region36: #{tpu_custom_call.1} parent=1 // pred_region
      _
    $region37: #{tpu_custom_call.1} parent=1 // pred_fallthru
      _
    // Predicated region
    $region38: #{tpu_custom_call.1} parent=1 // pred_check
      _
    $region39: #{tpu_custom_call.1} parent=1 // pred_check_branch
      %57 = sbr.rel (0) target = $region41
    $region40: #{tpu_custom_call.1} parent=1 // pred_region
      _
    $region41: #{tpu_custom_call.1} parent=1 // pred_fallthru
      _
    // Predicated region
    $region42: #{tpu_custom_call.1} parent=1 // pred_check
      _
    $region43: #{tpu_custom_call.1} parent=1 // pred_check_branch
      %59 = sbr.rel (0) target = $region45
    $region44: #{tpu_custom_call.1} parent=1 // pred_region
      _
    $region45: #{tpu_custom_call.1} parent=1 // pred_fallthru
      _
    // Predicated region
    $region46: #{tpu_custom_call.1} parent=1 // pred_check
      _
    $region47: #{tpu_custom_call.1} parent=1 // pred_check_branch
      %61 = sbr.rel (0) target = $region49
    $region48: #{tpu_custom_call.1} parent=1 // pred_region
      %s63 = ssub.s32 1024, 1024
      %64 = vsyncadd [#allocation6], %s63
      %s65 = sshll.u32 [#allocation5], 4
      %s66 = int_to_ptr.vmem [resolvable:$true] %s65
      %71 = dma.hbm_to_vmem [thread:$0]  %s11, 1024, %s66, [#allocation6], 128, 128, 8
    $region49: #{tpu_custom_call.1} parent=1 // pred_fallthru
      _
    // Predicated region
    $region50: #{tpu_custom_call.1} parent=1 // pred_check
      _
    $region51: #{tpu_custom_call.1} parent=1 // pred_check_branch
      %73 = sbr.rel (0) target = $region53
    $region52: #{tpu_custom_call.1} parent=1 // pred_region
      _
    $region53: #{tpu_custom_call.1} parent=1 // pred_fallthru
      _
    // Predicated region
    $region54: #{tpu_custom_call.1} parent=1 // pred_check
      _
    $region55: #{tpu_custom_call.1} parent=1 // pred_check_branch
      %75 = sbr.rel (0) target = $region57
    $region56: #{tpu_custom_call.1} parent=1 // pred_region
      _
    $region57: #{tpu_custom_call.1} parent=1 // pred_fallthru
      _
    // Predicated region
    $region58: #{tpu_custom_call.1} parent=1 // pred_check
      _
    $region59: #{tpu_custom_call.1} parent=1 // pred_check_branch
      %77 = sbr.rel (0) target = $region61
    $region60: #{tpu_custom_call.1} parent=1 // pred_region
      _
    $region61: #{tpu_custom_call.1} parent=1 // pred_fallthru
      _
    // Predicated region
    $region62: #{tpu_custom_call.1} parent=1 // pred_check
      _
    $region63: #{tpu_custom_call.1} parent=1 // pred_check_branch
      %79 = sbr.rel (0) target = $region65
    $region64: #{tpu_custom_call.1} parent=1 // pred_region
      _
    $region65: #{tpu_custom_call.1} parent=1 // pred_fallthru
      _
    // Predicated region
    $region66: #{tpu_custom_call.1} parent=1 // pred_check
      _
    $region67: #{tpu_custom_call.1} parent=1 // pred_check_branch
      %81 = sbr.rel (0) target = $region69
    $region68: #{tpu_custom_call.1} parent=1 // pred_region
      _
    $region69: #{tpu_custom_call.1} parent=1 // pred_fallthru
      _
    // Predicated region
    $region70: #{tpu_custom_call.1} parent=1 // pred_check
      _
    $region71: #{tpu_custom_call.1} parent=1 // pred_check_branch
      %83 = sbr.rel (0) target = $region73
    $region72: #{tpu_custom_call.1} parent=1 // pred_region
      %84 = dma.done [#allocation3], 1024
    $region73: #{tpu_custom_call.1} parent=1 // pred_fallthru
      _
    // Predicated region
    $region74: #{tpu_custom_call.1} parent=1 // pred_check
      _
    $region75: #{tpu_custom_call.1} parent=1 // pred_check_branch
      %86 = sbr.rel (0) target = $region77
    $region76: #{tpu_custom_call.1} parent=1 // pred_region
      %87 = dma.done [#allocation6], 1024
    $region77: #{tpu_custom_call.1} parent=1 // pred_fallthru
      _
    %v88 = vld [vmem:[%s0] sm:$0xff]
    %v89 = vld [vmem:[%s0 + $0x8] sm:$0xff]
    %v90 = vld [vmem:[%s1] sm:$0x3f]
    %vm91 = vcmask 48128
    %v93 = vsel %vm91, %v88, 0
    %v96 = vsel %vm91, %v89, 0
    %vm98 = vcmask 1045504
    %v100 = vsel %vm98, %v90, 0
    %102 = vmatprep.subr.mxu0 0.0
    %103 = vmatpush1.msra.mxu0 0.0
    %104 = vmatprep.subr.mxu0 0.0
    %105 = vmatpush1.msra.mxu0 0.0
    %106 = vmatprep.subr.mxu0 0.0
    %107 = vmatpush1.msra.mxu0 0.0
    %108 = vmatprep.subr.mxu0 0.0
    %109 = vmatpush1.msra.mxu0 0.0
    %110 = vmatprep.subr.mxu0 0.0
    %111 = vmatpush1.msra.mxu0 0.0
    %112 = vmatprep.subr.mxu0 0.0
    %113 = vmatpush1.msra.mxu0 0.0
    %114 = vmatprep.subr.mxu0 0.0
    %115 = vmatpush1.msra.mxu0 0.0
    %116 = vmatprep.subr.mxu0 0.0
    %117 = vmatpush1.msra.mxu0 0.0
    %118 = vmatprep.subr.mxu0 0.0
    %119 = vmatpush1.msra.mxu0 0.0
    %120 = vmatprep.subr.mxu0 0.0
    %121 = vmatpush1.msra.mxu0 0.0
    %122 = vmatprep.subr.mxu0 0.0
    %123 = vmatpush1.msra.mxu0 0.0
    %124 = vmatprep.subr.mxu0 0.0
    %125 = vmatpush1.msra.mxu0 0.0
    %126 = vmatprep.subr.mxu0 0.0
    %127 = vmatpush1.msra.mxu0 0.0
    %128 = vmatprep.subr.mxu0 0.0
    %129 = vmatpush1.msra.mxu0 0.0
    %130 = vmatprep.subr.mxu0 0.0
    %131 = vmatpush1.msra.mxu0 0.0
    %132 = vmatprep.subr.mxu0 0.0
    %133 = vmatpush1.msra.mxu0 %v100
    %134 = vmatprep.subr.mxu0 0.0
    %135 = vmatpush2.msra.mxu0 0.0
    %136 = vmatprep.subr.mxu0 0.0
    %137 = vmatpush2.msra.mxu0 0.0
    %138 = vmatprep.subr.mxu0 0.0
    %139 = vmatpush2.msra.mxu0 0.0
    %140 = vmatprep.subr.mxu0 0.0
    %141 = vmatpush2.msra.mxu0 0.0
    %142 = vmatprep.subr.mxu0 0.0
    %143 = vmatpush2.msra.mxu0 0.0
    %144 = vmatprep.subr.mxu0 0.0
    %145 = vmatpush2.msra.mxu0 0.0
    %146 = vmatprep.subr.mxu0 0.0
    %147 = vmatpush2.msra.mxu0 0.0
    %148 = vmatprep.subr.mxu0 0.0
    %149 = vmatpush2.msra.mxu0 0.0
    %150 = vmatprep.subr.mxu0 0.0
    %151 = vmatpush2.msra.mxu0 0.0
    %152 = vmatprep.subr.mxu0 0.0
    %153 = vmatpush2.msra.mxu0 0.0
    %154 = vmatprep.subr.mxu0 0.0
    %155 = vmatpush2.msra.mxu0 0.0
    %156 = vmatprep.subr.mxu0 0.0
    %157 = vmatpush2.msra.mxu0 0.0
    %158 = vmatprep.subr.mxu0 0.0
    %159 = vmatpush2.msra.mxu0 0.0
    %160 = vmatprep.subr.mxu0 0.0
    %161 = vmatpush2.msra.mxu0 0.0
    %162 = vmatprep.subr.mxu0 0.0
    %163 = vmatpush2.msra.mxu0 0.0
    %164 = vmatprep.subr.mxu0 0.0
    %165 = vmatpush2.msra.mxu0 0.0
    %166 = vmatprep.mubr.f32.mxu0 0.0
    %167 = vmatmul.mubr.f32.gmra.mxu0 %v93
    %v168 = vpop.f32.mrf.mxu0
    %v169 = vadd.f32 0.0, %v168
    %v170 = vpop.f32.mrf.mxu0
    %171 = vmatprep.mubr.f32.mxu0 0.0
    %172 = vmatmul.mubr.f32.gmra.mxu0 %v96
    %v173 = vpop.f32.mrf.mxu0
    %v174 = vadd.f32 0.0, %v173
    %v175 = vpop.f32.mrf.mxu0
    %176 = vdwg.mxu0
    %v177 = vld [vmem:[%s2] sm:$0xff]
    %v178 = vadd.f32 %v169, %v177
    %v179 = vadd.f32 %v174, %v177
    %v180 = vld [vmem:[%s3] sm:$0x1]
    %v181 = vld [vmem:[%s4] sm:$0x1]
    %vm182 = vcmask 261120
    %v183 = vsel %vm182, %v178, 0.0
    %184 = vadd.xlane.f32.xlu0 %v183
    %v185 = vpop.xlane.xlu0 %184
    %v186 = vsel %vm182, %v179, 0.0
    %187 = vadd.xlane.f32.xlu0 %v186
    %v188 = vpop.xlane.xlu0 %187
    %v189 = vrcp.pop 32.0
    %v190 = vmul.f32 %v185, %v189
    %v191 = vmul.f32 %v188, %v189
    %v192 = vsub.f32 %v178, %v190
    %v193 = vsub.f32 %v179, %v191
    %v194 = vmul.f32 %v192, %v192
    %v195 = vmul.f32 %v193, %v193
    %v196 = vsel %vm182, %v194, 0.0
    %197 = vadd.xlane.f32.xlu0 %v196
    %v198 = vpop.xlane.xlu0 %197
    %v199 = vsel %vm182, %v195, 0.0
    %200 = vadd.xlane.f32.xlu0 %v199
    %v201 = vpop.xlane.xlu0 %200
    %v202 = vmul.f32 %v198, %v189
    %v203 = vmul.f32 %v201, %v189
    %v204 = vadd.f32 %v202, 1e-06
    %v205 = vadd.f32 %v203, 1e-06
    %v206 = vrsqrt.pop %v204
    %v207 = vrsqrt.pop %v205
    %v208 = vmul.f32 %v192, %v206
    %v209 = vmul.f32 %v193, %v207
    %v211 = vlaneseq
    %v212 = vshrl.u32 %v211, 7
    %v213 = vsub.s32 0, %v212
    %v214 = vrot.slane %v180, %v213
    %v216 = vmul.f32 %v208, %v214
    %v217 = vmul.f32 %v209, %v214
    %v219 = vlaneseq
    %v220 = vshrl.u32 %v219, 7
    %v221 = vsub.s32 0, %v220
    %v222 = vrot.slane %v181, %v221
    %v224 = vadd.f32 %v216, %v222
    %v225 = vadd.f32 %v217, %v222
    %v226 = vld [vmem:[%s5] sm:$0xff]
    %v227 = vld [vmem:[%s5 + $0x8] sm:$0xff]
    %v228 = vld [vmem:[%s5 + $0x10] sm:$0xff]
    %v229 = vld [vmem:[%s5 + $0x18] sm:$0xff]
    %v230 = vld [vmem:[%s6] sm:$0x1]
    %v232 = vlaneseq
    %v233 = vshrl.u32 %v232, 7
    %v234 = vsub.s32 0, %v233
    %v235 = vrot.slane %v230, %v234
    %v238 = vsel %vm182, %v224, 0
    %v241 = vsel %vm182, %v225, 0
    %243 = vmatprep.subr.mxu0 0.0
    %244 = vmatpush1.msra.mxu0 0.0
    %245 = vmatprep.subr.mxu0 0.0
    %246 = vmatpush1.msra.mxu0 0.0
    %247 = vmatprep.subr.mxu0 0.0
    %248 = vmatpush1.msra.mxu0 0.0
    %249 = vmatprep.subr.mxu0 0.0
    %250 = vmatpush1.msra.mxu0 0.0
    %251 = vmatprep.subr.mxu0 0.0
    %252 = vmatpush1.msra.mxu0 0.0
    %253 = vmatprep.subr.mxu0 0.0
    %254 = vmatpush1.msra.mxu0 0.0
    %255 = vmatprep.subr.mxu0 0.0
    %256 = vmatpush1.msra.mxu0 0.0
    %257 = vmatprep.subr.mxu0 0.0
    %258 = vmatpush1.msra.mxu0 0.0
    %259 = vmatprep.subr.mxu0 0.0
    %260 = vmatpush1.msra.mxu0 0.0
    %261 = vmatprep.subr.mxu0 0.0
    %262 = vmatpush1.msra.mxu0 0.0
    %263 = vmatprep.subr.mxu0 0.0
    %264 = vmatpush1.msra.mxu0 0.0
    %265 = vmatprep.subr.mxu0 0.0
    %266 = vmatpush1.msra.mxu0 0.0
    %267 = vmatprep.subr.mxu0 0.0
    %268 = vmatpush1.msra.mxu0 %v229
    %269 = vmatprep.subr.mxu0 0.0
    %270 = vmatpush1.msra.mxu0 %v228
    %271 = vmatprep.subr.mxu0 0.0
    %272 = vmatpush1.msra.mxu0 %v227
    %273 = vmatprep.subr.mxu0 0.0
    %274 = vmatpush1.msra.mxu0 %v226
    %275 = vmatprep.subr.mxu0 0.0
    %276 = vmatpush2.msra.mxu0 0.0
    %277 = vmatprep.subr.mxu0 0.0
    %278 = vmatpush2.msra.mxu0 0.0
    %279 = vmatprep.subr.mxu0 0.0
    %280 = vmatpush2.msra.mxu0 0.0
    %281 = vmatprep.subr.mxu0 0.0
    %282 = vmatpush2.msra.mxu0 0.0
    %283 = vmatprep.subr.mxu0 0.0
    %284 = vmatpush2.msra.mxu0 0.0
    %285 = vmatprep.subr.mxu0 0.0
    %286 = vmatpush2.msra.mxu0 0.0
    %287 = vmatprep.subr.mxu0 0.0
    %288 = vmatpush2.msra.mxu0 0.0
    %289 = vmatprep.subr.mxu0 0.0
    %290 = vmatpush2.msra.mxu0 0.0
    %291 = vmatprep.subr.mxu0 0.0
    %292 = vmatpush2.msra.mxu0 0.0
    %293 = vmatprep.subr.mxu0 0.0
    %294 = vmatpush2.msra.mxu0 0.0
    %295 = vmatprep.subr.mxu0 0.0
    %296 = vmatpush2.msra.mxu0 0.0
    %297 = vmatprep.subr.mxu0 0.0
    %298 = vmatpush2.msra.mxu0 0.0
    %299 = vmatprep.subr.mxu0 0.0
    %300 = vmatpush2.msra.mxu0 0.0
    %301 = vmatprep.subr.mxu0 0.0
    %302 = vmatpush2.msra.mxu0 0.0
    %303 = vmatprep.subr.mxu0 0.0
    %304 = vmatpush2.msra.mxu0 0.0
    %305 = vmatprep.subr.mxu0 0.0
    %306 = vmatpush2.msra.mxu0 0.0
    %307 = vmatprep.mubr.f32.mxu0 0.0
    %308 = vmatmul.mubr.f32.gmra.mxu0 %v238
    %v309 = vpop.f32.mrf.mxu0
    %v310 = vadd.f32 %v235, %v309
    %v311 = vpop.f32.mrf.mxu0
    %312 = vmatprep.mubr.f32.mxu0 0.0
    %313 = vmatmul.mubr.f32.gmra.mxu0 %v241
    %v314 = vpop.f32.mrf.mxu0
    %v315 = vadd.f32 %v235, %v314
    %v316 = vpop.f32.mrf.mxu0
    %317 = vdwg.mxu0
    %v318 = vld [vmem:[#allocation2] sm:$0xff]
    %v319 = vld [vmem:[#allocation2 + $0x8] sm:$0xff]
    %v320 = vld [vmem:[#allocation2 + $0x10] sm:$0xff]
    %v321 = vld [vmem:[#allocation2 + $0x18] sm:$0xff]
    %323 = vrot.lane.b32.xlu0 %v310, 96
    %v324 = vpop.permute.xlu0 %323
    %vm325 = vcmask 64512
    %v326 = vsel %vm325, %v310, 0
    %v328 = vsel %vm325, %v324, 0
    %330 = vmatprep.subr.mxu0 0.0
    %331 = vmatpush1.xpose.msra.mxu0 0.0
    %332 = vmatprep.subr.mxu0 0.0
    %333 = vmatpush1.xpose.msra.mxu0 0.0
    %334 = vmatprep.subr.mxu0 0.0
    %335 = vmatpush1.xpose.msra.mxu0 0.0
    %336 = vmatprep.subr.mxu0 0.0
    %337 = vmatpush1.xpose.msra.mxu0 0.0
    %338 = vmatprep.subr.mxu0 0.0
    %339 = vmatpush1.xpose.msra.mxu0 0.0
    %340 = vmatprep.subr.mxu0 0.0
    %341 = vmatpush1.xpose.msra.mxu0 0.0
    %342 = vmatprep.subr.mxu0 0.0
    %343 = vmatpush1.xpose.msra.mxu0 0.0
    %344 = vmatprep.subr.mxu0 0.0
    %345 = vmatpush1.xpose.msra.mxu0 0.0
    %346 = vmatprep.subr.mxu0 0.0
    %347 = vmatpush1.xpose.msra.mxu0 0.0
    %348 = vmatprep.subr.mxu0 0.0
    %349 = vmatpush1.xpose.msra.mxu0 0.0
    %350 = vmatprep.subr.mxu0 0.0
    %351 = vmatpush1.xpose.msra.mxu0 0.0
    %352 = vmatprep.subr.mxu0 0.0
    %353 = vmatpush1.xpose.msra.mxu0 0.0
    %354 = vmatprep.subr.mxu0 0.0
    %355 = vmatpush1.xpose.msra.mxu0 0.0
    %356 = vmatprep.subr.mxu0 0.0
    %357 = vmatpush1.xpose.msra.mxu0 0.0
    %358 = vmatprep.subr.mxu0 0.0
    %359 = vmatpush1.xpose.msra.mxu0 0.0
    %360 = vmatprep.subr.mxu0 0.0
    %361 = vmatpush1.xpose.msra.mxu0 %v328
    %362 = vmatprep.subr.mxu0 0.0
    %363 = vmatpush2.xpose.msra.mxu0 0.0
    %364 = vmatprep.subr.mxu0 0.0
    %365 = vmatpush2.xpose.msra.mxu0 0.0
    %366 = vmatprep.subr.mxu0 0.0
    %367 = vmatpush2.xpose.msra.mxu0 0.0
    %368 = vmatprep.subr.mxu0 0.0
    %369 = vmatpush2.xpose.msra.mxu0 0.0
    %370 = vmatprep.subr.mxu0 0.0
    %371 = vmatpush2.xpose.msra.mxu0 0.0
    %372 = vmatprep.subr.mxu0 0.0
    %373 = vmatpush2.xpose.msra.mxu0 0.0
    %374 = vmatprep.subr.mxu0 0.0
    %375 = vmatpush2.xpose.msra.mxu0 0.0
    %376 = vmatprep.subr.mxu0 0.0
    %377 = vmatpush2.xpose.msra.mxu0 0.0
    %378 = vmatprep.subr.mxu0 0.0
    %379 = vmatpush2.xpose.msra.mxu0 0.0
    %380 = vmatprep.subr.mxu0 0.0
    %381 = vmatpush2.xpose.msra.mxu0 0.0
    %382 = vmatprep.subr.mxu0 0.0
    %383 = vmatpush2.xpose.msra.mxu0 0.0
    %384 = vmatprep.subr.mxu0 0.0
    %385 = vmatpush2.xpose.msra.mxu0 0.0
    %386 = vmatprep.subr.mxu0 0.0
    %387 = vmatpush2.xpose.msra.mxu0 0.0
    %388 = vmatprep.subr.mxu0 0.0
    %389 = vmatpush2.xpose.msra.mxu0 0.0
    %390 = vmatprep.subr.mxu0 0.0
    %391 = vmatpush2.xpose.msra.mxu0 0.0
    %392 = vmatprep.subr.mxu0 0.0
    %393 = vmatpush2.xpose.msra.mxu0 0.0
    %394 = vmatprep.mubr.f32.mxu0 0.0
    %395 = vmatmul.mubr.f32.gmra.mxu0 %v326
    %v396 = vpop.f32.mrf.mxu0
    %v397 = vadd.f32 0.0, %v396
    %v398 = vpop.f32.mrf.mxu0
    %399 = vdwg.mxu0
    %401 = vrot.lane.b32.xlu0 %v315, 96
    %v402 = vpop.permute.xlu0 %401
    %v403 = vsel %vm325, %v315, 0
    %v405 = vsel %vm325, %v402, 0
    %407 = vmatprep.subr.mxu0 0.0
    %408 = vmatpush1.xpose.msra.mxu0 0.0
    %409 = vmatprep.subr.mxu0 0.0
    %410 = vmatpush1.xpose.msra.mxu0 0.0
    %411 = vmatprep.subr.mxu0 0.0
    %412 = vmatpush1.xpose.msra.mxu0 0.0
    %413 = vmatprep.subr.mxu0 0.0
    %414 = vmatpush1.xpose.msra.mxu0 0.0
    %415 = vmatprep.subr.mxu0 0.0
    %416 = vmatpush1.xpose.msra.mxu0 0.0
    %417 = vmatprep.subr.mxu0 0.0
    %418 = vmatpush1.xpose.msra.mxu0 0.0
    %419 = vmatprep.subr.mxu0 0.0
    %420 = vmatpush1.xpose.msra.mxu0 0.0
    %421 = vmatprep.subr.mxu0 0.0
    %422 = vmatpush1.xpose.msra.mxu0 0.0
    %423 = vmatprep.subr.mxu0 0.0
    %424 = vmatpush1.xpose.msra.mxu0 0.0
    %425 = vmatprep.subr.mxu0 0.0
    %426 = vmatpush1.xpose.msra.mxu0 0.0
    %427 = vmatprep.subr.mxu0 0.0
    %428 = vmatpush1.xpose.msra.mxu0 0.0
    %429 = vmatprep.subr.mxu0 0.0
    %430 = vmatpush1.xpose.msra.mxu0 0.0
    %431 = vmatprep.subr.mxu0 0.0
    %432 = vmatpush1.xpose.msra.mxu0 0.0
    %433 = vmatprep.subr.mxu0 0.0
    %434 = vmatpush1.xpose.msra.mxu0 0.0
    %435 = vmatprep.subr.mxu0 0.0
    %436 = vmatpush1.xpose.msra.mxu0 0.0
    %437 = vmatprep.subr.mxu0 0.0
    %438 = vmatpush1.xpose.msra.mxu0 %v405
    %439 = vmatprep.subr.mxu0 0.0
    %440 = vmatpush2.xpose.msra.mxu0 0.0
    %441 = vmatprep.subr.mxu0 0.0
    %442 = vmatpush2.xpose.msra.mxu0 0.0
    %443 = vmatprep.subr.mxu0 0.0
    %444 = vmatpush2.xpose.msra.mxu0 0.0
    %445 = vmatprep.subr.mxu0 0.0
    %446 = vmatpush2.xpose.msra.mxu0 0.0
    %447 = vmatprep.subr.mxu0 0.0
    %448 = vmatpush2.xpose.msra.mxu0 0.0
    %449 = vmatprep.subr.mxu0 0.0
    %450 = vmatpush2.xpose.msra.mxu0 0.0
    %451 = vmatprep.subr.mxu0 0.0
    %452 = vmatpush2.xpose.msra.mxu0 0.0
    %453 = vmatprep.subr.mxu0 0.0
    %454 = vmatpush2.xpose.msra.mxu0 0.0
    %455 = vmatprep.subr.mxu0 0.0
    %456 = vmatpush2.xpose.msra.mxu0 0.0
    %457 = vmatprep.subr.mxu0 0.0
    %458 = vmatpush2.xpose.msra.mxu0 0.0
    %459 = vmatprep.subr.mxu0 0.0
    %460 = vmatpush2.xpose.msra.mxu0 0.0
    %461 = vmatprep.subr.mxu0 0.0
    %462 = vmatpush2.xpose.msra.mxu0 0.0
    %463 = vmatprep.subr.mxu0 0.0
    %464 = vmatpush2.xpose.msra.mxu0 0.0
    %465 = vmatprep.subr.mxu0 0.0
    %466 = vmatpush2.xpose.msra.mxu0 0.0
    %467 = vmatprep.subr.mxu0 0.0
    %468 = vmatpush2.xpose.msra.mxu0 0.0
    %469 = vmatprep.subr.mxu0 0.0
    %470 = vmatpush2.xpose.msra.mxu0 0.0
    %471 = vmatprep.mubr.f32.mxu0 0.0
    %472 = vmatmul.mubr.f32.gmra.mxu0 %v403
    %v473 = vpop.f32.mrf.mxu0
    %v474 = vadd.f32 0.0, %v473
    %v475 = vpop.f32.mrf.mxu0
    %476 = vdwg.mxu0
    %v477 = vsel %vm325, %v397, -inf
    %478 = vmax.xlane.f32.xlu0 %v477
    %v479 = vpop.xlane.xlu0 %478
    %v480 = vsel %vm325, %v474, -inf
    %481 = vmax.xlane.f32.xlu0 %v480
    %v482 = vpop.xlane.xlu0 %481
    %v483 = vsub.f32 %v397, %v479
    %v484 = vsub.f32 %v474, %v482
    %v485 = vmul.f32 %v483, 1.442695
    %v486 = vpow.pop %v485
    %v487 = vmul.f32 %v484, 1.442695
    %v488 = vpow.pop %v487
    %v489 = vsel %vm325, %v486, 0.0
    %490 = vadd.xlane.f32.xlu0 %v489
    %v491 = vpop.xlane.xlu0 %490
    %v492 = vsel %vm325, %v488, 0.0
    %493 = vadd.xlane.f32.xlu0 %v492
    %v494 = vpop.xlane.xlu0 %493
    %v495 = vrcp.pop %v491
    %v496 = vrcp.pop %v494
    %v497 = vmul.f32 %v486, %v495
    %v498 = vmul.f32 %v488, %v496
    %499 = vrot.lane.b32.xlu0 %v310, 64
    %v500 = vpop.permute.xlu0 %499
    %v503 = vsel %vm325, %v497, 0
    %505 = vmatprep.subr.mxu0 0.0
    %506 = vmatpush1.msra.mxu0 0.0
    %507 = vmatprep.subr.mxu0 0.0
    %508 = vmatpush1.msra.mxu0 0.0
    %509 = vmatprep.subr.mxu0 0.0
    %510 = vmatpush1.msra.mxu0 0.0
    %511 = vmatprep.subr.mxu0 0.0
    %512 = vmatpush1.msra.mxu0 0.0
    %513 = vmatprep.subr.mxu0 0.0
    %514 = vmatpush1.msra.mxu0 0.0
    %515 = vmatprep.subr.mxu0 0.0
    %516 = vmatpush1.msra.mxu0 0.0
    %517 = vmatprep.subr.mxu0 0.0
    %518 = vmatpush1.msra.mxu0 0.0
    %519 = vmatprep.subr.mxu0 0.0
    %520 = vmatpush1.msra.mxu0 0.0
    %521 = vmatprep.subr.mxu0 0.0
    %522 = vmatpush1.msra.mxu0 0.0
    %523 = vmatprep.subr.mxu0 0.0
    %524 = vmatpush1.msra.mxu0 0.0
    %525 = vmatprep.subr.mxu0 0.0
    %526 = vmatpush1.msra.mxu0 0.0
    %527 = vmatprep.subr.mxu0 0.0
    %528 = vmatpush1.msra.mxu0 0.0
    %529 = vmatprep.subr.mxu0 0.0
    %530 = vmatpush1.msra.mxu0 0.0
    %531 = vmatprep.subr.mxu0 0.0
    %532 = vmatpush1.msra.mxu0 0.0
    %533 = vmatprep.subr.mxu0 0.0
    %534 = vmatpush1.msra.mxu0 0.0
    %535 = vmatprep.subr.mxu0 0.0
    %536 = vmatpush1.msra.mxu0 %v500
    %537 = vmatprep.subr.mxu0 0.0
    %538 = vmatpush2.msra.mxu0 0.0
    %539 = vmatprep.subr.mxu0 0.0
    %540 = vmatpush2.msra.mxu0 0.0
    %541 = vmatprep.subr.mxu0 0.0
    %542 = vmatpush2.msra.mxu0 0.0
    %543 = vmatprep.subr.mxu0 0.0
    %544 = vmatpush2.msra.mxu0 0.0
    %545 = vmatprep.subr.mxu0 0.0
    %546 = vmatpush2.msra.mxu0 0.0
    %547 = vmatprep.subr.mxu0 0.0
    %548 = vmatpush2.msra.mxu0 0.0
    %549 = vmatprep.subr.mxu0 0.0
    %550 = vmatpush2.msra.mxu0 0.0
    %551 = vmatprep.subr.mxu0 0.0
    %552 = vmatpush2.msra.mxu0 0.0
    %553 = vmatprep.subr.mxu0 0.0
    %554 = vmatpush2.msra.mxu0 0.0
    %555 = vmatprep.subr.mxu0 0.0
    %556 = vmatpush2.msra.mxu0 0.0
    %557 = vmatprep.subr.mxu0 0.0
    %558 = vmatpush2.msra.mxu0 0.0
    %559 = vmatprep.subr.mxu0 0.0
    %560 = vmatpush2.msra.mxu0 0.0
    %561 = vmatprep.subr.mxu0 0.0
    %562 = vmatpush2.msra.mxu0 0.0
    %563 = vmatprep.subr.mxu0 0.0
    %564 = vmatpush2.msra.mxu0 0.0
    %565 = vmatprep.subr.mxu0 0.0
    %566 = vmatpush2.msra.mxu0 0.0
    %567 = vmatprep.subr.mxu0 0.0
    %568 = vmatpush2.msra.mxu0 0.0
    %569 = vmatprep.mubr.f32.mxu0 0.0
    %570 = vmatmul.mubr.f32.gmra.mxu0 %v503
    %v571 = vpop.f32.mrf.mxu0
    %v572 = vadd.f32 0.0, %v571
    %v573 = vpop.f32.mrf.mxu0
    %574 = vdwg.mxu0
    %575 = vrot.lane.b32.xlu0 %v315, 64
    %v576 = vpop.permute.xlu0 %575
    %v579 = vsel %vm325, %v498, 0
    %581 = vmatprep.subr.mxu0 0.0
    %582 = vmatpush1.msra.mxu0 0.0
    %583 = vmatprep.subr.mxu0 0.0
    %584 = vmatpush1.msra.mxu0 0.0
    %585 = vmatprep.subr.mxu0 0.0
    %586 = vmatpush1.msra.mxu0 0.0
    %587 = vmatprep.subr.mxu0 0.0
    %588 = vmatpush1.msra.mxu0 0.0
    %589 = vmatprep.subr.mxu0 0.0
    %590 = vmatpush1.msra.mxu0 0.0
    %591 = vmatprep.subr.mxu0 0.0
    %592 = vmatpush1.msra.mxu0 0.0
    %593 = vmatprep.subr.mxu0 0.0
    %594 = vmatpush1.msra.mxu0 0.0
    %595 = vmatprep.subr.mxu0 0.0
    %596 = vmatpush1.msra.mxu0 0.0
    %597 = vmatprep.subr.mxu0 0.0
    %598 = vmatpush1.msra.mxu0 0.0
    %599 = vmatprep.subr.mxu0 0.0
    %600 = vmatpush1.msra.mxu0 0.0
    %601 = vmatprep.subr.mxu0 0.0
    %602 = vmatpush1.msra.mxu0 0.0
    %603 = vmatprep.subr.mxu0 0.0
    %604 = vmatpush1.msra.mxu0 0.0
    %605 = vmatprep.subr.mxu0 0.0
    %606 = vmatpush1.msra.mxu0 0.0
    %607 = vmatprep.subr.mxu0 0.0
    %608 = vmatpush1.msra.mxu0 0.0
    %609 = vmatprep.subr.mxu0 0.0
    %610 = vmatpush1.msra.mxu0 0.0
    %611 = vmatprep.subr.mxu0 0.0
    %612 = vmatpush1.msra.mxu0 %v576
    %613 = vmatprep.subr.mxu0 0.0
    %614 = vmatpush2.msra.mxu0 0.0
    %615 = vmatprep.subr.mxu0 0.0
    %616 = vmatpush2.msra.mxu0 0.0
    %617 = vmatprep.subr.mxu0 0.0
    %618 = vmatpush2.msra.mxu0 0.0
    %619 = vmatprep.subr.mxu0 0.0
    %620 = vmatpush2.msra.mxu0 0.0
    %621 = vmatprep.subr.mxu0 0.0
    %622 = vmatpush2.msra.mxu0 0.0
    %623 = vmatprep.subr.mxu0 0.0
    %624 = vmatpush2.msra.mxu0 0.0
    %625 = vmatprep.subr.mxu0 0.0
    %626 = vmatpush2.msra.mxu0 0.0
    %627 = vmatprep.subr.mxu0 0.0
    %628 = vmatpush2.msra.mxu0 0.0
    %629 = vmatprep.subr.mxu0 0.0
    %630 = vmatpush2.msra.mxu0 0.0
    %631 = vmatprep.subr.mxu0 0.0
    %632 = vmatpush2.msra.mxu0 0.0
    %633 = vmatprep.subr.mxu0 0.0
    %634 = vmatpush2.msra.mxu0 0.0
    %635 = vmatprep.subr.mxu0 0.0
    %636 = vmatpush2.msra.mxu0 0.0
    %637 = vmatprep.subr.mxu0 0.0
    %638 = vmatpush2.msra.mxu0 0.0
    %639 = vmatprep.subr.mxu0 0.0
    %640 = vmatpush2.msra.mxu0 0.0
    %641 = vmatprep.subr.mxu0 0.0
    %642 = vmatpush2.msra.mxu0 0.0
    %643 = vmatprep.subr.mxu0 0.0
    %644 = vmatpush2.msra.mxu0 0.0
    %645 = vmatprep.mubr.f32.mxu0 0.0
    %646 = vmatmul.mubr.f32.gmra.mxu0 %v579
    %v647 = vpop.f32.mrf.mxu0
    %v648 = vadd.f32 0.0, %v647
    %v649 = vpop.f32.mrf.mxu0
    %650 = vdwg.mxu0
    %651 = vrot.lane.b32.xlu0 %v310, 120
    %v652 = vpop.permute.xlu0 %651
    %653 = vrot.lane.b32.xlu0 %v310, 88
    %v654 = vpop.permute.xlu0 %653
    %v655 = vsel %vm325, %v652, 0
    %v657 = vsel %vm325, %v654, 0
    %659 = vmatprep.subr.mxu0 0.0
    %660 = vmatpush1.xpose.msra.mxu0 0.0
    %661 = vmatprep.subr.mxu0 0.0
    %662 = vmatpush1.xpose.msra.mxu0 0.0
    %663 = vmatprep.subr.mxu0 0.0
    %664 = vmatpush1.xpose.msra.mxu0 0.0
    %665 = vmatprep.subr.mxu0 0.0
    %666 = vmatpush1.xpose.msra.mxu0 0.0
    %667 = vmatprep.subr.mxu0 0.0
    %668 = vmatpush1.xpose.msra.mxu0 0.0
    %669 = vmatprep.subr.mxu0 0.0
    %670 = vmatpush1.xpose.msra.mxu0 0.0
    %671 = vmatprep.subr.mxu0 0.0
    %672 = vmatpush1.xpose.msra.mxu0 0.0
    %673 = vmatprep.subr.mxu0 0.0
    %674 = vmatpush1.xpose.msra.mxu0 0.0
    %675 = vmatprep.subr.mxu0 0.0
    %676 = vmatpush1.xpose.msra.mxu0 0.0
    %677 = vmatprep.subr.mxu0 0.0
    %678 = vmatpush1.xpose.msra.mxu0 0.0
    %679 = vmatprep.subr.mxu0 0.0
    %680 = vmatpush1.xpose.msra.mxu0 0.0
    %681 = vmatprep.subr.mxu0 0.0
    %682 = vmatpush1.xpose.msra.mxu0 0.0
    %683 = vmatprep.subr.mxu0 0.0
    %684 = vmatpush1.xpose.msra.mxu0 0.0
    %685 = vmatprep.subr.mxu0 0.0
    %686 = vmatpush1.xpose.msra.mxu0 0.0
    %687 = vmatprep.subr.mxu0 0.0
    %688 = vmatpush1.xpose.msra.mxu0 0.0
    %689 = vmatprep.subr.mxu0 0.0
    %690 = vmatpush1.xpose.msra.mxu0 %v657
    %691 = vmatprep.subr.mxu0 0.0
    %692 = vmatpush2.xpose.msra.mxu0 0.0
    %693 = vmatprep.subr.mxu0 0.0
    %694 = vmatpush2.xpose.msra.mxu0 0.0
    %695 = vmatprep.subr.mxu0 0.0
    %696 = vmatpush2.xpose.msra.mxu0 0.0
    %697 = vmatprep.subr.mxu0 0.0
    %698 = vmatpush2.xpose.msra.mxu0 0.0
    %699 = vmatprep.subr.mxu0 0.0
    %700 = vmatpush2.xpose.msra.mxu0 0.0
    %701 = vmatprep.subr.mxu0 0.0
    %702 = vmatpush2.xpose.msra.mxu0 0.0
    %703 = vmatprep.subr.mxu0 0.0
    %704 = vmatpush2.xpose.msra.mxu0 0.0
    %705 = vmatprep.subr.mxu0 0.0
    %706 = vmatpush2.xpose.msra.mxu0 0.0
    %707 = vmatprep.subr.mxu0 0.0
    %708 = vmatpush2.xpose.msra.mxu0 0.0
    %709 = vmatprep.subr.mxu0 0.0
    %710 = vmatpush2.xpose.msra.mxu0 0.0
    %711 = vmatprep.subr.mxu0 0.0
    %712 = vmatpush2.xpose.msra.mxu0 0.0
    %713 = vmatprep.subr.mxu0 0.0
    %714 = vmatpush2.xpose.msra.mxu0 0.0
    %715 = vmatprep.subr.mxu0 0.0
    %716 = vmatpush2.xpose.msra.mxu0 0.0
    %717 = vmatprep.subr.mxu0 0.0
    %718 = vmatpush2.xpose.msra.mxu0 0.0
    %719 = vmatprep.subr.mxu0 0.0
    %720 = vmatpush2.xpose.msra.mxu0 0.0
    %721 = vmatprep.subr.mxu0 0.0
    %722 = vmatpush2.xpose.msra.mxu0 0.0
    %723 = vmatprep.mubr.f32.mxu0 0.0
    %724 = vmatmul.mubr.f32.gmra.mxu0 %v655
    %v725 = vpop.f32.mrf.mxu0
    %v726 = vadd.f32 0.0, %v725
    %v727 = vpop.f32.mrf.mxu0
    %728 = vdwg.mxu0
    %729 = vrot.lane.b32.xlu0 %v315, 120
    %v730 = vpop.permute.xlu0 %729
    %731 = vrot.lane.b32.xlu0 %v315, 88
    %v732 = vpop.permute.xlu0 %731
    %v733 = vsel %vm325, %v730, 0
    %v735 = vsel %vm325, %v732, 0
    %737 = vmatprep.subr.mxu0 0.0
    %738 = vmatpush1.xpose.msra.mxu0 0.0
    %739 = vmatprep.subr.mxu0 0.0
    %740 = vmatpush1.xpose.msra.mxu0 0.0
    %741 = vmatprep.subr.mxu0 0.0
    %742 = vmatpush1.xpose.msra.mxu0 0.0
    %743 = vmatprep.subr.mxu0 0.0
    %744 = vmatpush1.xpose.msra.mxu0 0.0
    %745 = vmatprep.subr.mxu0 0.0
    %746 = vmatpush1.xpose.msra.mxu0 0.0
    %747 = vmatprep.subr.mxu0 0.0
    %748 = vmatpush1.xpose.msra.mxu0 0.0
    %749 = vmatprep.subr.mxu0 0.0
    %750 = vmatpush1.xpose.msra.mxu0 0.0
    %751 = vmatprep.subr.mxu0 0.0
    %752 = vmatpush1.xpose.msra.mxu0 0.0
    %753 = vmatprep.subr.mxu0 0.0
    %754 = vmatpush1.xpose.msra.mxu0 0.0
    %755 = vmatprep.subr.mxu0 0.0
    %756 = vmatpush1.xpose.msra.mxu0 0.0
    %757 = vmatprep.subr.mxu0 0.0
    %758 = vmatpush1.xpose.msra.mxu0 0.0
    %759 = vmatprep.subr.mxu0 0.0
    %760 = vmatpush1.xpose.msra.mxu0 0.0
    %761 = vmatprep.subr.mxu0 0.0
    %762 = vmatpush1.xpose.msra.mxu0 0.0
    %763 = vmatprep.subr.mxu0 0.0
    %764 = vmatpush1.xpose.msra.mxu0 0.0
    %765 = vmatprep.subr.mxu0 0.0
    %766 = vmatpush1.xpose.msra.mxu0 0.0
    %767 = vmatprep.subr.mxu0 0.0
    %768 = vmatpush1.xpose.msra.mxu0 %v735
    %769 = vmatprep.subr.mxu0 0.0
    %770 = vmatpush2.xpose.msra.mxu0 0.0
    %771 = vmatprep.subr.mxu0 0.0
    %772 = vmatpush2.xpose.msra.mxu0 0.0
    %773 = vmatprep.subr.mxu0 0.0
    %774 = vmatpush2.xpose.msra.mxu0 0.0
    %775 = vmatprep.subr.mxu0 0.0
    %776 = vmatpush2.xpose.msra.mxu0 0.0
    %777 = vmatprep.subr.mxu0 0.0
    %778 = vmatpush2.xpose.msra.mxu0 0.0
    %779 = vmatprep.subr.mxu0 0.0
    %780 = vmatpush2.xpose.msra.mxu0 0.0
    %781 = vmatprep.subr.mxu0 0.0
    %782 = vmatpush2.xpose.msra.mxu0 0.0
    %783 = vmatprep.subr.mxu0 0.0
    %784 = vmatpush2.xpose.msra.mxu0 0.0
    %785 = vmatprep.subr.mxu0 0.0
    %786 = vmatpush2.xpose.msra.mxu0 0.0
    %787 = vmatprep.subr.mxu0 0.0
    %788 = vmatpush2.xpose.msra.mxu0 0.0
    %789 = vmatprep.subr.mxu0 0.0
    %790 = vmatpush2.xpose.msra.mxu0 0.0
    %791 = vmatprep.subr.mxu0 0.0
    %792 = vmatpush2.xpose.msra.mxu0 0.0
    %793 = vmatprep.subr.mxu0 0.0
    %794 = vmatpush2.xpose.msra.mxu0 0.0
    %795 = vmatprep.subr.mxu0 0.0
    %796 = vmatpush2.xpose.msra.mxu0 0.0
    %797 = vmatprep.subr.mxu0 0.0
    %798 = vmatpush2.xpose.msra.mxu0 0.0
    %799 = vmatprep.subr.mxu0 0.0
    %800 = vmatpush2.xpose.msra.mxu0 0.0
    %801 = vmatprep.mubr.f32.mxu0 0.0
    %802 = vmatmul.mubr.f32.gmra.mxu0 %v733
    %v803 = vpop.f32.mrf.mxu0
    %v804 = vadd.f32 0.0, %v803
    %v805 = vpop.f32.mrf.mxu0
    %806 = vdwg.mxu0
    %v807 = vsel %vm325, %v726, -inf
    %808 = vmax.xlane.f32.xlu0 %v807
    %v809 = vpop.xlane.xlu0 %808
    %v810 = vsel %vm325, %v804, -inf
    %811 = vmax.xlane.f32.xlu0 %v810
    %v812 = vpop.xlane.xlu0 %811
    %v813 = vsub.f32 %v726, %v809
    %v814 = vsub.f32 %v804, %v812
    %v815 = vmul.f32 %v813, 1.442695
    %v816 = vpow.pop %v815
    %v817 = vmul.f32 %v814, 1.442695
    %v818 = vpow.pop %v817
    %v819 = vsel %vm325, %v816, 0.0
    %820 = vadd.xlane.f32.xlu0 %v819
    %v821 = vpop.xlane.xlu0 %820
    %v822 = vsel %vm325, %v818, 0.0
    %823 = vadd.xlane.f32.xlu0 %v822
    %v824 = vpop.xlane.xlu0 %823
    %v825 = vrcp.pop %v821
    %v826 = vrcp.pop %v824
    %v827 = vmul.f32 %v816, %v825
    %v828 = vmul.f32 %v818, %v826
    %829 = vrot.lane.b32.xlu0 %v310, 56
    %v830 = vpop.permute.xlu0 %829
    %v833 = vsel %vm325, %v827, 0
    %835 = vmatprep.subr.mxu0 0.0
    %836 = vmatpush1.msra.mxu0 0.0
    %837 = vmatprep.subr.mxu0 0.0
    %838 = vmatpush1.msra.mxu0 0.0
    %839 = vmatprep.subr.mxu0 0.0
    %840 = vmatpush1.msra.mxu0 0.0
    %841 = vmatprep.subr.mxu0 0.0
    %842 = vmatpush1.msra.mxu0 0.0
    %843 = vmatprep.subr.mxu0 0.0
    %844 = vmatpush1.msra.mxu0 0.0
    %845 = vmatprep.subr.mxu0 0.0
    %846 = vmatpush1.msra.mxu0 0.0
    %847 = vmatprep.subr.mxu0 0.0
    %848 = vmatpush1.msra.mxu0 0.0
    %849 = vmatprep.subr.mxu0 0.0
    %850 = vmatpush1.msra.mxu0 0.0
    %851 = vmatprep.subr.mxu0 0.0
    %852 = vmatpush1.msra.mxu0 0.0
    %853 = vmatprep.subr.mxu0 0.0
    %854 = vmatpush1.msra.mxu0 0.0
    %855 = vmatprep.subr.mxu0 0.0
    %856 = vmatpush1.msra.mxu0 0.0
    %857 = vmatprep.subr.mxu0 0.0
    %858 = vmatpush1.msra.mxu0 0.0
    %859 = vmatprep.subr.mxu0 0.0
    %860 = vmatpush1.msra.mxu0 0.0
    %861 = vmatprep.subr.mxu0 0.0
    %862 = vmatpush1.msra.mxu0 0.0
    %863 = vmatprep.subr.mxu0 0.0
    %864 = vmatpush1.msra.mxu0 0.0
    %865 = vmatprep.subr.mxu0 0.0
    %866 = vmatpush1.msra.mxu0 %v830
    %867 = vmatprep.subr.mxu0 0.0
    %868 = vmatpush2.msra.mxu0 0.0
    %869 = vmatprep.subr.mxu0 0.0
    %870 = vmatpush2.msra.mxu0 0.0
    %871 = vmatprep.subr.mxu0 0.0
    %872 = vmatpush2.msra.mxu0 0.0
    %873 = vmatprep.subr.mxu0 0.0
    %874 = vmatpush2.msra.mxu0 0.0
    %875 = vmatprep.subr.mxu0 0.0
    %876 = vmatpush2.msra.mxu0 0.0
    %877 = vmatprep.subr.mxu0 0.0
    %878 = vmatpush2.msra.mxu0 0.0
    %879 = vmatprep.subr.mxu0 0.0
    %880 = vmatpush2.msra.mxu0 0.0
    %881 = vmatprep.subr.mxu0 0.0
    %882 = vmatpush2.msra.mxu0 0.0
    %883 = vmatprep.subr.mxu0 0.0
    %884 = vmatpush2.msra.mxu0 0.0
    %885 = vmatprep.subr.mxu0 0.0
    %886 = vmatpush2.msra.mxu0 0.0
    %887 = vmatprep.subr.mxu0 0.0
    %888 = vmatpush2.msra.mxu0 0.0
    %889 = vmatprep.subr.mxu0 0.0
    %890 = vmatpush2.msra.mxu0 0.0
    %891 = vmatprep.subr.mxu0 0.0
    %892 = vmatpush2.msra.mxu0 0.0
    %893 = vmatprep.subr.mxu0 0.0
    %894 = vmatpush2.msra.mxu0 0.0
    %895 = vmatprep.subr.mxu0 0.0
    %896 = vmatpush2.msra.mxu0 0.0
    %897 = vmatprep.subr.mxu0 0.0
    %898 = vmatpush2.msra.mxu0 0.0
    %899 = vmatprep.mubr.f32.mxu0 0.0
    %900 = vmatmul.mubr.f32.gmra.mxu0 %v833
    %v901 = vpop.f32.mrf.mxu0
    %v902 = vadd.f32 0.0, %v901
    %v903 = vpop.f32.mrf.mxu0
    %904 = vdwg.mxu0
    %905 = vrot.lane.b32.xlu0 %v315, 56
    %v906 = vpop.permute.xlu0 %905
    %v909 = vsel %vm325, %v828, 0
    %911 = vmatprep.subr.mxu0 0.0
    %912 = vmatpush1.msra.mxu0 0.0
    %913 = vmatprep.subr.mxu0 0.0
    %914 = vmatpush1.msra.mxu0 0.0
    %915 = vmatprep.subr.mxu0 0.0
    %916 = vmatpush1.msra.mxu0 0.0
    %917 = vmatprep.subr.mxu0 0.0
    %918 = vmatpush1.msra.mxu0 0.0
    %919 = vmatprep.subr.mxu0 0.0
    %920 = vmatpush1.msra.mxu0 0.0
    %921 = vmatprep.subr.mxu0 0.0
    %922 = vmatpush1.msra.mxu0 0.0
    %923 = vmatprep.subr.mxu0 0.0
    %924 = vmatpush1.msra.mxu0 0.0
    %925 = vmatprep.subr.mxu0 0.0
    %926 = vmatpush1.msra.mxu0 0.0
    %927 = vmatprep.subr.mxu0 0.0
    %928 = vmatpush1.msra.mxu0 0.0
    %929 = vmatprep.subr.mxu0 0.0
    %930 = vmatpush1.msra.mxu0 0.0
    %931 = vmatprep.subr.mxu0 0.0
    %932 = vmatpush1.msra.mxu0 0.0
    %933 = vmatprep.subr.mxu0 0.0
    %934 = vmatpush1.msra.mxu0 0.0
    %935 = vmatprep.subr.mxu0 0.0
    %936 = vmatpush1.msra.mxu0 0.0
    %937 = vmatprep.subr.mxu0 0.0
    %938 = vmatpush1.msra.mxu0 0.0
    %939 = vmatprep.subr.mxu0 0.0
    %940 = vmatpush1.msra.mxu0 0.0
    %941 = vmatprep.subr.mxu0 0.0
    %942 = vmatpush1.msra.mxu0 %v906
    %943 = vmatprep.subr.mxu0 0.0
    %944 = vmatpush2.msra.mxu0 0.0
    %945 = vmatprep.subr.mxu0 0.0
    %946 = vmatpush2.msra.mxu0 0.0
    %947 = vmatprep.subr.mxu0 0.0
    %948 = vmatpush2.msra.mxu0 0.0
    %949 = vmatprep.subr.mxu0 0.0
    %950 = vmatpush2.msra.mxu0 0.0
    %951 = vmatprep.subr.mxu0 0.0
    %952 = vmatpush2.msra.mxu0 0.0
    %953 = vmatprep.subr.mxu0 0.0
    %954 = vmatpush2.msra.mxu0 0.0
    %955 = vmatprep.subr.mxu0 0.0
    %956 = vmatpush2.msra.mxu0 0.0
    %957 = vmatprep.subr.mxu0 0.0
    %958 = vmatpush2.msra.mxu0 0.0
    %959 = vmatprep.subr.mxu0 0.0
    %960 = vmatpush2.msra.mxu0 0.0
    %961 = vmatprep.subr.mxu0 0.0
    %962 = vmatpush2.msra.mxu0 0.0
    %963 = vmatprep.subr.mxu0 0.0
    %964 = vmatpush2.msra.mxu0 0.0
    %965 = vmatprep.subr.mxu0 0.0
    %966 = vmatpush2.msra.mxu0 0.0
    %967 = vmatprep.subr.mxu0 0.0
    %968 = vmatpush2.msra.mxu0 0.0
    %969 = vmatprep.subr.mxu0 0.0
    %970 = vmatpush2.msra.mxu0 0.0
    %971 = vmatprep.subr.mxu0 0.0
    %972 = vmatpush2.msra.mxu0 0.0
    %973 = vmatprep.subr.mxu0 0.0
    %974 = vmatpush2.msra.mxu0 0.0
    %975 = vmatprep.mubr.f32.mxu0 0.0
    %976 = vmatmul.mubr.f32.gmra.mxu0 %v909
    %v977 = vpop.f32.mrf.mxu0
    %v978 = vadd.f32 0.0, %v977
    %v979 = vpop.f32.mrf.mxu0
    %980 = vdwg.mxu0
    %v982 = vsel %vm325, %v902, 0
    %v985 = vsel %vm325, %v978, 0
    %987 = vmatprep.subr.mxu0 0.0
    %988 = vmatpush1.msra.mxu0 0.0
    %989 = vmatprep.subr.mxu0 0.0
    %990 = vmatpush1.msra.mxu0 0.0
    %991 = vmatprep.subr.mxu0 0.0
    %992 = vmatpush1.msra.mxu0 0.0
    %993 = vmatprep.subr.mxu0 0.0
    %994 = vmatpush1.msra.mxu0 0.0
    %995 = vmatprep.subr.mxu0 0.0
    %996 = vmatpush1.msra.mxu0 0.0
    %997 = vmatprep.subr.mxu0 0.0
    %998 = vmatpush1.msra.mxu0 0.0
    %999 = vmatprep.subr.mxu0 0.0
    %1000 = vmatpush1.msra.mxu0 0.0
    %1001 = vmatprep.subr.mxu0 0.0
    %1002 = vmatpush1.msra.mxu0 0.0
    %1003 = vmatprep.subr.mxu0 0.0
    %1004 = vmatpush1.msra.mxu0 0.0
    %1005 = vmatprep.subr.mxu0 0.0
    %1006 = vmatpush1.msra.mxu0 0.0
    %1007 = vmatprep.subr.mxu0 0.0
    %1008 = vmatpush1.msra.mxu0 0.0
    %1009 = vmatprep.subr.mxu0 0.0
    %1010 = vmatpush1.msra.mxu0 0.0
    %1011 = vmatprep.subr.mxu0 0.0
    %1012 = vmatpush1.msra.mxu0 0.0
    %1013 = vmatprep.subr.mxu0 0.0
    %1014 = vmatpush1.msra.mxu0 0.0
    %1015 = vmatprep.subr.mxu0 0.0
    %1016 = vmatpush1.msra.mxu0 0.0
    %1017 = vmatprep.subr.mxu0 0.0
    %1018 = vmatpush1.msra.mxu0 %v319
    %1019 = vmatprep.subr.mxu0 0.0
    %1020 = vmatpush2.msra.mxu0 0.0
    %1021 = vmatprep.subr.mxu0 0.0
    %1022 = vmatpush2.msra.mxu0 0.0
    %1023 = vmatprep.subr.mxu0 0.0
    %1024 = vmatpush2.msra.mxu0 0.0
    %1025 = vmatprep.subr.mxu0 0.0
    %1026 = vmatpush2.msra.mxu0 0.0
    %1027 = vmatprep.subr.mxu0 0.0
    %1028 = vmatpush2.msra.mxu0 0.0
    %1029 = vmatprep.subr.mxu0 0.0
    %1030 = vmatpush2.msra.mxu0 0.0
    %1031 = vmatprep.subr.mxu0 0.0
    %1032 = vmatpush2.msra.mxu0 0.0
    %1033 = vmatprep.subr.mxu0 0.0
    %1034 = vmatpush2.msra.mxu0 0.0
    %1035 = vmatprep.subr.mxu0 0.0
    %1036 = vmatpush2.msra.mxu0 0.0
    %1037 = vmatprep.subr.mxu0 0.0
    %1038 = vmatpush2.msra.mxu0 0.0
    %1039 = vmatprep.subr.mxu0 0.0
    %1040 = vmatpush2.msra.mxu0 0.0
    %1041 = vmatprep.subr.mxu0 0.0
    %1042 = vmatpush2.msra.mxu0 0.0
    %1043 = vmatprep.subr.mxu0 0.0
    %1044 = vmatpush2.msra.mxu0 0.0
    %1045 = vmatprep.subr.mxu0 0.0
    %1046 = vmatpush2.msra.mxu0 0.0
    %1047 = vmatprep.subr.mxu0 0.0
    %1048 = vmatpush2.msra.mxu0 0.0
    %1049 = vmatprep.subr.mxu0 0.0
    %1050 = vmatpush2.msra.mxu0 0.0
    %1051 = vmatprep.mubr.f32.mxu0 0.0
    %1052 = vmatmul.mubr.f32.gmra.mxu0 %v982
    %v1053 = vpop.f32.mrf.mxu0
    %v1054 = vadd.f32 0.0, %v1053
    %v1055 = vpop.f32.mrf.mxu0
    %1056 = vmatprep.mubr.f32.mxu0 0.0
    %1057 = vmatmul.mubr.f32.gmra.mxu0 %v985
    %v1058 = vpop.f32.mrf.mxu0
    %v1059 = vadd.f32 0.0, %v1058
    %v1060 = vpop.f32.mrf.mxu0
    %1061 = vdwg.mxu0
    %v1063 = vsel %vm325, %v572, 0
    %v1066 = vsel %vm325, %v648, 0
    %1068 = vmatprep.subr.mxu0 0.0
    %1069 = vmatpush1.msra.mxu0 0.0
    %1070 = vmatprep.subr.mxu0 0.0
    %1071 = vmatpush1.msra.mxu0 0.0
    %1072 = vmatprep.subr.mxu0 0.0
    %1073 = vmatpush1.msra.mxu0 0.0
    %1074 = vmatprep.subr.mxu0 0.0
    %1075 = vmatpush1.msra.mxu0 0.0
    %1076 = vmatprep.subr.mxu0 0.0
    %1077 = vmatpush1.msra.mxu0 0.0
    %1078 = vmatprep.subr.mxu0 0.0
    %1079 = vmatpush1.msra.mxu0 0.0
    %1080 = vmatprep.subr.mxu0 0.0
    %1081 = vmatpush1.msra.mxu0 0.0
    %1082 = vmatprep.subr.mxu0 0.0
    %1083 = vmatpush1.msra.mxu0 0.0
    %1084 = vmatprep.subr.mxu0 0.0
    %1085 = vmatpush1.msra.mxu0 0.0
    %1086 = vmatprep.subr.mxu0 0.0
    %1087 = vmatpush1.msra.mxu0 0.0
    %1088 = vmatprep.subr.mxu0 0.0
    %1089 = vmatpush1.msra.mxu0 0.0
    %1090 = vmatprep.subr.mxu0 0.0
    %1091 = vmatpush1.msra.mxu0 0.0
    %1092 = vmatprep.subr.mxu0 0.0
    %1093 = vmatpush1.msra.mxu0 0.0
    %1094 = vmatprep.subr.mxu0 0.0
    %1095 = vmatpush1.msra.mxu0 0.0
    %1096 = vmatprep.subr.mxu0 0.0
    %1097 = vmatpush1.msra.mxu0 0.0
    %1098 = vmatprep.subr.mxu0 0.0
    %1099 = vmatpush1.msra.mxu0 %v318
    %1100 = vmatprep.subr.mxu0 0.0
    %1101 = vmatpush2.msra.mxu0 0.0
    %1102 = vmatprep.subr.mxu0 0.0
    %1103 = vmatpush2.msra.mxu0 0.0
    %1104 = vmatprep.subr.mxu0 0.0
    %1105 = vmatpush2.msra.mxu0 0.0
    %1106 = vmatprep.subr.mxu0 0.0
    %1107 = vmatpush2.msra.mxu0 0.0
    %1108 = vmatprep.subr.mxu0 0.0
    %1109 = vmatpush2.msra.mxu0 0.0
    %1110 = vmatprep.subr.mxu0 0.0
    %1111 = vmatpush2.msra.mxu0 0.0
    %1112 = vmatprep.subr.mxu0 0.0
    %1113 = vmatpush2.msra.mxu0 0.0
    %1114 = vmatprep.subr.mxu0 0.0
    %1115 = vmatpush2.msra.mxu0 0.0
    %1116 = vmatprep.subr.mxu0 0.0
    %1117 = vmatpush2.msra.mxu0 0.0
    %1118 = vmatprep.subr.mxu0 0.0
    %1119 = vmatpush2.msra.mxu0 0.0
    %1120 = vmatprep.subr.mxu0 0.0
    %1121 = vmatpush2.msra.mxu0 0.0
    %1122 = vmatprep.subr.mxu0 0.0
    %1123 = vmatpush2.msra.mxu0 0.0
    %1124 = vmatprep.subr.mxu0 0.0
    %1125 = vmatpush2.msra.mxu0 0.0
    %1126 = vmatprep.subr.mxu0 0.0
    %1127 = vmatpush2.msra.mxu0 0.0
    %1128 = vmatprep.subr.mxu0 0.0
    %1129 = vmatpush2.msra.mxu0 0.0
    %1130 = vmatprep.subr.mxu0 0.0
    %1131 = vmatpush2.msra.mxu0 0.0
    %1132 = vmatprep.mubr.f32.mxu0 0.0
    %1133 = vmatmul.mubr.f32.gmra.mxu0 %v1063
    %v1134 = vpop.f32.mrf.mxu0
    %v1135 = vadd.f32 %v1054, %v1134
    %v1136 = vpop.f32.mrf.mxu0
    %1137 = vmatprep.mubr.f32.mxu0 0.0
    %1138 = vmatmul.mubr.f32.gmra.mxu0 %v1066
    %v1139 = vpop.f32.mrf.mxu0
    %v1140 = vadd.f32 %v1059, %v1139
    %v1141 = vpop.f32.mrf.mxu0
    %1142 = vdwg.mxu0
    %1143 = vrot.lane.b32.xlu0 %v310, 112
    %v1144 = vpop.permute.xlu0 %1143
    %1145 = vrot.lane.b32.xlu0 %v310, 80
    %v1146 = vpop.permute.xlu0 %1145
    %v1147 = vsel %vm325, %v1144, 0
    %v1149 = vsel %vm325, %v1146, 0
    %1151 = vmatprep.subr.mxu0 0.0
    %1152 = vmatpush1.xpose.msra.mxu0 0.0
    %1153 = vmatprep.subr.mxu0 0.0
    %1154 = vmatpush1.xpose.msra.mxu0 0.0
    %1155 = vmatprep.subr.mxu0 0.0
    %1156 = vmatpush1.xpose.msra.mxu0 0.0
    %1157 = vmatprep.subr.mxu0 0.0
    %1158 = vmatpush1.xpose.msra.mxu0 0.0
    %1159 = vmatprep.subr.mxu0 0.0
    %1160 = vmatpush1.xpose.msra.mxu0 0.0
    %1161 = vmatprep.subr.mxu0 0.0
    %1162 = vmatpush1.xpose.msra.mxu0 0.0
    %1163 = vmatprep.subr.mxu0 0.0
    %1164 = vmatpush1.xpose.msra.mxu0 0.0
    %1165 = vmatprep.subr.mxu0 0.0
    %1166 = vmatpush1.xpose.msra.mxu0 0.0
    %1167 = vmatprep.subr.mxu0 0.0
    %1168 = vmatpush1.xpose.msra.mxu0 0.0
    %1169 = vmatprep.subr.mxu0 0.0
    %1170 = vmatpush1.xpose.msra.mxu0 0.0
    %1171 = vmatprep.subr.mxu0 0.0
    %1172 = vmatpush1.xpose.msra.mxu0 0.0
    %1173 = vmatprep.subr.mxu0 0.0
    %1174 = vmatpush1.xpose.msra.mxu0 0.0
    %1175 = vmatprep.subr.mxu0 0.0
    %1176 = vmatpush1.xpose.msra.mxu0 0.0
    %1177 = vmatprep.subr.mxu0 0.0
    %1178 = vmatpush1.xpose.msra.mxu0 0.0
    %1179 = vmatprep.subr.mxu0 0.0
    %1180 = vmatpush1.xpose.msra.mxu0 0.0
    %1181 = vmatprep.subr.mxu0 0.0
    %1182 = vmatpush1.xpose.msra.mxu0 %v1149
    %1183 = vmatprep.subr.mxu0 0.0
    %1184 = vmatpush2.xpose.msra.mxu0 0.0
    %1185 = vmatprep.subr.mxu0 0.0
    %1186 = vmatpush2.xpose.msra.mxu0 0.0
    %1187 = vmatprep.subr.mxu0 0.0
    %1188 = vmatpush2.xpose.msra.mxu0 0.0
    %1189 = vmatprep.subr.mxu0 0.0
    %1190 = vmatpush2.xpose.msra.mxu0 0.0
    %1191 = vmatprep.subr.mxu0 0.0
    %1192 = vmatpush2.xpose.msra.mxu0 0.0
    %1193 = vmatprep.subr.mxu0 0.0
    %1194 = vmatpush2.xpose.msra.mxu0 0.0
    %1195 = vmatprep.subr.mxu0 0.0
    %1196 = vmatpush2.xpose.msra.mxu0 0.0
    %1197 = vmatprep.subr.mxu0 0.0
    %1198 = vmatpush2.xpose.msra.mxu0 0.0
    %1199 = vmatprep.subr.mxu0 0.0
    %1200 = vmatpush2.xpose.msra.mxu0 0.0
    %1201 = vmatprep.subr.mxu0 0.0
    %1202 = vmatpush2.xpose.msra.mxu0 0.0
    %1203 = vmatprep.subr.mxu0 0.0
    %1204 = vmatpush2.xpose.msra.mxu0 0.0
    %1205 = vmatprep.subr.mxu0 0.0
    %1206 = vmatpush2.xpose.msra.mxu0 0.0
    %1207 = vmatprep.subr.mxu0 0.0
    %1208 = vmatpush2.xpose.msra.mxu0 0.0
    %1209 = vmatprep.subr.mxu0 0.0
    %1210 = vmatpush2.xpose.msra.mxu0 0.0
    %1211 = vmatprep.subr.mxu0 0.0
    %1212 = vmatpush2.xpose.msra.mxu0 0.0
    %1213 = vmatprep.subr.mxu0 0.0
    %1214 = vmatpush2.xpose.msra.mxu0 0.0
    %1215 = vmatprep.mubr.f32.mxu0 0.0
    %1216 = vmatmul.mubr.f32.gmra.mxu0 %v1147
    %v1217 = vpop.f32.mrf.mxu0
    %v1218 = vadd.f32 0.0, %v1217
    %v1219 = vpop.f32.mrf.mxu0
    %1220 = vdwg.mxu0
    %1221 = vrot.lane.b32.xlu0 %v315, 112
    %v1222 = vpop.permute.xlu0 %1221
    %1223 = vrot.lane.b32.xlu0 %v315, 80
    %v1224 = vpop.permute.xlu0 %1223
    %v1225 = vsel %vm325, %v1222, 0
    %v1227 = vsel %vm325, %v1224, 0
    %1229 = vmatprep.subr.mxu0 0.0
    %1230 = vmatpush1.xpose.msra.mxu0 0.0
    %1231 = vmatprep.subr.mxu0 0.0
    %1232 = vmatpush1.xpose.msra.mxu0 0.0
    %1233 = vmatprep.subr.mxu0 0.0
    %1234 = vmatpush1.xpose.msra.mxu0 0.0
    %1235 = vmatprep.subr.mxu0 0.0
    %1236 = vmatpush1.xpose.msra.mxu0 0.0
    %1237 = vmatprep.subr.mxu0 0.0
    %1238 = vmatpush1.xpose.msra.mxu0 0.0
    %1239 = vmatprep.subr.mxu0 0.0
    %1240 = vmatpush1.xpose.msra.mxu0 0.0
    %1241 = vmatprep.subr.mxu0 0.0
    %1242 = vmatpush1.xpose.msra.mxu0 0.0
    %1243 = vmatprep.subr.mxu0 0.0
    %1244 = vmatpush1.xpose.msra.mxu0 0.0
    %1245 = vmatprep.subr.mxu0 0.0
    %1246 = vmatpush1.xpose.msra.mxu0 0.0
    %1247 = vmatprep.subr.mxu0 0.0
    %1248 = vmatpush1.xpose.msra.mxu0 0.0
    %1249 = vmatprep.subr.mxu0 0.0
    %1250 = vmatpush1.xpose.msra.mxu0 0.0
    %1251 = vmatprep.subr.mxu0 0.0
    %1252 = vmatpush1.xpose.msra.mxu0 0.0
    %1253 = vmatprep.subr.mxu0 0.0
    %1254 = vmatpush1.xpose.msra.mxu0 0.0
    %1255 = vmatprep.subr.mxu0 0.0
    %1256 = vmatpush1.xpose.msra.mxu0 0.0
    %1257 = vmatprep.subr.mxu0 0.0
    %1258 = vmatpush1.xpose.msra.mxu0 0.0
    %1259 = vmatprep.subr.mxu0 0.0
    %1260 = vmatpush1.xpose.msra.mxu0 %v1227
    %1261 = vmatprep.subr.mxu0 0.0
    %1262 = vmatpush2.xpose.msra.mxu0 0.0
    %1263 = vmatprep.subr.mxu0 0.0
    %1264 = vmatpush2.xpose.msra.mxu0 0.0
    %1265 = vmatprep.subr.mxu0 0.0
    %1266 = vmatpush2.xpose.msra.mxu0 0.0
    %1267 = vmatprep.subr.mxu0 0.0
    %1268 = vmatpush2.xpose.msra.mxu0 0.0
    %1269 = vmatprep.subr.mxu0 0.0
    %1270 = vmatpush2.xpose.msra.mxu0 0.0
    %1271 = vmatprep.subr.mxu0 0.0
    %1272 = vmatpush2.xpose.msra.mxu0 0.0
    %1273 = vmatprep.subr.mxu0 0.0
    %1274 = vmatpush2.xpose.msra.mxu0 0.0
    %1275 = vmatprep.subr.mxu0 0.0
    %1276 = vmatpush2.xpose.msra.mxu0 0.0
    %1277 = vmatprep.subr.mxu0 0.0
    %1278 = vmatpush2.xpose.msra.mxu0 0.0
    %1279 = vmatprep.subr.mxu0 0.0
    %1280 = vmatpush2.xpose.msra.mxu0 0.0
    %1281 = vmatprep.subr.mxu0 0.0
    %1282 = vmatpush2.xpose.msra.mxu0 0.0
    %1283 = vmatprep.subr.mxu0 0.0
    %1284 = vmatpush2.xpose.msra.mxu0 0.0
    %1285 = vmatprep.subr.mxu0 0.0
    %1286 = vmatpush2.xpose.msra.mxu0 0.0
    %1287 = vmatprep.subr.mxu0 0.0
    %1288 = vmatpush2.xpose.msra.mxu0 0.0
    %1289 = vmatprep.subr.mxu0 0.0
    %1290 = vmatpush2.xpose.msra.mxu0 0.0
    %1291 = vmatprep.subr.mxu0 0.0
    %1292 = vmatpush2.xpose.msra.mxu0 0.0
    %1293 = vmatprep.mubr.f32.mxu0 0.0
    %1294 = vmatmul.mubr.f32.gmra.mxu0 %v1225
    %v1295 = vpop.f32.mrf.mxu0
    %v1296 = vadd.f32 0.0, %v1295
    %v1297 = vpop.f32.mrf.mxu0
    %1298 = vdwg.mxu0
    %v1299 = vsel %vm325, %v1218, -inf
    %1300 = vmax.xlane.f32.xlu0 %v1299
    %v1301 = vpop.xlane.xlu0 %1300
    %v1302 = vsel %vm325, %v1296, -inf
    %1303 = vmax.xlane.f32.xlu0 %v1302
    %v1304 = vpop.xlane.xlu0 %1303
    %v1305 = vsub.f32 %v1218, %v1301
    %v1306 = vsub.f32 %v1296, %v1304
    %v1307 = vmul.f32 %v1305, 1.442695
    %v1308 = vpow.pop %v1307
    %v1309 = vmul.f32 %v1306, 1.442695
    %v1310 = vpow.pop %v1309
    %v1311 = vsel %vm325, %v1308, 0.0
    %1312 = vadd.xlane.f32.xlu0 %v1311
    %v1313 = vpop.xlane.xlu0 %1312
    %v1314 = vsel %vm325, %v1310, 0.0
    %1315 = vadd.xlane.f32.xlu0 %v1314
    %v1316 = vpop.xlane.xlu0 %1315
    %v1317 = vrcp.pop %v1313
    %v1318 = vrcp.pop %v1316
    %v1319 = vmul.f32 %v1308, %v1317
    %v1320 = vmul.f32 %v1310, %v1318
    %1321 = vrot.lane.b32.xlu0 %v310, 48
    %v1322 = vpop.permute.xlu0 %1321
    %v1325 = vsel %vm325, %v1319, 0
    %1327 = vmatprep.subr.mxu0 0.0
    %1328 = vmatpush1.msra.mxu0 0.0
    %1329 = vmatprep.subr.mxu0 0.0
    %1330 = vmatpush1.msra.mxu0 0.0
    %1331 = vmatprep.subr.mxu0 0.0
    %1332 = vmatpush1.msra.mxu0 0.0
    %1333 = vmatprep.subr.mxu0 0.0
    %1334 = vmatpush1.msra.mxu0 0.0
    %1335 = vmatprep.subr.mxu0 0.0
    %1336 = vmatpush1.msra.mxu0 0.0
    %1337 = vmatprep.subr.mxu0 0.0
    %1338 = vmatpush1.msra.mxu0 0.0
    %1339 = vmatprep.subr.mxu0 0.0
    %1340 = vmatpush1.msra.mxu0 0.0
    %1341 = vmatprep.subr.mxu0 0.0
    %1342 = vmatpush1.msra.mxu0 0.0
    %1343 = vmatprep.subr.mxu0 0.0
    %1344 = vmatpush1.msra.mxu0 0.0
    %1345 = vmatprep.subr.mxu0 0.0
    %1346 = vmatpush1.msra.mxu0 0.0
    %1347 = vmatprep.subr.mxu0 0.0
    %1348 = vmatpush1.msra.mxu0 0.0
    %1349 = vmatprep.subr.mxu0 0.0
    %1350 = vmatpush1.msra.mxu0 0.0
    %1351 = vmatprep.subr.mxu0 0.0
    %1352 = vmatpush1.msra.mxu0 0.0
    %1353 = vmatprep.subr.mxu0 0.0
    %1354 = vmatpush1.msra.mxu0 0.0
    %1355 = vmatprep.subr.mxu0 0.0
    %1356 = vmatpush1.msra.mxu0 0.0
    %1357 = vmatprep.subr.mxu0 0.0
    %1358 = vmatpush1.msra.mxu0 %v1322
    %1359 = vmatprep.subr.mxu0 0.0
    %1360 = vmatpush2.msra.mxu0 0.0
    %1361 = vmatprep.subr.mxu0 0.0
    %1362 = vmatpush2.msra.mxu0 0.0
    %1363 = vmatprep.subr.mxu0 0.0
    %1364 = vmatpush2.msra.mxu0 0.0
    %1365 = vmatprep.subr.mxu0 0.0
    %1366 = vmatpush2.msra.mxu0 0.0
    %1367 = vmatprep.subr.mxu0 0.0
    %1368 = vmatpush2.msra.mxu0 0.0
    %1369 = vmatprep.subr.mxu0 0.0
    %1370 = vmatpush2.msra.mxu0 0.0
    %1371 = vmatprep.subr.mxu0 0.0
    %1372 = vmatpush2.msra.mxu0 0.0
    %1373 = vmatprep.subr.mxu0 0.0
    %1374 = vmatpush2.msra.mxu0 0.0
    %1375 = vmatprep.subr.mxu0 0.0
    %1376 = vmatpush2.msra.mxu0 0.0
    %1377 = vmatprep.subr.mxu0 0.0
    %1378 = vmatpush2.msra.mxu0 0.0
    %1379 = vmatprep.subr.mxu0 0.0
    %1380 = vmatpush2.msra.mxu0 0.0
    %1381 = vmatprep.subr.mxu0 0.0
    %1382 = vmatpush2.msra.mxu0 0.0
    %1383 = vmatprep.subr.mxu0 0.0
    %1384 = vmatpush2.msra.mxu0 0.0
    %1385 = vmatprep.subr.mxu0 0.0
    %1386 = vmatpush2.msra.mxu0 0.0
    %1387 = vmatprep.subr.mxu0 0.0
    %1388 = vmatpush2.msra.mxu0 0.0
    %1389 = vmatprep.subr.mxu0 0.0
    %1390 = vmatpush2.msra.mxu0 0.0
    %1391 = vmatprep.mubr.f32.mxu0 0.0
    %1392 = vmatmul.mubr.f32.gmra.mxu0 %v1325
    %v1393 = vpop.f32.mrf.mxu0
    %v1394 = vadd.f32 0.0, %v1393
    %v1395 = vpop.f32.mrf.mxu0
    %1396 = vdwg.mxu0
    %1397 = vrot.lane.b32.xlu0 %v315, 48
    %v1398 = vpop.permute.xlu0 %1397
    %v1401 = vsel %vm325, %v1320, 0
    %1403 = vmatprep.subr.mxu0 0.0
    %1404 = vmatpush1.msra.mxu0 0.0
    %1405 = vmatprep.subr.mxu0 0.0
    %1406 = vmatpush1.msra.mxu0 0.0
    %1407 = vmatprep.subr.mxu0 0.0
    %1408 = vmatpush1.msra.mxu0 0.0
    %1409 = vmatprep.subr.mxu0 0.0
    %1410 = vmatpush1.msra.mxu0 0.0
    %1411 = vmatprep.subr.mxu0 0.0
    %1412 = vmatpush1.msra.mxu0 0.0
    %1413 = vmatprep.subr.mxu0 0.0
    %1414 = vmatpush1.msra.mxu0 0.0
    %1415 = vmatprep.subr.mxu0 0.0
    %1416 = vmatpush1.msra.mxu0 0.0
    %1417 = vmatprep.subr.mxu0 0.0
    %1418 = vmatpush1.msra.mxu0 0.0
    %1419 = vmatprep.subr.mxu0 0.0
    %1420 = vmatpush1.msra.mxu0 0.0
    %1421 = vmatprep.subr.mxu0 0.0
    %1422 = vmatpush1.msra.mxu0 0.0
    %1423 = vmatprep.subr.mxu0 0.0
    %1424 = vmatpush1.msra.mxu0 0.0
    %1425 = vmatprep.subr.mxu0 0.0
    %1426 = vmatpush1.msra.mxu0 0.0
    %1427 = vmatprep.subr.mxu0 0.0
    %1428 = vmatpush1.msra.mxu0 0.0
    %1429 = vmatprep.subr.mxu0 0.0
    %1430 = vmatpush1.msra.mxu0 0.0
    %1431 = vmatprep.subr.mxu0 0.0
    %1432 = vmatpush1.msra.mxu0 0.0
    %1433 = vmatprep.subr.mxu0 0.0
    %1434 = vmatpush1.msra.mxu0 %v1398
    %1435 = vmatprep.subr.mxu0 0.0
    %1436 = vmatpush2.msra.mxu0 0.0
    %1437 = vmatprep.subr.mxu0 0.0
    %1438 = vmatpush2.msra.mxu0 0.0
    %1439 = vmatprep.subr.mxu0 0.0
    %1440 = vmatpush2.msra.mxu0 0.0
    %1441 = vmatprep.subr.mxu0 0.0
    %1442 = vmatpush2.msra.mxu0 0.0
    %1443 = vmatprep.subr.mxu0 0.0
    %1444 = vmatpush2.msra.mxu0 0.0
    %1445 = vmatprep.subr.mxu0 0.0
    %1446 = vmatpush2.msra.mxu0 0.0
    %1447 = vmatprep.subr.mxu0 0.0
    %1448 = vmatpush2.msra.mxu0 0.0
    %1449 = vmatprep.subr.mxu0 0.0
    %1450 = vmatpush2.msra.mxu0 0.0
    %1451 = vmatprep.subr.mxu0 0.0
    %1452 = vmatpush2.msra.mxu0 0.0
    %1453 = vmatprep.subr.mxu0 0.0
    %1454 = vmatpush2.msra.mxu0 0.0
    %1455 = vmatprep.subr.mxu0 0.0
    %1456 = vmatpush2.msra.mxu0 0.0
    %1457 = vmatprep.subr.mxu0 0.0
    %1458 = vmatpush2.msra.mxu0 0.0
    %1459 = vmatprep.subr.mxu0 0.0
    %1460 = vmatpush2.msra.mxu0 0.0
    %1461 = vmatprep.subr.mxu0 0.0
    %1462 = vmatpush2.msra.mxu0 0.0
    %1463 = vmatprep.subr.mxu0 0.0
    %1464 = vmatpush2.msra.mxu0 0.0
    %1465 = vmatprep.subr.mxu0 0.0
    %1466 = vmatpush2.msra.mxu0 0.0
    %1467 = vmatprep.mubr.f32.mxu0 0.0
    %1468 = vmatmul.mubr.f32.gmra.mxu0 %v1401
    %v1469 = vpop.f32.mrf.mxu0
    %v1470 = vadd.f32 0.0, %v1469
    %v1471 = vpop.f32.mrf.mxu0
    %1472 = vdwg.mxu0
    %v1474 = vsel %vm325, %v1394, 0
    %v1477 = vsel %vm325, %v1470, 0
    %1479 = vmatprep.subr.mxu0 0.0
    %1480 = vmatpush1.msra.mxu0 0.0
    %1481 = vmatprep.subr.mxu0 0.0
    %1482 = vmatpush1.msra.mxu0 0.0
    %1483 = vmatprep.subr.mxu0 0.0
    %1484 = vmatpush1.msra.mxu0 0.0
    %1485 = vmatprep.subr.mxu0 0.0
    %1486 = vmatpush1.msra.mxu0 0.0
    %1487 = vmatprep.subr.mxu0 0.0
    %1488 = vmatpush1.msra.mxu0 0.0
    %1489 = vmatprep.subr.mxu0 0.0
    %1490 = vmatpush1.msra.mxu0 0.0
    %1491 = vmatprep.subr.mxu0 0.0
    %1492 = vmatpush1.msra.mxu0 0.0
    %1493 = vmatprep.subr.mxu0 0.0
    %1494 = vmatpush1.msra.mxu0 0.0
    %1495 = vmatprep.subr.mxu0 0.0
    %1496 = vmatpush1.msra.mxu0 0.0
    %1497 = vmatprep.subr.mxu0 0.0
    %1498 = vmatpush1.msra.mxu0 0.0
    %1499 = vmatprep.subr.mxu0 0.0
    %1500 = vmatpush1.msra.mxu0 0.0
    %1501 = vmatprep.subr.mxu0 0.0
    %1502 = vmatpush1.msra.mxu0 0.0
    %1503 = vmatprep.subr.mxu0 0.0
    %1504 = vmatpush1.msra.mxu0 0.0
    %1505 = vmatprep.subr.mxu0 0.0
    %1506 = vmatpush1.msra.mxu0 0.0
    %1507 = vmatprep.subr.mxu0 0.0
    %1508 = vmatpush1.msra.mxu0 0.0
    %1509 = vmatprep.subr.mxu0 0.0
    %1510 = vmatpush1.msra.mxu0 %v320
    %1511 = vmatprep.subr.mxu0 0.0
    %1512 = vmatpush2.msra.mxu0 0.0
    %1513 = vmatprep.subr.mxu0 0.0
    %1514 = vmatpush2.msra.mxu0 0.0
    %1515 = vmatprep.subr.mxu0 0.0
    %1516 = vmatpush2.msra.mxu0 0.0
    %1517 = vmatprep.subr.mxu0 0.0
    %1518 = vmatpush2.msra.mxu0 0.0
    %1519 = vmatprep.subr.mxu0 0.0
    %1520 = vmatpush2.msra.mxu0 0.0
    %1521 = vmatprep.subr.mxu0 0.0
    %1522 = vmatpush2.msra.mxu0 0.0
    %1523 = vmatprep.subr.mxu0 0.0
    %1524 = vmatpush2.msra.mxu0 0.0
    %1525 = vmatprep.subr.mxu0 0.0
    %1526 = vmatpush2.msra.mxu0 0.0
    %1527 = vmatprep.subr.mxu0 0.0
    %1528 = vmatpush2.msra.mxu0 0.0
    %1529 = vmatprep.subr.mxu0 0.0
    %1530 = vmatpush2.msra.mxu0 0.0
    %1531 = vmatprep.subr.mxu0 0.0
    %1532 = vmatpush2.msra.mxu0 0.0
    %1533 = vmatprep.subr.mxu0 0.0
    %1534 = vmatpush2.msra.mxu0 0.0
    %1535 = vmatprep.subr.mxu0 0.0
    %1536 = vmatpush2.msra.mxu0 0.0
    %1537 = vmatprep.subr.mxu0 0.0
    %1538 = vmatpush2.msra.mxu0 0.0
    %1539 = vmatprep.subr.mxu0 0.0
    %1540 = vmatpush2.msra.mxu0 0.0
    %1541 = vmatprep.subr.mxu0 0.0
    %1542 = vmatpush2.msra.mxu0 0.0
    %1543 = vmatprep.mubr.f32.mxu0 0.0
    %1544 = vmatmul.mubr.f32.gmra.mxu0 %v1474
    %v1545 = vpop.f32.mrf.mxu0
    %v1546 = vadd.f32 0.0, %v1545
    %v1547 = vpop.f32.mrf.mxu0
    %1548 = vmatprep.mubr.f32.mxu0 0.0
    %1549 = vmatmul.mubr.f32.gmra.mxu0 %v1477
    %v1550 = vpop.f32.mrf.mxu0
    %v1551 = vadd.f32 0.0, %v1550
    %v1552 = vpop.f32.mrf.mxu0
    %1553 = vdwg.mxu0
    %v1554 = vadd.f32 %v1135, %v1546
    %v1555 = vadd.f32 %v1140, %v1551
    %1556 = vrot.lane.b32.xlu0 %v310, 104
    %v1557 = vpop.permute.xlu0 %1556
    %1558 = vrot.lane.b32.xlu0 %v310, 72
    %v1559 = vpop.permute.xlu0 %1558
    %v1560 = vsel %vm325, %v1557, 0
    %v1562 = vsel %vm325, %v1559, 0
    %1564 = vmatprep.subr.mxu0 0.0
    %1565 = vmatpush1.xpose.msra.mxu0 0.0
    %1566 = vmatprep.subr.mxu0 0.0
    %1567 = vmatpush1.xpose.msra.mxu0 0.0
    %1568 = vmatprep.subr.mxu0 0.0
    %1569 = vmatpush1.xpose.msra.mxu0 0.0
    %1570 = vmatprep.subr.mxu0 0.0
    %1571 = vmatpush1.xpose.msra.mxu0 0.0
    %1572 = vmatprep.subr.mxu0 0.0
    %1573 = vmatpush1.xpose.msra.mxu0 0.0
    %1574 = vmatprep.subr.mxu0 0.0
    %1575 = vmatpush1.xpose.msra.mxu0 0.0
    %1576 = vmatprep.subr.mxu0 0.0
    %1577 = vmatpush1.xpose.msra.mxu0 0.0
    %1578 = vmatprep.subr.mxu0 0.0
    %1579 = vmatpush1.xpose.msra.mxu0 0.0
    %1580 = vmatprep.subr.mxu0 0.0
    %1581 = vmatpush1.xpose.msra.mxu0 0.0
    %1582 = vmatprep.subr.mxu0 0.0
    %1583 = vmatpush1.xpose.msra.mxu0 0.0
    %1584 = vmatprep.subr.mxu0 0.0
    %1585 = vmatpush1.xpose.msra.mxu0 0.0
    %1586 = vmatprep.subr.mxu0 0.0
    %1587 = vmatpush1.xpose.msra.mxu0 0.0
    %1588 = vmatprep.subr.mxu0 0.0
    %1589 = vmatpush1.xpose.msra.mxu0 0.0
    %1590 = vmatprep.subr.mxu0 0.0
    %1591 = vmatpush1.xpose.msra.mxu0 0.0
    %1592 = vmatprep.subr.mxu0 0.0
    %1593 = vmatpush1.xpose.msra.mxu0 0.0
    %1594 = vmatprep.subr.mxu0 0.0
    %1595 = vmatpush1.xpose.msra.mxu0 %v1562
    %1596 = vmatprep.subr.mxu0 0.0
    %1597 = vmatpush2.xpose.msra.mxu0 0.0
    %1598 = vmatprep.subr.mxu0 0.0
    %1599 = vmatpush2.xpose.msra.mxu0 0.0
    %1600 = vmatprep.subr.mxu0 0.0
    %1601 = vmatpush2.xpose.msra.mxu0 0.0
    %1602 = vmatprep.subr.mxu0 0.0
    %1603 = vmatpush2.xpose.msra.mxu0 0.0
    %1604 = vmatprep.subr.mxu0 0.0
    %1605 = vmatpush2.xpose.msra.mxu0 0.0
    %1606 = vmatprep.subr.mxu0 0.0
    %1607 = vmatpush2.xpose.msra.mxu0 0.0
    %1608 = vmatprep.subr.mxu0 0.0
    %1609 = vmatpush2.xpose.msra.mxu0 0.0
    %1610 = vmatprep.subr.mxu0 0.0
    %1611 = vmatpush2.xpose.msra.mxu0 0.0
    %1612 = vmatprep.subr.mxu0 0.0
    %1613 = vmatpush2.xpose.msra.mxu0 0.0
    %1614 = vmatprep.subr.mxu0 0.0
    %1615 = vmatpush2.xpose.msra.mxu0 0.0
    %1616 = vmatprep.subr.mxu0 0.0
    %1617 = vmatpush2.xpose.msra.mxu0 0.0
    %1618 = vmatprep.subr.mxu0 0.0
    %1619 = vmatpush2.xpose.msra.mxu0 0.0
    %1620 = vmatprep.subr.mxu0 0.0
    %1621 = vmatpush2.xpose.msra.mxu0 0.0
    %1622 = vmatprep.subr.mxu0 0.0
    %1623 = vmatpush2.xpose.msra.mxu0 0.0
    %1624 = vmatprep.subr.mxu0 0.0
    %1625 = vmatpush2.xpose.msra.mxu0 0.0
    %1626 = vmatprep.subr.mxu0 0.0
    %1627 = vmatpush2.xpose.msra.mxu0 0.0
    %1628 = vmatprep.mubr.f32.mxu0 0.0
    %1629 = vmatmul.mubr.f32.gmra.mxu0 %v1560
    %v1630 = vpop.f32.mrf.mxu0
    %v1631 = vadd.f32 0.0, %v1630
    %v1632 = vpop.f32.mrf.mxu0
    %1633 = vdwg.mxu0
    %1634 = vrot.lane.b32.xlu0 %v315, 104
    %v1635 = vpop.permute.xlu0 %1634
    %1636 = vrot.lane.b32.xlu0 %v315, 72
    %v1637 = vpop.permute.xlu0 %1636
    %v1638 = vsel %vm325, %v1635, 0
    %v1640 = vsel %vm325, %v1637, 0
    %1642 = vmatprep.subr.mxu0 0.0
    %1643 = vmatpush1.xpose.msra.mxu0 0.0
    %1644 = vmatprep.subr.mxu0 0.0
    %1645 = vmatpush1.xpose.msra.mxu0 0.0
    %1646 = vmatprep.subr.mxu0 0.0
    %1647 = vmatpush1.xpose.msra.mxu0 0.0
    %1648 = vmatprep.subr.mxu0 0.0
    %1649 = vmatpush1.xpose.msra.mxu0 0.0
    %1650 = vmatprep.subr.mxu0 0.0
    %1651 = vmatpush1.xpose.msra.mxu0 0.0
    %1652 = vmatprep.subr.mxu0 0.0
    %1653 = vmatpush1.xpose.msra.mxu0 0.0
    %1654 = vmatprep.subr.mxu0 0.0
    %1655 = vmatpush1.xpose.msra.mxu0 0.0
    %1656 = vmatprep.subr.mxu0 0.0
    %1657 = vmatpush1.xpose.msra.mxu0 0.0
    %1658 = vmatprep.subr.mxu0 0.0
    %1659 = vmatpush1.xpose.msra.mxu0 0.0
    %1660 = vmatprep.subr.mxu0 0.0
    %1661 = vmatpush1.xpose.msra.mxu0 0.0
    %1662 = vmatprep.subr.mxu0 0.0
    %1663 = vmatpush1.xpose.msra.mxu0 0.0
    %1664 = vmatprep.subr.mxu0 0.0
    %1665 = vmatpush1.xpose.msra.mxu0 0.0
    %1666 = vmatprep.subr.mxu0 0.0
    %1667 = vmatpush1.xpose.msra.mxu0 0.0
    %1668 = vmatprep.subr.mxu0 0.0
    %1669 = vmatpush1.xpose.msra.mxu0 0.0
    %1670 = vmatprep.subr.mxu0 0.0
    %1671 = vmatpush1.xpose.msra.mxu0 0.0
    %1672 = vmatprep.subr.mxu0 0.0
    %1673 = vmatpush1.xpose.msra.mxu0 %v1640
    %1674 = vmatprep.subr.mxu0 0.0
    %1675 = vmatpush2.xpose.msra.mxu0 0.0
    %1676 = vmatprep.subr.mxu0 0.0
    %1677 = vmatpush2.xpose.msra.mxu0 0.0
    %1678 = vmatprep.subr.mxu0 0.0
    %1679 = vmatpush2.xpose.msra.mxu0 0.0
    %1680 = vmatprep.subr.mxu0 0.0
    %1681 = vmatpush2.xpose.msra.mxu0 0.0
    %1682 = vmatprep.subr.mxu0 0.0
    %1683 = vmatpush2.xpose.msra.mxu0 0.0
    %1684 = vmatprep.subr.mxu0 0.0
    %1685 = vmatpush2.xpose.msra.mxu0 0.0
    %1686 = vmatprep.subr.mxu0 0.0
    %1687 = vmatpush2.xpose.msra.mxu0 0.0
    %1688 = vmatprep.subr.mxu0 0.0
    %1689 = vmatpush2.xpose.msra.mxu0 0.0
    %1690 = vmatprep.subr.mxu0 0.0
    %1691 = vmatpush2.xpose.msra.mxu0 0.0
    %1692 = vmatprep.subr.mxu0 0.0
    %1693 = vmatpush2.xpose.msra.mxu0 0.0
    %1694 = vmatprep.subr.mxu0 0.0
    %1695 = vmatpush2.xpose.msra.mxu0 0.0
    %1696 = vmatprep.subr.mxu0 0.0
    %1697 = vmatpush2.xpose.msra.mxu0 0.0
    %1698 = vmatprep.subr.mxu0 0.0
    %1699 = vmatpush2.xpose.msra.mxu0 0.0
    %1700 = vmatprep.subr.mxu0 0.0
    %1701 = vmatpush2.xpose.msra.mxu0 0.0
    %1702 = vmatprep.subr.mxu0 0.0
    %1703 = vmatpush2.xpose.msra.mxu0 0.0
    %1704 = vmatprep.subr.mxu0 0.0
    %1705 = vmatpush2.xpose.msra.mxu0 0.0
    %1706 = vmatprep.mubr.f32.mxu0 0.0
    %1707 = vmatmul.mubr.f32.gmra.mxu0 %v1638
    %v1708 = vpop.f32.mrf.mxu0
    %v1709 = vadd.f32 0.0, %v1708
    %v1710 = vpop.f32.mrf.mxu0
    %1711 = vdwg.mxu0
    %v1712 = vsel %vm325, %v1631, -inf
    %1713 = vmax.xlane.f32.xlu0 %v1712
    %v1714 = vpop.xlane.xlu0 %1713
    %v1715 = vsel %vm325, %v1709, -inf
    %1716 = vmax.xlane.f32.xlu0 %v1715
    %v1717 = vpop.xlane.xlu0 %1716
    %v1718 = vsub.f32 %v1631, %v1714
    %v1719 = vsub.f32 %v1709, %v1717
    %v1720 = vmul.f32 %v1718, 1.442695
    %v1721 = vpow.pop %v1720
    %v1722 = vmul.f32 %v1719, 1.442695
    %v1723 = vpow.pop %v1722
    %v1724 = vsel %vm325, %v1721, 0.0
    %1725 = vadd.xlane.f32.xlu0 %v1724
    %v1726 = vpop.xlane.xlu0 %1725
    %v1727 = vsel %vm325, %v1723, 0.0
    %1728 = vadd.xlane.f32.xlu0 %v1727
    %v1729 = vpop.xlane.xlu0 %1728
    %v1730 = vrcp.pop %v1726
    %v1731 = vrcp.pop %v1729
    %v1732 = vmul.f32 %v1721, %v1730
    %v1733 = vmul.f32 %v1723, %v1731
    %1734 = vrot.lane.b32.xlu0 %v310, 40
    %v1735 = vpop.permute.xlu0 %1734
    %v1738 = vsel %vm325, %v1732, 0
    %1740 = vmatprep.subr.mxu0 0.0
    %1741 = vmatpush1.msra.mxu0 0.0
    %1742 = vmatprep.subr.mxu0 0.0
    %1743 = vmatpush1.msra.mxu0 0.0
    %1744 = vmatprep.subr.mxu0 0.0
    %1745 = vmatpush1.msra.mxu0 0.0
    %1746 = vmatprep.subr.mxu0 0.0
    %1747 = vmatpush1.msra.mxu0 0.0
    %1748 = vmatprep.subr.mxu0 0.0
    %1749 = vmatpush1.msra.mxu0 0.0
    %1750 = vmatprep.subr.mxu0 0.0
    %1751 = vmatpush1.msra.mxu0 0.0
    %1752 = vmatprep.subr.mxu0 0.0
    %1753 = vmatpush1.msra.mxu0 0.0
    %1754 = vmatprep.subr.mxu0 0.0
    %1755 = vmatpush1.msra.mxu0 0.0
    %1756 = vmatprep.subr.mxu0 0.0
    %1757 = vmatpush1.msra.mxu0 0.0
    %1758 = vmatprep.subr.mxu0 0.0
    %1759 = vmatpush1.msra.mxu0 0.0
    %1760 = vmatprep.subr.mxu0 0.0
    %1761 = vmatpush1.msra.mxu0 0.0
    %1762 = vmatprep.subr.mxu0 0.0
    %1763 = vmatpush1.msra.mxu0 0.0
    %1764 = vmatprep.subr.mxu0 0.0
    %1765 = vmatpush1.msra.mxu0 0.0
    %1766 = vmatprep.subr.mxu0 0.0
    %1767 = vmatpush1.msra.mxu0 0.0
    %1768 = vmatprep.subr.mxu0 0.0
    %1769 = vmatpush1.msra.mxu0 0.0
    %1770 = vmatprep.subr.mxu0 0.0
    %1771 = vmatpush1.msra.mxu0 %v1735
    %1772 = vmatprep.subr.mxu0 0.0
    %1773 = vmatpush2.msra.mxu0 0.0
    %1774 = vmatprep.subr.mxu0 0.0
    %1775 = vmatpush2.msra.mxu0 0.0
    %1776 = vmatprep.subr.mxu0 0.0
    %1777 = vmatpush2.msra.mxu0 0.0
    %1778 = vmatprep.subr.mxu0 0.0
    %1779 = vmatpush2.msra.mxu0 0.0
    %1780 = vmatprep.subr.mxu0 0.0
    %1781 = vmatpush2.msra.mxu0 0.0
    %1782 = vmatprep.subr.mxu0 0.0
    %1783 = vmatpush2.msra.mxu0 0.0
    %1784 = vmatprep.subr.mxu0 0.0
    %1785 = vmatpush2.msra.mxu0 0.0
    %1786 = vmatprep.subr.mxu0 0.0
    %1787 = vmatpush2.msra.mxu0 0.0
    %1788 = vmatprep.subr.mxu0 0.0
    %1789 = vmatpush2.msra.mxu0 0.0
    %1790 = vmatprep.subr.mxu0 0.0
    %1791 = vmatpush2.msra.mxu0 0.0
    %1792 = vmatprep.subr.mxu0 0.0
    %1793 = vmatpush2.msra.mxu0 0.0
    %1794 = vmatprep.subr.mxu0 0.0
    %1795 = vmatpush2.msra.mxu0 0.0
    %1796 = vmatprep.subr.mxu0 0.0
    %1797 = vmatpush2.msra.mxu0 0.0
    %1798 = vmatprep.subr.mxu0 0.0
    %1799 = vmatpush2.msra.mxu0 0.0
    %1800 = vmatprep.subr.mxu0 0.0
    %1801 = vmatpush2.msra.mxu0 0.0
    %1802 = vmatprep.subr.mxu0 0.0
    %1803 = vmatpush2.msra.mxu0 0.0
    %1804 = vmatprep.mubr.f32.mxu0 0.0
    %1805 = vmatmul.mubr.f32.gmra.mxu0 %v1738
    %v1806 = vpop.f32.mrf.mxu0
    %v1807 = vadd.f32 0.0, %v1806
    %v1808 = vpop.f32.mrf.mxu0
    %1809 = vdwg.mxu0
    %1810 = vrot.lane.b32.xlu0 %v315, 40
    %v1811 = vpop.permute.xlu0 %1810
    %v1814 = vsel %vm325, %v1733, 0
    %1816 = vmatprep.subr.mxu0 0.0
    %1817 = vmatpush1.msra.mxu0 0.0
    %1818 = vmatprep.subr.mxu0 0.0
    %1819 = vmatpush1.msra.mxu0 0.0
    %1820 = vmatprep.subr.mxu0 0.0
    %1821 = vmatpush1.msra.mxu0 0.0
    %1822 = vmatprep.subr.mxu0 0.0
    %1823 = vmatpush1.msra.mxu0 0.0
    %1824 = vmatprep.subr.mxu0 0.0
    %1825 = vmatpush1.msra.mxu0 0.0
    %1826 = vmatprep.subr.mxu0 0.0
    %1827 = vmatpush1.msra.mxu0 0.0
    %1828 = vmatprep.subr.mxu0 0.0
    %1829 = vmatpush1.msra.mxu0 0.0
    %1830 = vmatprep.subr.mxu0 0.0
    %1831 = vmatpush1.msra.mxu0 0.0
    %1832 = vmatprep.subr.mxu0 0.0
    %1833 = vmatpush1.msra.mxu0 0.0
    %1834 = vmatprep.subr.mxu0 0.0
    %1835 = vmatpush1.msra.mxu0 0.0
    %1836 = vmatprep.subr.mxu0 0.0
    %1837 = vmatpush1.msra.mxu0 0.0
    %1838 = vmatprep.subr.mxu0 0.0
    %1839 = vmatpush1.msra.mxu0 0.0
    %1840 = vmatprep.subr.mxu0 0.0
    %1841 = vmatpush1.msra.mxu0 0.0
    %1842 = vmatprep.subr.mxu0 0.0
    %1843 = vmatpush1.msra.mxu0 0.0
    %1844 = vmatprep.subr.mxu0 0.0
    %1845 = vmatpush1.msra.mxu0 0.0
    %1846 = vmatprep.subr.mxu0 0.0
    %1847 = vmatpush1.msra.mxu0 %v1811
    %1848 = vmatprep.subr.mxu0 0.0
    %1849 = vmatpush2.msra.mxu0 0.0
    %1850 = vmatprep.subr.mxu0 0.0
    %1851 = vmatpush2.msra.mxu0 0.0
    %1852 = vmatprep.subr.mxu0 0.0
    %1853 = vmatpush2.msra.mxu0 0.0
    %1854 = vmatprep.subr.mxu0 0.0
    %1855 = vmatpush2.msra.mxu0 0.0
    %1856 = vmatprep.subr.mxu0 0.0
    %1857 = vmatpush2.msra.mxu0 0.0
    %1858 = vmatprep.subr.mxu0 0.0
    %1859 = vmatpush2.msra.mxu0 0.0
    %1860 = vmatprep.subr.mxu0 0.0
    %1861 = vmatpush2.msra.mxu0 0.0
    %1862 = vmatprep.subr.mxu0 0.0
    %1863 = vmatpush2.msra.mxu0 0.0
    %1864 = vmatprep.subr.mxu0 0.0
    %1865 = vmatpush2.msra.mxu0 0.0
    %1866 = vmatprep.subr.mxu0 0.0
    %1867 = vmatpush2.msra.mxu0 0.0
    %1868 = vmatprep.subr.mxu0 0.0
    %1869 = vmatpush2.msra.mxu0 0.0
    %1870 = vmatprep.subr.mxu0 0.0
    %1871 = vmatpush2.msra.mxu0 0.0
    %1872 = vmatprep.subr.mxu0 0.0
    %1873 = vmatpush2.msra.mxu0 0.0
    %1874 = vmatprep.subr.mxu0 0.0
    %1875 = vmatpush2.msra.mxu0 0.0
    %1876 = vmatprep.subr.mxu0 0.0
    %1877 = vmatpush2.msra.mxu0 0.0
    %1878 = vmatprep.subr.mxu0 0.0
    %1879 = vmatpush2.msra.mxu0 0.0
    %1880 = vmatprep.mubr.f32.mxu0 0.0
    %1881 = vmatmul.mubr.f32.gmra.mxu0 %v1814
    %v1882 = vpop.f32.mrf.mxu0
    %v1883 = vadd.f32 0.0, %v1882
    %v1884 = vpop.f32.mrf.mxu0
    %1885 = vdwg.mxu0
    %v1887 = vsel %vm325, %v1807, 0
    %v1890 = vsel %vm325, %v1883, 0
    %1892 = vmatprep.subr.mxu0 0.0
    %1893 = vmatpush1.msra.mxu0 0.0
    %1894 = vmatprep.subr.mxu0 0.0
    %1895 = vmatpush1.msra.mxu0 0.0
    %1896 = vmatprep.subr.mxu0 0.0
    %1897 = vmatpush1.msra.mxu0 0.0
    %1898 = vmatprep.subr.mxu0 0.0
    %1899 = vmatpush1.msra.mxu0 0.0
    %1900 = vmatprep.subr.mxu0 0.0
    %1901 = vmatpush1.msra.mxu0 0.0
    %1902 = vmatprep.subr.mxu0 0.0
    %1903 = vmatpush1.msra.mxu0 0.0
    %1904 = vmatprep.subr.mxu0 0.0
    %1905 = vmatpush1.msra.mxu0 0.0
    %1906 = vmatprep.subr.mxu0 0.0
    %1907 = vmatpush1.msra.mxu0 0.0
    %1908 = vmatprep.subr.mxu0 0.0
    %1909 = vmatpush1.msra.mxu0 0.0
    %1910 = vmatprep.subr.mxu0 0.0
    %1911 = vmatpush1.msra.mxu0 0.0
    %1912 = vmatprep.subr.mxu0 0.0
    %1913 = vmatpush1.msra.mxu0 0.0
    %1914 = vmatprep.subr.mxu0 0.0
    %1915 = vmatpush1.msra.mxu0 0.0
    %1916 = vmatprep.subr.mxu0 0.0
    %1917 = vmatpush1.msra.mxu0 0.0
    %1918 = vmatprep.subr.mxu0 0.0
    %1919 = vmatpush1.msra.mxu0 0.0
    %1920 = vmatprep.subr.mxu0 0.0
    %1921 = vmatpush1.msra.mxu0 0.0
    %1922 = vmatprep.subr.mxu0 0.0
    %1923 = vmatpush1.msra.mxu0 %v321
    %1924 = vmatprep.subr.mxu0 0.0
    %1925 = vmatpush2.msra.mxu0 0.0
    %1926 = vmatprep.subr.mxu0 0.0
    %1927 = vmatpush2.msra.mxu0 0.0
    %1928 = vmatprep.subr.mxu0 0.0
    %1929 = vmatpush2.msra.mxu0 0.0
    %1930 = vmatprep.subr.mxu0 0.0
    %1931 = vmatpush2.msra.mxu0 0.0
    %1932 = vmatprep.subr.mxu0 0.0
    %1933 = vmatpush2.msra.mxu0 0.0
    %1934 = vmatprep.subr.mxu0 0.0
    %1935 = vmatpush2.msra.mxu0 0.0
    %1936 = vmatprep.subr.mxu0 0.0
    %1937 = vmatpush2.msra.mxu0 0.0
    %1938 = vmatprep.subr.mxu0 0.0
    %1939 = vmatpush2.msra.mxu0 0.0
    %1940 = vmatprep.subr.mxu0 0.0
    %1941 = vmatpush2.msra.mxu0 0.0
    %1942 = vmatprep.subr.mxu0 0.0
    %1943 = vmatpush2.msra.mxu0 0.0
    %1944 = vmatprep.subr.mxu0 0.0
    %1945 = vmatpush2.msra.mxu0 0.0
    %1946 = vmatprep.subr.mxu0 0.0
    %1947 = vmatpush2.msra.mxu0 0.0
    %1948 = vmatprep.subr.mxu0 0.0
    %1949 = vmatpush2.msra.mxu0 0.0
    %1950 = vmatprep.subr.mxu0 0.0
    %1951 = vmatpush2.msra.mxu0 0.0
    %1952 = vmatprep.subr.mxu0 0.0
    %1953 = vmatpush2.msra.mxu0 0.0
    %1954 = vmatprep.subr.mxu0 0.0
    %1955 = vmatpush2.msra.mxu0 0.0
    %1956 = vmatprep.mubr.f32.mxu0 0.0
    %1957 = vmatmul.mubr.f32.gmra.mxu0 %v1887
    %v1958 = vpop.f32.mrf.mxu0
    %v1959 = vadd.f32 0.0, %v1958
    %v1960 = vpop.f32.mrf.mxu0
    %1961 = vmatprep.mubr.f32.mxu0 0.0
    %1962 = vmatmul.mubr.f32.gmra.mxu0 %v1890
    %v1963 = vpop.f32.mrf.mxu0
    %v1964 = vadd.f32 0.0, %v1963
    %v1965 = vpop.f32.mrf.mxu0
    %1966 = vdwg.mxu0
    %v1967 = vadd.f32 %v1554, %v1959
    %v1968 = vadd.f32 %v1555, %v1964
    %v1969 = vadd.f32 %v178, %v1967
    %v1970 = vadd.f32 %v179, %v1968
    %v1971 = vld [vmem:[%s8] sm:$0x1]
    %v1973 = vlaneseq
    %v1974 = vshrl.u32 %v1973, 7
    %v1975 = vsub.s32 0, %v1974
    %v1976 = vrot.slane %v1971, %v1975
    %v1978 = vadd.f32 %v1969, %v1976
    %v1979 = vadd.f32 %v1970, %v1976
    %v1980 = vld [vmem:[%s9] sm:$0x1]
    %v1981 = vld [vmem:[%s10] sm:$0x1]
    %v1982 = vsel %vm182, %v1978, 0.0
    %1983 = vadd.xlane.f32.xlu0 %v1982
    %v1984 = vpop.xlane.xlu0 %1983
    %v1985 = vsel %vm182, %v1979, 0.0
    %1986 = vadd.xlane.f32.xlu0 %v1985
    %v1987 = vpop.xlane.xlu0 %1986
    %v1988 = vmul.f32 %v1984, %v189
    %v1989 = vmul.f32 %v1987, %v189
    %v1990 = vsub.f32 %v1978, %v1988
    %v1991 = vsub.f32 %v1979, %v1989
    %v1992 = vmul.f32 %v1990, %v1990
    %v1993 = vmul.f32 %v1991, %v1991
    %v1994 = vsel %vm182, %v1992, 0.0
    %1995 = vadd.xlane.f32.xlu0 %v1994
    %v1996 = vpop.xlane.xlu0 %1995
    %v1997 = vsel %vm182, %v1993, 0.0
    %1998 = vadd.xlane.f32.xlu0 %v1997
    %v1999 = vpop.xlane.xlu0 %1998
    %v2000 = vmul.f32 %v1996, %v189
    %v2001 = vmul.f32 %v1999, %v189
    %v2002 = vadd.f32 %v2000, 1e-06
    %v2003 = vadd.f32 %v2001, 1e-06
    %v2004 = vrsqrt.pop %v2002
    %v2005 = vrsqrt.pop %v2003
    %v2006 = vmul.f32 %v1990, %v2004
    %v2007 = vmul.f32 %v1991, %v2005
    %v2009 = vlaneseq
    %v2010 = vshrl.u32 %v2009, 7
    %v2011 = vsub.s32 0, %v2010
    %v2012 = vrot.slane %v1980, %v2011
    %v2014 = vmul.f32 %v2006, %v2012
    %v2015 = vmul.f32 %v2007, %v2012
    %v2017 = vlaneseq
    %v2018 = vshrl.u32 %v2017, 7
    %v2019 = vsub.s32 0, %v2018
    %v2020 = vrot.slane %v1981, %v2019
    %v2022 = vadd.f32 %v2014, %v2020
    %v2023 = vadd.f32 %v2015, %v2020
    %v2024 = vld [vmem:[#allocation5] sm:$0xff]
    %v2025 = vld [vmem:[#allocation5 + $0x8] sm:$0xff]
    %v2026 = vld [vmem:[#allocation5 + $0x10] sm:$0xff]
    %v2027 = vld [vmem:[#allocation5 + $0x18] sm:$0xff]
    %v2028 = vld [vmem:[%s12] sm:$0x1]
    %v2030 = vlaneseq
    %v2031 = vshrl.u32 %v2030, 7
    %v2032 = vsub.s32 0, %v2031
    %v2033 = vrot.slane %v2028, %v2032
    %v2036 = vsel %vm182, %v2022, 0
    %v2039 = vsel %vm182, %v2023, 0
    %2041 = vmatprep.subr.mxu0 0.0
    %2042 = vmatpush1.msra.mxu0 0.0
    %2043 = vmatprep.subr.mxu0 0.0
    %2044 = vmatpush1.msra.mxu0 0.0
    %2045 = vmatprep.subr.mxu0 0.0
    %2046 = vmatpush1.msra.mxu0 0.0
    %2047 = vmatprep.subr.mxu0 0.0
    %2048 = vmatpush1.msra.mxu0 0.0
    %2049 = vmatprep.subr.mxu0 0.0
    %2050 = vmatpush1.msra.mxu0 0.0
    %2051 = vmatprep.subr.mxu0 0.0
    %2052 = vmatpush1.msra.mxu0 0.0
    %2053 = vmatprep.subr.mxu0 0.0
    %2054 = vmatpush1.msra.mxu0 0.0
    %2055 = vmatprep.subr.mxu0 0.0
    %2056 = vmatpush1.msra.mxu0 0.0
    %2057 = vmatprep.subr.mxu0 0.0
    %2058 = vmatpush1.msra.mxu0 0.0
    %2059 = vmatprep.subr.mxu0 0.0
    %2060 = vmatpush1.msra.mxu0 0.0
    %2061 = vmatprep.subr.mxu0 0.0
    %2062 = vmatpush1.msra.mxu0 0.0
    %2063 = vmatprep.subr.mxu0 0.0
    %2064 = vmatpush1.msra.mxu0 0.0
    %2065 = vmatprep.subr.mxu0 0.0
    %2066 = vmatpush1.msra.mxu0 %v2027
    %2067 = vmatprep.subr.mxu0 0.0
    %2068 = vmatpush1.msra.mxu0 %v2026
    %2069 = vmatprep.subr.mxu0 0.0
    %2070 = vmatpush1.msra.mxu0 %v2025
    %2071 = vmatprep.subr.mxu0 0.0
    %2072 = vmatpush1.msra.mxu0 %v2024
    %2073 = vmatprep.subr.mxu0 0.0
    %2074 = vmatpush2.msra.mxu0 0.0
    %2075 = vmatprep.subr.mxu0 0.0
    %2076 = vmatpush2.msra.mxu0 0.0
    %2077 = vmatprep.subr.mxu0 0.0
    %2078 = vmatpush2.msra.mxu0 0.0
    %2079 = vmatprep.subr.mxu0 0.0
    %2080 = vmatpush2.msra.mxu0 0.0
    %2081 = vmatprep.subr.mxu0 0.0
    %2082 = vmatpush2.msra.mxu0 0.0
    %2083 = vmatprep.subr.mxu0 0.0
    %2084 = vmatpush2.msra.mxu0 0.0
    %2085 = vmatprep.subr.mxu0 0.0
    %2086 = vmatpush2.msra.mxu0 0.0
    %2087 = vmatprep.subr.mxu0 0.0
    %2088 = vmatpush2.msra.mxu0 0.0
    %2089 = vmatprep.subr.mxu0 0.0
    %2090 = vmatpush2.msra.mxu0 0.0
    %2091 = vmatprep.subr.mxu0 0.0
    %2092 = vmatpush2.msra.mxu0 0.0
    %2093 = vmatprep.subr.mxu0 0.0
    %2094 = vmatpush2.msra.mxu0 0.0
    %2095 = vmatprep.subr.mxu0 0.0
    %2096 = vmatpush2.msra.mxu0 0.0
    %2097 = vmatprep.subr.mxu0 0.0
    %2098 = vmatpush2.msra.mxu0 0.0
    %2099 = vmatprep.subr.mxu0 0.0
    %2100 = vmatpush2.msra.mxu0 0.0
    %2101 = vmatprep.subr.mxu0 0.0
    %2102 = vmatpush2.msra.mxu0 0.0
    %2103 = vmatprep.subr.mxu0 0.0
    %2104 = vmatpush2.msra.mxu0 0.0
    %2105 = vmatprep.mubr.f32.mxu0 0.0
    %2106 = vmatmul.mubr.f32.gmra.mxu0 %v2036
    %v2107 = vpop.f32.mrf.mxu0
    %v2108 = vadd.f32 %v2033, %v2107
    %v2109 = vpop.f32.mrf.mxu0
    %2110 = vmatprep.mubr.f32.mxu0 0.0
    %2111 = vmatmul.mubr.f32.gmra.mxu0 %v2039
    %v2112 = vpop.f32.mrf.mxu0
    %v2113 = vadd.f32 %v2033, %v2112
    %v2114 = vpop.f32.mrf.mxu0
    %2115 = vdwg.mxu0
    %v2116 = vmul.f32 %v2108, 0.5
    %v2117 = vmul.f32 %v2113, 0.5
    %v2118 = vmul.f32 %v2108, 0.044715
    %v2119 = vmul.f32 %v2113, 0.044715
    %v2120 = vmul.f32 %v2118, %v2108
    %v2121 = vmul.f32 %v2119, %v2113
    %v2122 = vmul.f32 %v2120, %v2108
    %v2123 = vmul.f32 %v2121, %v2113
    %v2124 = vadd.f32 %v2108, %v2122
    %v2125 = vadd.f32 %v2113, %v2123
    %v2126 = vmul.f32 %v2124, 0.7978846
    %v2127 = vmul.f32 %v2125, 0.7978846
    %v2128 = vtanh.pop %v2126
    %v2129 = vtanh.pop %v2127
    %v2130 = vadd.f32 %v2128, 1.0
    %v2131 = vadd.f32 %v2129, 1.0
    %v2132 = vmul.f32 %v2116, %v2130
    %v2133 = vmul.f32 %v2117, %v2131
    %v2134 = vld [vmem:[%s13] sm:$0xff]
    %v2135 = vld [vmem:[%s13 + $0x8] sm:$0xff]
    %v2136 = vld [vmem:[%s13 + $0x10] sm:$0xff]
    %v2137 = vld [vmem:[%s13 + $0x18] sm:$0xff]
    %v2138 = vld [vmem:[%s13 + $0x20] sm:$0xff]
    %v2139 = vld [vmem:[%s13 + $0x28] sm:$0xff]
    %v2140 = vld [vmem:[%s13 + $0x30] sm:$0xff]
    %v2141 = vld [vmem:[%s13 + $0x38] sm:$0xff]
    %v2142 = vld [vmem:[%s13 + $0x40] sm:$0xff]
    %v2143 = vld [vmem:[%s13 + $0x48] sm:$0xff]
    %v2144 = vld [vmem:[%s13 + $0x50] sm:$0xff]
    %v2145 = vld [vmem:[%s13 + $0x58] sm:$0xff]
    %v2146 = vld [vmem:[%s13 + $0x60] sm:$0xff]
    %v2147 = vld [vmem:[%s13 + $0x68] sm:$0xff]
    %v2148 = vld [vmem:[%s13 + $0x70] sm:$0xff]
    %v2149 = vld [vmem:[%s13 + $0x78] sm:$0xff]
    %v2150 = vld [vmem:[%s14] sm:$0x1]
    %v2152 = vlaneseq
    %v2153 = vshrl.u32 %v2152, 7
    %v2154 = vsub.s32 0, %v2153
    %v2155 = vrot.slane %v2150, %v2154
    %2157 = vmatprep.subr.mxu0 0.0
    %2158 = vmatpush1.msra.mxu0 %v2149
    %2159 = vmatprep.subr.mxu0 0.0
    %2160 = vmatpush1.msra.mxu0 %v2148
    %2161 = vmatprep.subr.mxu0 0.0
    %2162 = vmatpush1.msra.mxu0 %v2147
    %2163 = vmatprep.subr.mxu0 0.0
    %2164 = vmatpush1.msra.mxu0 %v2146
    %2165 = vmatprep.subr.mxu0 0.0
    %2166 = vmatpush1.msra.mxu0 %v2145
    %2167 = vmatprep.subr.mxu0 0.0
    %2168 = vmatpush1.msra.mxu0 %v2144
    %2169 = vmatprep.subr.mxu0 0.0
    %2170 = vmatpush1.msra.mxu0 %v2143
    %2171 = vmatprep.subr.mxu0 0.0
    %2172 = vmatpush1.msra.mxu0 %v2142
    %2173 = vmatprep.subr.mxu0 0.0
    %2174 = vmatpush1.msra.mxu0 %v2141
    %2175 = vmatprep.subr.mxu0 0.0
    %2176 = vmatpush1.msra.mxu0 %v2140
    %2177 = vmatprep.subr.mxu0 0.0
    %2178 = vmatpush1.msra.mxu0 %v2139
    %2179 = vmatprep.subr.mxu0 0.0
    %2180 = vmatpush1.msra.mxu0 %v2138
    %2181 = vmatprep.subr.mxu0 0.0
    %2182 = vmatpush1.msra.mxu0 %v2137
    %2183 = vmatprep.subr.mxu0 0.0
    %2184 = vmatpush1.msra.mxu0 %v2136
    %2185 = vmatprep.subr.mxu0 0.0
    %2186 = vmatpush1.msra.mxu0 %v2135
    %2187 = vmatprep.subr.mxu0 0.0
    %2188 = vmatpush1.msra.mxu0 %v2134
    %2189 = vmatprep.subr.mxu0 0.0
    %2190 = vmatpush2.msra.mxu0 0.0
    %2191 = vmatprep.subr.mxu0 0.0
    %2192 = vmatpush2.msra.mxu0 0.0
    %2193 = vmatprep.subr.mxu0 0.0
    %2194 = vmatpush2.msra.mxu0 0.0
    %2195 = vmatprep.subr.mxu0 0.0
    %2196 = vmatpush2.msra.mxu0 0.0
    %2197 = vmatprep.subr.mxu0 0.0
    %2198 = vmatpush2.msra.mxu0 0.0
    %2199 = vmatprep.subr.mxu0 0.0
    %2200 = vmatpush2.msra.mxu0 0.0
    %2201 = vmatprep.subr.mxu0 0.0
    %2202 = vmatpush2.msra.mxu0 0.0
    %2203 = vmatprep.subr.mxu0 0.0
    %2204 = vmatpush2.msra.mxu0 0.0
    %2205 = vmatprep.subr.mxu0 0.0
    %2206 = vmatpush2.msra.mxu0 0.0
    %2207 = vmatprep.subr.mxu0 0.0
    %2208 = vmatpush2.msra.mxu0 0.0
    %2209 = vmatprep.subr.mxu0 0.0
    %2210 = vmatpush2.msra.mxu0 0.0
    %2211 = vmatprep.subr.mxu0 0.0
    %2212 = vmatpush2.msra.mxu0 0.0
    %2213 = vmatprep.subr.mxu0 0.0
    %2214 = vmatpush2.msra.mxu0 0.0
    %2215 = vmatprep.subr.mxu0 0.0
    %2216 = vmatpush2.msra.mxu0 0.0
    %2217 = vmatprep.subr.mxu0 0.0
    %2218 = vmatpush2.msra.mxu0 0.0
    %2219 = vmatprep.subr.mxu0 0.0
    %2220 = vmatpush2.msra.mxu0 0.0
    %2221 = vmatprep.mubr.f32.mxu0 0.0
    %2222 = vmatmul.mubr.f32.gmra.mxu0 %v2132
    %v2223 = vpop.f32.mrf.mxu0
    %v2224 = vadd.f32 %v2155, %v2223
    %v2225 = vpop.f32.mrf.mxu0
    %2226 = vmatprep.mubr.f32.mxu0 0.0
    %2227 = vmatmul.mubr.f32.gmra.mxu0 %v2133
    %v2228 = vpop.f32.mrf.mxu0
    %v2229 = vadd.f32 %v2155, %v2228
    %v2230 = vpop.f32.mrf.mxu0
    %2231 = vdwg.mxu0
    %v2232 = vadd.f32 %v1978, %v2224
    %v2233 = vadd.f32 %v1979, %v2229
    %s2234 = scalar_lea.vmem %s3, 1
    %v2235 = vld [vmem:[%s2234] sm:$0x1]
    %s2236 = scalar_lea.vmem %s4, 1
    %v2237 = vld [vmem:[%s2236] sm:$0x1]
    %v2238 = vsel %vm182, %v2232, 0.0
    %2239 = vadd.xlane.f32.xlu0 %v2238
    %v2240 = vpop.xlane.xlu0 %2239
    %v2241 = vsel %vm182, %v2233, 0.0
    %2242 = vadd.xlane.f32.xlu0 %v2241
    %v2243 = vpop.xlane.xlu0 %2242
    %v2244 = vmul.f32 %v2240, %v189
    %v2245 = vmul.f32 %v2243, %v189
    %v2246 = vsub.f32 %v2232, %v2244
    %v2247 = vsub.f32 %v2233, %v2245
    %v2248 = vmul.f32 %v2246, %v2246
    %v2249 = vmul.f32 %v2247, %v2247
    %v2250 = vsel %vm182, %v2248, 0.0
    %2251 = vadd.xlane.f32.xlu0 %v2250
    %v2252 = vpop.xlane.xlu0 %2251
    %v2253 = vsel %vm182, %v2249, 0.0
    %2254 = vadd.xlane.f32.xlu0 %v2253
    %v2255 = vpop.xlane.xlu0 %2254
    %v2256 = vmul.f32 %v2252, %v189
    %v2257 = vmul.f32 %v2255, %v189
    %v2258 = vadd.f32 %v2256, 1e-06
    %v2259 = vadd.f32 %v2257, 1e-06
    %v2260 = vrsqrt.pop %v2258
    %v2261 = vrsqrt.pop %v2259
    %v2262 = vmul.f32 %v2246, %v2260
    %v2263 = vmul.f32 %v2247, %v2261
    %v2265 = vlaneseq
    %v2266 = vshrl.u32 %v2265, 7
    %v2267 = vsub.s32 0, %v2266
    %v2268 = vrot.slane %v2235, %v2267
    %v2270 = vmul.f32 %v2262, %v2268
    %v2271 = vmul.f32 %v2263, %v2268
    %v2273 = vlaneseq
    %v2274 = vshrl.u32 %v2273, 7
    %v2275 = vsub.s32 0, %v2274
    %v2276 = vrot.slane %v2237, %v2275
    %v2278 = vadd.f32 %v2270, %v2276
    %v2279 = vadd.f32 %v2271, %v2276
    %s2280 = scalar_lea.vmem %s5, 32
    %v2281 = vld [vmem:[%s2280] sm:$0xff]
    %v2282 = vld [vmem:[%s2280 + $0x8] sm:$0xff]
    %v2283 = vld [vmem:[%s2280 + $0x10] sm:$0xff]
    %v2284 = vld [vmem:[%s2280 + $0x18] sm:$0xff]
    %s2285 = scalar_lea.vmem %s6, 1
    %v2286 = vld [vmem:[%s2285] sm:$0x1]
    %v2288 = vlaneseq
    %v2289 = vshrl.u32 %v2288, 7
    %v2290 = vsub.s32 0, %v2289
    %v2291 = vrot.slane %v2286, %v2290
    %v2294 = vsel %vm182, %v2278, 0
    %v2297 = vsel %vm182, %v2279, 0
    %2299 = vmatprep.subr.mxu0 0.0
    %2300 = vmatpush1.msra.mxu0 0.0
    %2301 = vmatprep.subr.mxu0 0.0
    %2302 = vmatpush1.msra.mxu0 0.0
    %2303 = vmatprep.subr.mxu0 0.0
    %2304 = vmatpush1.msra.mxu0 0.0
    %2305 = vmatprep.subr.mxu0 0.0
    %2306 = vmatpush1.msra.mxu0 0.0
    %2307 = vmatprep.subr.mxu0 0.0
    %2308 = vmatpush1.msra.mxu0 0.0
    %2309 = vmatprep.subr.mxu0 0.0
    %2310 = vmatpush1.msra.mxu0 0.0
    %2311 = vmatprep.subr.mxu0 0.0
    %2312 = vmatpush1.msra.mxu0 0.0
    %2313 = vmatprep.subr.mxu0 0.0
    %2314 = vmatpush1.msra.mxu0 0.0
    %2315 = vmatprep.subr.mxu0 0.0
    %2316 = vmatpush1.msra.mxu0 0.0
    %2317 = vmatprep.subr.mxu0 0.0
    %2318 = vmatpush1.msra.mxu0 0.0
    %2319 = vmatprep.subr.mxu0 0.0
    %2320 = vmatpush1.msra.mxu0 0.0
    %2321 = vmatprep.subr.mxu0 0.0
    %2322 = vmatpush1.msra.mxu0 0.0
    %2323 = vmatprep.subr.mxu0 0.0
    %2324 = vmatpush1.msra.mxu0 %v2284
    %2325 = vmatprep.subr.mxu0 0.0
    %2326 = vmatpush1.msra.mxu0 %v2283
    %2327 = vmatprep.subr.mxu0 0.0
    %2328 = vmatpush1.msra.mxu0 %v2282
    %2329 = vmatprep.subr.mxu0 0.0
    %2330 = vmatpush1.msra.mxu0 %v2281
    %2331 = vmatprep.subr.mxu0 0.0
    %2332 = vmatpush2.msra.mxu0 0.0
    %2333 = vmatprep.subr.mxu0 0.0
    %2334 = vmatpush2.msra.mxu0 0.0
    %2335 = vmatprep.subr.mxu0 0.0
    %2336 = vmatpush2.msra.mxu0 0.0
    %2337 = vmatprep.subr.mxu0 0.0
    %2338 = vmatpush2.msra.mxu0 0.0
    %2339 = vmatprep.subr.mxu0 0.0
    %2340 = vmatpush2.msra.mxu0 0.0
    %2341 = vmatprep.subr.mxu0 0.0
    %2342 = vmatpush2.msra.mxu0 0.0
    %2343 = vmatprep.subr.mxu0 0.0
    %2344 = vmatpush2.msra.mxu0 0.0
    %2345 = vmatprep.subr.mxu0 0.0
    %2346 = vmatpush2.msra.mxu0 0.0
    %2347 = vmatprep.subr.mxu0 0.0
    %2348 = vmatpush2.msra.mxu0 0.0
    %2349 = vmatprep.subr.mxu0 0.0
    %2350 = vmatpush2.msra.mxu0 0.0
    %2351 = vmatprep.subr.mxu0 0.0
    %2352 = vmatpush2.msra.mxu0 0.0
    %2353 = vmatprep.subr.mxu0 0.0
    %2354 = vmatpush2.msra.mxu0 0.0
    %2355 = vmatprep.subr.mxu0 0.0
    %2356 = vmatpush2.msra.mxu0 0.0
    %2357 = vmatprep.subr.mxu0 0.0
    %2358 = vmatpush2.msra.mxu0 0.0
    %2359 = vmatprep.subr.mxu0 0.0
    %2360 = vmatpush2.msra.mxu0 0.0
    %2361 = vmatprep.subr.mxu0 0.0
    %2362 = vmatpush2.msra.mxu0 0.0
    %2363 = vmatprep.mubr.f32.mxu0 0.0
    %2364 = vmatmul.mubr.f32.gmra.mxu0 %v2294
    %v2365 = vpop.f32.mrf.mxu0
    %v2366 = vadd.f32 %v2291, %v2365
    %v2367 = vpop.f32.mrf.mxu0
    %2368 = vmatprep.mubr.f32.mxu0 0.0
    %2369 = vmatmul.mubr.f32.gmra.mxu0 %v2297
    %v2370 = vpop.f32.mrf.mxu0
    %v2371 = vadd.f32 %v2291, %v2370
    %v2372 = vpop.f32.mrf.mxu0
    %2373 = vdwg.mxu0
    %s2374 = scalar_lea.vmem [#allocation2], 32
    %v2375 = vld [vmem:[%s2374] sm:$0xff]
    %v2376 = vld [vmem:[%s2374 + $0x8] sm:$0xff]
    %v2377 = vld [vmem:[%s2374 + $0x10] sm:$0xff]
    %v2378 = vld [vmem:[%s2374 + $0x18] sm:$0xff]
    %2380 = vrot.lane.b32.xlu0 %v2366, 96
    %v2381 = vpop.permute.xlu0 %2380
    %v2382 = vsel %vm325, %v2366, 0
    %v2384 = vsel %vm325, %v2381, 0
    %2386 = vmatprep.subr.mxu0 0.0
    %2387 = vmatpush1.xpose.msra.mxu0 0.0
    %2388 = vmatprep.subr.mxu0 0.0
    %2389 = vmatpush1.xpose.msra.mxu0 0.0
    %2390 = vmatprep.subr.mxu0 0.0
    %2391 = vmatpush1.xpose.msra.mxu0 0.0
    %2392 = vmatprep.subr.mxu0 0.0
    %2393 = vmatpush1.xpose.msra.mxu0 0.0
    %2394 = vmatprep.subr.mxu0 0.0
    %2395 = vmatpush1.xpose.msra.mxu0 0.0
    %2396 = vmatprep.subr.mxu0 0.0
    %2397 = vmatpush1.xpose.msra.mxu0 0.0
    %2398 = vmatprep.subr.mxu0 0.0
    %2399 = vmatpush1.xpose.msra.mxu0 0.0
    %2400 = vmatprep.subr.mxu0 0.0
    %2401 = vmatpush1.xpose.msra.mxu0 0.0
    %2402 = vmatprep.subr.mxu0 0.0
    %2403 = vmatpush1.xpose.msra.mxu0 0.0
    %2404 = vmatprep.subr.mxu0 0.0
    %2405 = vmatpush1.xpose.msra.mxu0 0.0
    %2406 = vmatprep.subr.mxu0 0.0
    %2407 = vmatpush1.xpose.msra.mxu0 0.0
    %2408 = vmatprep.subr.mxu0 0.0
    %2409 = vmatpush1.xpose.msra.mxu0 0.0
    %2410 = vmatprep.subr.mxu0 0.0
    %2411 = vmatpush1.xpose.msra.mxu0 0.0
    %2412 = vmatprep.subr.mxu0 0.0
    %2413 = vmatpush1.xpose.msra.mxu0 0.0
    %2414 = vmatprep.subr.mxu0 0.0
    %2415 = vmatpush1.xpose.msra.mxu0 0.0
    %2416 = vmatprep.subr.mxu0 0.0
    %2417 = vmatpush1.xpose.msra.mxu0 %v2384
    %2418 = vmatprep.subr.mxu0 0.0
    %2419 = vmatpush2.xpose.msra.mxu0 0.0
    %2420 = vmatprep.subr.mxu0 0.0
    %2421 = vmatpush2.xpose.msra.mxu0 0.0
    %2422 = vmatprep.subr.mxu0 0.0
    %2423 = vmatpush2.xpose.msra.mxu0 0.0
    %2424 = vmatprep.subr.mxu0 0.0
    %2425 = vmatpush2.xpose.msra.mxu0 0.0
    %2426 = vmatprep.subr.mxu0 0.0
    %2427 = vmatpush2.xpose.msra.mxu0 0.0
    %2428 = vmatprep.subr.mxu0 0.0
    %2429 = vmatpush2.xpose.msra.mxu0 0.0
    %2430 = vmatprep.subr.mxu0 0.0
    %2431 = vmatpush2.xpose.msra.mxu0 0.0
    %2432 = vmatprep.subr.mxu0 0.0
    %2433 = vmatpush2.xpose.msra.mxu0 0.0
    %2434 = vmatprep.subr.mxu0 0.0
    %2435 = vmatpush2.xpose.msra.mxu0 0.0
    %2436 = vmatprep.subr.mxu0 0.0
    %2437 = vmatpush2.xpose.msra.mxu0 0.0
    %2438 = vmatprep.subr.mxu0 0.0
    %2439 = vmatpush2.xpose.msra.mxu0 0.0
    %2440 = vmatprep.subr.mxu0 0.0
    %2441 = vmatpush2.xpose.msra.mxu0 0.0
    %2442 = vmatprep.subr.mxu0 0.0
    %2443 = vmatpush2.xpose.msra.mxu0 0.0
    %2444 = vmatprep.subr.mxu0 0.0
    %2445 = vmatpush2.xpose.msra.mxu0 0.0
    %2446 = vmatprep.subr.mxu0 0.0
    %2447 = vmatpush2.xpose.msra.mxu0 0.0
    %2448 = vmatprep.subr.mxu0 0.0
    %2449 = vmatpush2.xpose.msra.mxu0 0.0
    %2450 = vmatprep.mubr.f32.mxu0 0.0
    %2451 = vmatmul.mubr.f32.gmra.mxu0 %v2382
    %v2452 = vpop.f32.mrf.mxu0
    %v2453 = vadd.f32 0.0, %v2452
    %v2454 = vpop.f32.mrf.mxu0
    %2455 = vdwg.mxu0
    %2457 = vrot.lane.b32.xlu0 %v2371, 96
    %v2458 = vpop.permute.xlu0 %2457
    %v2459 = vsel %vm325, %v2371, 0
    %v2461 = vsel %vm325, %v2458, 0
    %2463 = vmatprep.subr.mxu0 0.0
    %2464 = vmatpush1.xpose.msra.mxu0 0.0
    %2465 = vmatprep.subr.mxu0 0.0
    %2466 = vmatpush1.xpose.msra.mxu0 0.0
    %2467 = vmatprep.subr.mxu0 0.0
    %2468 = vmatpush1.xpose.msra.mxu0 0.0
    %2469 = vmatprep.subr.mxu0 0.0
    %2470 = vmatpush1.xpose.msra.mxu0 0.0
    %2471 = vmatprep.subr.mxu0 0.0
    %2472 = vmatpush1.xpose.msra.mxu0 0.0
    %2473 = vmatprep.subr.mxu0 0.0
    %2474 = vmatpush1.xpose.msra.mxu0 0.0
    %2475 = vmatprep.subr.mxu0 0.0
    %2476 = vmatpush1.xpose.msra.mxu0 0.0
    %2477 = vmatprep.subr.mxu0 0.0
    %2478 = vmatpush1.xpose.msra.mxu0 0.0
    %2479 = vmatprep.subr.mxu0 0.0
    %2480 = vmatpush1.xpose.msra.mxu0 0.0
    %2481 = vmatprep.subr.mxu0 0.0
    %2482 = vmatpush1.xpose.msra.mxu0 0.0
    %2483 = vmatprep.subr.mxu0 0.0
    %2484 = vmatpush1.xpose.msra.mxu0 0.0
    %2485 = vmatprep.subr.mxu0 0.0
    %2486 = vmatpush1.xpose.msra.mxu0 0.0
    %2487 = vmatprep.subr.mxu0 0.0
    %2488 = vmatpush1.xpose.msra.mxu0 0.0
    %2489 = vmatprep.subr.mxu0 0.0
    %2490 = vmatpush1.xpose.msra.mxu0 0.0
    %2491 = vmatprep.subr.mxu0 0.0
    %2492 = vmatpush1.xpose.msra.mxu0 0.0
    %2493 = vmatprep.subr.mxu0 0.0
    %2494 = vmatpush1.xpose.msra.mxu0 %v2461
    %2495 = vmatprep.subr.mxu0 0.0
    %2496 = vmatpush2.xpose.msra.mxu0 0.0
    %2497 = vmatprep.subr.mxu0 0.0
    %2498 = vmatpush2.xpose.msra.mxu0 0.0
    %2499 = vmatprep.subr.mxu0 0.0
    %2500 = vmatpush2.xpose.msra.mxu0 0.0
    %2501 = vmatprep.subr.mxu0 0.0
    %2502 = vmatpush2.xpose.msra.mxu0 0.0
    %2503 = vmatprep.subr.mxu0 0.0
    %2504 = vmatpush2.xpose.msra.mxu0 0.0
    %2505 = vmatprep.subr.mxu0 0.0
    %2506 = vmatpush2.xpose.msra.mxu0 0.0
    %2507 = vmatprep.subr.mxu0 0.0
    %2508 = vmatpush2.xpose.msra.mxu0 0.0
    %2509 = vmatprep.subr.mxu0 0.0
    %2510 = vmatpush2.xpose.msra.mxu0 0.0
    %2511 = vmatprep.subr.mxu0 0.0
    %2512 = vmatpush2.xpose.msra.mxu0 0.0
    %2513 = vmatprep.subr.mxu0 0.0
    %2514 = vmatpush2.xpose.msra.mxu0 0.0
    %2515 = vmatprep.subr.mxu0 0.0
    %2516 = vmatpush2.xpose.msra.mxu0 0.0
    %2517 = vmatprep.subr.mxu0 0.0
    %2518 = vmatpush2.xpose.msra.mxu0 0.0
    %2519 = vmatprep.subr.mxu0 0.0
    %2520 = vmatpush2.xpose.msra.mxu0 0.0
    %2521 = vmatprep.subr.mxu0 0.0
    %2522 = vmatpush2.xpose.msra.mxu0 0.0
    %2523 = vmatprep.subr.mxu0 0.0
    %2524 = vmatpush2.xpose.msra.mxu0 0.0
    %2525 = vmatprep.subr.mxu0 0.0
    %2526 = vmatpush2.xpose.msra.mxu0 0.0
    %2527 = vmatprep.mubr.f32.mxu0 0.0
    %2528 = vmatmul.mubr.f32.gmra.mxu0 %v2459
    %v2529 = vpop.f32.mrf.mxu0
    %v2530 = vadd.f32 0.0, %v2529
    %v2531 = vpop.f32.mrf.mxu0
    %2532 = vdwg.mxu0
    %v2533 = vsel %vm325, %v2453, -inf
    %2534 = vmax.xlane.f32.xlu0 %v2533
    %v2535 = vpop.xlane.xlu0 %2534
    %v2536 = vsel %vm325, %v2530, -inf
    %2537 = vmax.xlane.f32.xlu0 %v2536
    %v2538 = vpop.xlane.xlu0 %2537
    %v2539 = vsub.f32 %v2453, %v2535
    %v2540 = vsub.f32 %v2530, %v2538
    %v2541 = vmul.f32 %v2539, 1.442695
    %v2542 = vpow.pop %v2541
    %v2543 = vmul.f32 %v2540, 1.442695
    %v2544 = vpow.pop %v2543
    %v2545 = vsel %vm325, %v2542, 0.0
    %2546 = vadd.xlane.f32.xlu0 %v2545
    %v2547 = vpop.xlane.xlu0 %2546
    %v2548 = vsel %vm325, %v2544, 0.0
    %2549 = vadd.xlane.f32.xlu0 %v2548
    %v2550 = vpop.xlane.xlu0 %2549
    %v2551 = vrcp.pop %v2547
    %v2552 = vrcp.pop %v2550
    %v2553 = vmul.f32 %v2542, %v2551
    %v2554 = vmul.f32 %v2544, %v2552
    %2555 = vrot.lane.b32.xlu0 %v2366, 64
    %v2556 = vpop.permute.xlu0 %2555
    %v2559 = vsel %vm325, %v2553, 0
    %2561 = vmatprep.subr.mxu0 0.0
    %2562 = vmatpush1.msra.mxu0 0.0
    %2563 = vmatprep.subr.mxu0 0.0
    %2564 = vmatpush1.msra.mxu0 0.0
    %2565 = vmatprep.subr.mxu0 0.0
    %2566 = vmatpush1.msra.mxu0 0.0
    %2567 = vmatprep.subr.mxu0 0.0
    %2568 = vmatpush1.msra.mxu0 0.0
    %2569 = vmatprep.subr.mxu0 0.0
    %2570 = vmatpush1.msra.mxu0 0.0
    %2571 = vmatprep.subr.mxu0 0.0
    %2572 = vmatpush1.msra.mxu0 0.0
    %2573 = vmatprep.subr.mxu0 0.0
    %2574 = vmatpush1.msra.mxu0 0.0
    %2575 = vmatprep.subr.mxu0 0.0
    %2576 = vmatpush1.msra.mxu0 0.0
    %2577 = vmatprep.subr.mxu0 0.0
    %2578 = vmatpush1.msra.mxu0 0.0
    %2579 = vmatprep.subr.mxu0 0.0
    %2580 = vmatpush1.msra.mxu0 0.0
    %2581 = vmatprep.subr.mxu0 0.0
    %2582 = vmatpush1.msra.mxu0 0.0
    %2583 = vmatprep.subr.mxu0 0.0
    %2584 = vmatpush1.msra.mxu0 0.0
    %2585 = vmatprep.subr.mxu0 0.0
    %2586 = vmatpush1.msra.mxu0 0.0
    %2587 = vmatprep.subr.mxu0 0.0
    %2588 = vmatpush1.msra.mxu0 0.0
    %2589 = vmatprep.subr.mxu0 0.0
    %2590 = vmatpush1.msra.mxu0 0.0
    %2591 = vmatprep.subr.mxu0 0.0
    %2592 = vmatpush1.msra.mxu0 %v2556
    %2593 = vmatprep.subr.mxu0 0.0
    %2594 = vmatpush2.msra.mxu0 0.0
    %2595 = vmatprep.subr.mxu0 0.0
    %2596 = vmatpush2.msra.mxu0 0.0
    %2597 = vmatprep.subr.mxu0 0.0
    %2598 = vmatpush2.msra.mxu0 0.0
    %2599 = vmatprep.subr.mxu0 0.0
    %2600 = vmatpush2.msra.mxu0 0.0
    %2601 = vmatprep.subr.mxu0 0.0
    %2602 = vmatpush2.msra.mxu0 0.0
    %2603 = vmatprep.subr.mxu0 0.0
    %2604 = vmatpush2.msra.mxu0 0.0
    %2605 = vmatprep.subr.mxu0 0.0
    %2606 = vmatpush2.msra.mxu0 0.0
    %2607 = vmatprep.subr.mxu0 0.0
    %2608 = vmatpush2.msra.mxu0 0.0
    %2609 = vmatprep.subr.mxu0 0.0
    %2610 = vmatpush2.msra.mxu0 0.0
    %2611 = vmatprep.subr.mxu0 0.0
    %2612 = vmatpush2.msra.mxu0 0.0
    %2613 = vmatprep.subr.mxu0 0.0
    %2614 = vmatpush2.msra.mxu0 0.0
    %2615 = vmatprep.subr.mxu0 0.0
    %2616 = vmatpush2.msra.mxu0 0.0
    %2617 = vmatprep.subr.mxu0 0.0
    %2618 = vmatpush2.msra.mxu0 0.0
    %2619 = vmatprep.subr.mxu0 0.0
    %2620 = vmatpush2.msra.mxu0 0.0
    %2621 = vmatprep.subr.mxu0 0.0
    %2622 = vmatpush2.msra.mxu0 0.0
    %2623 = vmatprep.subr.mxu0 0.0
    %2624 = vmatpush2.msra.mxu0 0.0
    %2625 = vmatprep.mubr.f32.mxu0 0.0
    %2626 = vmatmul.mubr.f32.gmra.mxu0 %v2559
    %v2627 = vpop.f32.mrf.mxu0
    %v2628 = vadd.f32 0.0, %v2627
    %v2629 = vpop.f32.mrf.mxu0
    %2630 = vdwg.mxu0
    %2631 = vrot.lane.b32.xlu0 %v2371, 64
    %v2632 = vpop.permute.xlu0 %2631
    %v2635 = vsel %vm325, %v2554, 0
    %2637 = vmatprep.subr.mxu0 0.0
    %2638 = vmatpush1.msra.mxu0 0.0
    %2639 = vmatprep.subr.mxu0 0.0
    %2640 = vmatpush1.msra.mxu0 0.0
    %2641 = vmatprep.subr.mxu0 0.0
    %2642 = vmatpush1.msra.mxu0 0.0
    %2643 = vmatprep.subr.mxu0 0.0
    %2644 = vmatpush1.msra.mxu0 0.0
    %2645 = vmatprep.subr.mxu0 0.0
    %2646 = vmatpush1.msra.mxu0 0.0
    %2647 = vmatprep.subr.mxu0 0.0
    %2648 = vmatpush1.msra.mxu0 0.0
    %2649 = vmatprep.subr.mxu0 0.0
    %2650 = vmatpush1.msra.mxu0 0.0
    %2651 = vmatprep.subr.mxu0 0.0
    %2652 = vmatpush1.msra.mxu0 0.0
    %2653 = vmatprep.subr.mxu0 0.0
    %2654 = vmatpush1.msra.mxu0 0.0
    %2655 = vmatprep.subr.mxu0 0.0
    %2656 = vmatpush1.msra.mxu0 0.0
    %2657 = vmatprep.subr.mxu0 0.0
    %2658 = vmatpush1.msra.mxu0 0.0
    %2659 = vmatprep.subr.mxu0 0.0
    %2660 = vmatpush1.msra.mxu0 0.0
    %2661 = vmatprep.subr.mxu0 0.0
    %2662 = vmatpush1.msra.mxu0 0.0
    %2663 = vmatprep.subr.mxu0 0.0
    %2664 = vmatpush1.msra.mxu0 0.0
    %2665 = vmatprep.subr.mxu0 0.0
    %2666 = vmatpush1.msra.mxu0 0.0
    %2667 = vmatprep.subr.mxu0 0.0
    %2668 = vmatpush1.msra.mxu0 %v2632
    %2669 = vmatprep.subr.mxu0 0.0
    %2670 = vmatpush2.msra.mxu0 0.0
    %2671 = vmatprep.subr.mxu0 0.0
    %2672 = vmatpush2.msra.mxu0 0.0
    %2673 = vmatprep.subr.mxu0 0.0
    %2674 = vmatpush2.msra.mxu0 0.0
    %2675 = vmatprep.subr.mxu0 0.0
    %2676 = vmatpush2.msra.mxu0 0.0
    %2677 = vmatprep.subr.mxu0 0.0
    %2678 = vmatpush2.msra.mxu0 0.0
    %2679 = vmatprep.subr.mxu0 0.0
    %2680 = vmatpush2.msra.mxu0 0.0
    %2681 = vmatprep.subr.mxu0 0.0
    %2682 = vmatpush2.msra.mxu0 0.0
    %2683 = vmatprep.subr.mxu0 0.0
    %2684 = vmatpush2.msra.mxu0 0.0
    %2685 = vmatprep.subr.mxu0 0.0
    %2686 = vmatpush2.msra.mxu0 0.0
    %2687 = vmatprep.subr.mxu0 0.0
    %2688 = vmatpush2.msra.mxu0 0.0
    %2689 = vmatprep.subr.mxu0 0.0
    %2690 = vmatpush2.msra.mxu0 0.0
    %2691 = vmatprep.subr.mxu0 0.0
    %2692 = vmatpush2.msra.mxu0 0.0
    %2693 = vmatprep.subr.mxu0 0.0
    %2694 = vmatpush2.msra.mxu0 0.0
    %2695 = vmatprep.subr.mxu0 0.0
    %2696 = vmatpush2.msra.mxu0 0.0
    %2697 = vmatprep.subr.mxu0 0.0
    %2698 = vmatpush2.msra.mxu0 0.0
    %2699 = vmatprep.subr.mxu0 0.0
    %2700 = vmatpush2.msra.mxu0 0.0
    %2701 = vmatprep.mubr.f32.mxu0 0.0
    %2702 = vmatmul.mubr.f32.gmra.mxu0 %v2635
    %v2703 = vpop.f32.mrf.mxu0
    %v2704 = vadd.f32 0.0, %v2703
    %v2705 = vpop.f32.mrf.mxu0
    %2706 = vdwg.mxu0
    %2707 = vrot.lane.b32.xlu0 %v2366, 120
    %v2708 = vpop.permute.xlu0 %2707
    %2709 = vrot.lane.b32.xlu0 %v2366, 88
    %v2710 = vpop.permute.xlu0 %2709
    %v2711 = vsel %vm325, %v2708, 0
    %v2713 = vsel %vm325, %v2710, 0
    %2715 = vmatprep.subr.mxu0 0.0
    %2716 = vmatpush1.xpose.msra.mxu0 0.0
    %2717 = vmatprep.subr.mxu0 0.0
    %2718 = vmatpush1.xpose.msra.mxu0 0.0
    %2719 = vmatprep.subr.mxu0 0.0
    %2720 = vmatpush1.xpose.msra.mxu0 0.0
    %2721 = vmatprep.subr.mxu0 0.0
    %2722 = vmatpush1.xpose.msra.mxu0 0.0
    %2723 = vmatprep.subr.mxu0 0.0
    %2724 = vmatpush1.xpose.msra.mxu0 0.0
    %2725 = vmatprep.subr.mxu0 0.0
    %2726 = vmatpush1.xpose.msra.mxu0 0.0
    %2727 = vmatprep.subr.mxu0 0.0
    %2728 = vmatpush1.xpose.msra.mxu0 0.0
    %2729 = vmatprep.subr.mxu0 0.0
    %2730 = vmatpush1.xpose.msra.mxu0 0.0
    %2731 = vmatprep.subr.mxu0 0.0
    %2732 = vmatpush1.xpose.msra.mxu0 0.0
    %2733 = vmatprep.subr.mxu0 0.0
    %2734 = vmatpush1.xpose.msra.mxu0 0.0
    %2735 = vmatprep.subr.mxu0 0.0
    %2736 = vmatpush1.xpose.msra.mxu0 0.0
    %2737 = vmatprep.subr.mxu0 0.0
    %2738 = vmatpush1.xpose.msra.mxu0 0.0
    %2739 = vmatprep.subr.mxu0 0.0
    %2740 = vmatpush1.xpose.msra.mxu0 0.0
    %2741 = vmatprep.subr.mxu0 0.0
    %2742 = vmatpush1.xpose.msra.mxu0 0.0
    %2743 = vmatprep.subr.mxu0 0.0
    %2744 = vmatpush1.xpose.msra.mxu0 0.0
    %2745 = vmatprep.subr.mxu0 0.0
    %2746 = vmatpush1.xpose.msra.mxu0 %v2713
    %2747 = vmatprep.subr.mxu0 0.0
    %2748 = vmatpush2.xpose.msra.mxu0 0.0
    %2749 = vmatprep.subr.mxu0 0.0
    %2750 = vmatpush2.xpose.msra.mxu0 0.0
    %2751 = vmatprep.subr.mxu0 0.0
    %2752 = vmatpush2.xpose.msra.mxu0 0.0
    %2753 = vmatprep.subr.mxu0 0.0
    %2754 = vmatpush2.xpose.msra.mxu0 0.0
    %2755 = vmatprep.subr.mxu0 0.0
    %2756 = vmatpush2.xpose.msra.mxu0 0.0
    %2757 = vmatprep.subr.mxu0 0.0
    %2758 = vmatpush2.xpose.msra.mxu0 0.0
    %2759 = vmatprep.subr.mxu0 0.0
    %2760 = vmatpush2.xpose.msra.mxu0 0.0
    %2761 = vmatprep.subr.mxu0 0.0
    %2762 = vmatpush2.xpose.msra.mxu0 0.0
    %2763 = vmatprep.subr.mxu0 0.0
    %2764 = vmatpush2.xpose.msra.mxu0 0.0
    %2765 = vmatprep.subr.mxu0 0.0
    %2766 = vmatpush2.xpose.msra.mxu0 0.0
    %2767 = vmatprep.subr.mxu0 0.0
    %2768 = vmatpush2.xpose.msra.mxu0 0.0
    %2769 = vmatprep.subr.mxu0 0.0
    %2770 = vmatpush2.xpose.msra.mxu0 0.0
    %2771 = vmatprep.subr.mxu0 0.0
    %2772 = vmatpush2.xpose.msra.mxu0 0.0
    %2773 = vmatprep.subr.mxu0 0.0
    %2774 = vmatpush2.xpose.msra.mxu0 0.0
    %2775 = vmatprep.subr.mxu0 0.0
    %2776 = vmatpush2.xpose.msra.mxu0 0.0
    %2777 = vmatprep.subr.mxu0 0.0
    %2778 = vmatpush2.xpose.msra.mxu0 0.0
    %2779 = vmatprep.mubr.f32.mxu0 0.0
    %2780 = vmatmul.mubr.f32.gmra.mxu0 %v2711
    %v2781 = vpop.f32.mrf.mxu0
    %v2782 = vadd.f32 0.0, %v2781
    %v2783 = vpop.f32.mrf.mxu0
    %2784 = vdwg.mxu0
    %2785 = vrot.lane.b32.xlu0 %v2371, 120
    %v2786 = vpop.permute.xlu0 %2785
    %2787 = vrot.lane.b32.xlu0 %v2371, 88
    %v2788 = vpop.permute.xlu0 %2787
    %v2789 = vsel %vm325, %v2786, 0
    %v2791 = vsel %vm325, %v2788, 0
    %2793 = vmatprep.subr.mxu0 0.0
    %2794 = vmatpush1.xpose.msra.mxu0 0.0
    %2795 = vmatprep.subr.mxu0 0.0
    %2796 = vmatpush1.xpose.msra.mxu0 0.0
    %2797 = vmatprep.subr.mxu0 0.0
    %2798 = vmatpush1.xpose.msra.mxu0 0.0
    %2799 = vmatprep.subr.mxu0 0.0
    %2800 = vmatpush1.xpose.msra.mxu0 0.0
    %2801 = vmatprep.subr.mxu0 0.0
    %2802 = vmatpush1.xpose.msra.mxu0 0.0
    %2803 = vmatprep.subr.mxu0 0.0
    %2804 = vmatpush1.xpose.msra.mxu0 0.0
    %2805 = vmatprep.subr.mxu0 0.0
    %2806 = vmatpush1.xpose.msra.mxu0 0.0
    %2807 = vmatprep.subr.mxu0 0.0
    %2808 = vmatpush1.xpose.msra.mxu0 0.0
    %2809 = vmatprep.subr.mxu0 0.0
    %2810 = vmatpush1.xpose.msra.mxu0 0.0
    %2811 = vmatprep.subr.mxu0 0.0
    %2812 = vmatpush1.xpose.msra.mxu0 0.0
    %2813 = vmatprep.subr.mxu0 0.0
    %2814 = vmatpush1.xpose.msra.mxu0 0.0
    %2815 = vmatprep.subr.mxu0 0.0
    %2816 = vmatpush1.xpose.msra.mxu0 0.0
    %2817 = vmatprep.subr.mxu0 0.0
    %2818 = vmatpush1.xpose.msra.mxu0 0.0
    %2819 = vmatprep.subr.mxu0 0.0
    %2820 = vmatpush1.xpose.msra.mxu0 0.0
    %2821 = vmatprep.subr.mxu0 0.0
    %2822 = vmatpush1.xpose.msra.mxu0 0.0
    %2823 = vmatprep.subr.mxu0 0.0
    %2824 = vmatpush1.xpose.msra.mxu0 %v2791
    %2825 = vmatprep.subr.mxu0 0.0
    %2826 = vmatpush2.xpose.msra.mxu0 0.0
    %2827 = vmatprep.subr.mxu0 0.0
    %2828 = vmatpush2.xpose.msra.mxu0 0.0
    %2829 = vmatprep.subr.mxu0 0.0
    %2830 = vmatpush2.xpose.msra.mxu0 0.0
    %2831 = vmatprep.subr.mxu0 0.0
    %2832 = vmatpush2.xpose.msra.mxu0 0.0
    %2833 = vmatprep.subr.mxu0 0.0
    %2834 = vmatpush2.xpose.msra.mxu0 0.0
    %2835 = vmatprep.subr.mxu0 0.0
    %2836 = vmatpush2.xpose.msra.mxu0 0.0
    %2837 = vmatprep.subr.mxu0 0.0
    %2838 = vmatpush2.xpose.msra.mxu0 0.0
    %2839 = vmatprep.subr.mxu0 0.0
    %2840 = vmatpush2.xpose.msra.mxu0 0.0
    %2841 = vmatprep.subr.mxu0 0.0
    %2842 = vmatpush2.xpose.msra.mxu0 0.0
    %2843 = vmatprep.subr.mxu0 0.0
    %2844 = vmatpush2.xpose.msra.mxu0 0.0
    %2845 = vmatprep.subr.mxu0 0.0
    %2846 = vmatpush2.xpose.msra.mxu0 0.0
    %2847 = vmatprep.subr.mxu0 0.0
    %2848 = vmatpush2.xpose.msra.mxu0 0.0
    %2849 = vmatprep.subr.mxu0 0.0
    %2850 = vmatpush2.xpose.msra.mxu0 0.0
    %2851 = vmatprep.subr.mxu0 0.0
    %2852 = vmatpush2.xpose.msra.mxu0 0.0
    %2853 = vmatprep.subr.mxu0 0.0
    %2854 = vmatpush2.xpose.msra.mxu0 0.0
    %2855 = vmatprep.subr.mxu0 0.0
    %2856 = vmatpush2.xpose.msra.mxu0 0.0
    %2857 = vmatprep.mubr.f32.mxu0 0.0
    %2858 = vmatmul.mubr.f32.gmra.mxu0 %v2789
    %v2859 = vpop.f32.mrf.mxu0
    %v2860 = vadd.f32 0.0, %v2859
    %v2861 = vpop.f32.mrf.mxu0
    %2862 = vdwg.mxu0
    %v2863 = vsel %vm325, %v2782, -inf
    %2864 = vmax.xlane.f32.xlu0 %v2863
    %v2865 = vpop.xlane.xlu0 %2864
    %v2866 = vsel %vm325, %v2860, -inf
    %2867 = vmax.xlane.f32.xlu0 %v2866
    %v2868 = vpop.xlane.xlu0 %2867
    %v2869 = vsub.f32 %v2782, %v2865
    %v2870 = vsub.f32 %v2860, %v2868
    %v2871 = vmul.f32 %v2869, 1.442695
    %v2872 = vpow.pop %v2871
    %v2873 = vmul.f32 %v2870, 1.442695
    %v2874 = vpow.pop %v2873
    %v2875 = vsel %vm325, %v2872, 0.0
    %2876 = vadd.xlane.f32.xlu0 %v2875
    %v2877 = vpop.xlane.xlu0 %2876
    %v2878 = vsel %vm325, %v2874, 0.0
    %2879 = vadd.xlane.f32.xlu0 %v2878
    %v2880 = vpop.xlane.xlu0 %2879
    %v2881 = vrcp.pop %v2877
    %v2882 = vrcp.pop %v2880
    %v2883 = vmul.f32 %v2872, %v2881
    %v2884 = vmul.f32 %v2874, %v2882
    %2885 = vrot.lane.b32.xlu0 %v2366, 56
    %v2886 = vpop.permute.xlu0 %2885
    %v2889 = vsel %vm325, %v2883, 0
    %2891 = vmatprep.subr.mxu0 0.0
    %2892 = vmatpush1.msra.mxu0 0.0
    %2893 = vmatprep.subr.mxu0 0.0
    %2894 = vmatpush1.msra.mxu0 0.0
    %2895 = vmatprep.subr.mxu0 0.0
    %2896 = vmatpush1.msra.mxu0 0.0
    %2897 = vmatprep.subr.mxu0 0.0
    %2898 = vmatpush1.msra.mxu0 0.0
    %2899 = vmatprep.subr.mxu0 0.0
    %2900 = vmatpush1.msra.mxu0 0.0
    %2901 = vmatprep.subr.mxu0 0.0
    %2902 = vmatpush1.msra.mxu0 0.0
    %2903 = vmatprep.subr.mxu0 0.0
    %2904 = vmatpush1.msra.mxu0 0.0
    %2905 = vmatprep.subr.mxu0 0.0
    %2906 = vmatpush1.msra.mxu0 0.0
    %2907 = vmatprep.subr.mxu0 0.0
    %2908 = vmatpush1.msra.mxu0 0.0
    %2909 = vmatprep.subr.mxu0 0.0
    %2910 = vmatpush1.msra.mxu0 0.0
    %2911 = vmatprep.subr.mxu0 0.0
    %2912 = vmatpush1.msra.mxu0 0.0
    %2913 = vmatprep.subr.mxu0 0.0
    %2914 = vmatpush1.msra.mxu0 0.0
    %2915 = vmatprep.subr.mxu0 0.0
    %2916 = vmatpush1.msra.mxu0 0.0
    %2917 = vmatprep.subr.mxu0 0.0
    %2918 = vmatpush1.msra.mxu0 0.0
    %2919 = vmatprep.subr.mxu0 0.0
    %2920 = vmatpush1.msra.mxu0 0.0
    %2921 = vmatprep.subr.mxu0 0.0
    %2922 = vmatpush1.msra.mxu0 %v2886
    %2923 = vmatprep.subr.mxu0 0.0
    %2924 = vmatpush2.msra.mxu0 0.0
    %2925 = vmatprep.subr.mxu0 0.0
    %2926 = vmatpush2.msra.mxu0 0.0
    %2927 = vmatprep.subr.mxu0 0.0
    %2928 = vmatpush2.msra.mxu0 0.0
    %2929 = vmatprep.subr.mxu0 0.0
    %2930 = vmatpush2.msra.mxu0 0.0
    %2931 = vmatprep.subr.mxu0 0.0
    %2932 = vmatpush2.msra.mxu0 0.0
    %2933 = vmatprep.subr.mxu0 0.0
    %2934 = vmatpush2.msra.mxu0 0.0
    %2935 = vmatprep.subr.mxu0 0.0
    %2936 = vmatpush2.msra.mxu0 0.0
    %2937 = vmatprep.subr.mxu0 0.0
    %2938 = vmatpush2.msra.mxu0 0.0
    %2939 = vmatprep.subr.mxu0 0.0
    %2940 = vmatpush2.msra.mxu0 0.0
    %2941 = vmatprep.subr.mxu0 0.0
    %2942 = vmatpush2.msra.mxu0 0.0
    %2943 = vmatprep.subr.mxu0 0.0
    %2944 = vmatpush2.msra.mxu0 0.0
    %2945 = vmatprep.subr.mxu0 0.0
    %2946 = vmatpush2.msra.mxu0 0.0
    %2947 = vmatprep.subr.mxu0 0.0
    %2948 = vmatpush2.msra.mxu0 0.0
    %2949 = vmatprep.subr.mxu0 0.0
    %2950 = vmatpush2.msra.mxu0 0.0
    %2951 = vmatprep.subr.mxu0 0.0
    %2952 = vmatpush2.msra.mxu0 0.0
    %2953 = vmatprep.subr.mxu0 0.0
    %2954 = vmatpush2.msra.mxu0 0.0
    %2955 = vmatprep.mubr.f32.mxu0 0.0
    %2956 = vmatmul.mubr.f32.gmra.mxu0 %v2889
    %v2957 = vpop.f32.mrf.mxu0
    %v2958 = vadd.f32 0.0, %v2957
    %v2959 = vpop.f32.mrf.mxu0
    %2960 = vdwg.mxu0
    %2961 = vrot.lane.b32.xlu0 %v2371, 56
    %v2962 = vpop.permute.xlu0 %2961
    %v2965 = vsel %vm325, %v2884, 0
    %2967 = vmatprep.subr.mxu0 0.0
    %2968 = vmatpush1.msra.mxu0 0.0
    %2969 = vmatprep.subr.mxu0 0.0
    %2970 = vmatpush1.msra.mxu0 0.0
    %2971 = vmatprep.subr.mxu0 0.0
    %2972 = vmatpush1.msra.mxu0 0.0
    %2973 = vmatprep.subr.mxu0 0.0
    %2974 = vmatpush1.msra.mxu0 0.0
    %2975 = vmatprep.subr.mxu0 0.0
    %2976 = vmatpush1.msra.mxu0 0.0
    %2977 = vmatprep.subr.mxu0 0.0
    %2978 = vmatpush1.msra.mxu0 0.0
    %2979 = vmatprep.subr.mxu0 0.0
    %2980 = vmatpush1.msra.mxu0 0.0
    %2981 = vmatprep.subr.mxu0 0.0
    %2982 = vmatpush1.msra.mxu0 0.0
    %2983 = vmatprep.subr.mxu0 0.0
    %2984 = vmatpush1.msra.mxu0 0.0
    %2985 = vmatprep.subr.mxu0 0.0
    %2986 = vmatpush1.msra.mxu0 0.0
    %2987 = vmatprep.subr.mxu0 0.0
    %2988 = vmatpush1.msra.mxu0 0.0
    %2989 = vmatprep.subr.mxu0 0.0
    %2990 = vmatpush1.msra.mxu0 0.0
    %2991 = vmatprep.subr.mxu0 0.0
    %2992 = vmatpush1.msra.mxu0 0.0
    %2993 = vmatprep.subr.mxu0 0.0
    %2994 = vmatpush1.msra.mxu0 0.0
    %2995 = vmatprep.subr.mxu0 0.0
    %2996 = vmatpush1.msra.mxu0 0.0
    %2997 = vmatprep.subr.mxu0 0.0
    %2998 = vmatpush1.msra.mxu0 %v2962
    %2999 = vmatprep.subr.mxu0 0.0
    %3000 = vmatpush2.msra.mxu0 0.0
    %3001 = vmatprep.subr.mxu0 0.0
    %3002 = vmatpush2.msra.mxu0 0.0
    %3003 = vmatprep.subr.mxu0 0.0
    %3004 = vmatpush2.msra.mxu0 0.0
    %3005 = vmatprep.subr.mxu0 0.0
    %3006 = vmatpush2.msra.mxu0 0.0
    %3007 = vmatprep.subr.mxu0 0.0
    %3008 = vmatpush2.msra.mxu0 0.0
    %3009 = vmatprep.subr.mxu0 0.0
    %3010 = vmatpush2.msra.mxu0 0.0
    %3011 = vmatprep.subr.mxu0 0.0
    %3012 = vmatpush2.msra.mxu0 0.0
    %3013 = vmatprep.subr.mxu0 0.0
    %3014 = vmatpush2.msra.mxu0 0.0
    %3015 = vmatprep.subr.mxu0 0.0
    %3016 = vmatpush2.msra.mxu0 0.0
    %3017 = vmatprep.subr.mxu0 0.0
    %3018 = vmatpush2.msra.mxu0 0.0
    %3019 = vmatprep.subr.mxu0 0.0
    %3020 = vmatpush2.msra.mxu0 0.0
    %3021 = vmatprep.subr.mxu0 0.0
    %3022 = vmatpush2.msra.mxu0 0.0
    %3023 = vmatprep.subr.mxu0 0.0
    %3024 = vmatpush2.msra.mxu0 0.0
    %3025 = vmatprep.subr.mxu0 0.0
    %3026 = vmatpush2.msra.mxu0 0.0
    %3027 = vmatprep.subr.mxu0 0.0
    %3028 = vmatpush2.msra.mxu0 0.0
    %3029 = vmatprep.subr.mxu0 0.0
    %3030 = vmatpush2.msra.mxu0 0.0
    %3031 = vmatprep.mubr.f32.mxu0 0.0
    %3032 = vmatmul.mubr.f32.gmra.mxu0 %v2965
    %v3033 = vpop.f32.mrf.mxu0
    %v3034 = vadd.f32 0.0, %v3033
    %v3035 = vpop.f32.mrf.mxu0
    %3036 = vdwg.mxu0
    %v3038 = vsel %vm325, %v2958, 0
    %v3041 = vsel %vm325, %v3034, 0
    %3043 = vmatprep.subr.mxu0 0.0
    %3044 = vmatpush1.msra.mxu0 0.0
    %3045 = vmatprep.subr.mxu0 0.0
    %3046 = vmatpush1.msra.mxu0 0.0
    %3047 = vmatprep.subr.mxu0 0.0
    %3048 = vmatpush1.msra.mxu0 0.0
    %3049 = vmatprep.subr.mxu0 0.0
    %3050 = vmatpush1.msra.mxu0 0.0
    %3051 = vmatprep.subr.mxu0 0.0
    %3052 = vmatpush1.msra.mxu0 0.0
    %3053 = vmatprep.subr.mxu0 0.0
    %3054 = vmatpush1.msra.mxu0 0.0
    %3055 = vmatprep.subr.mxu0 0.0
    %3056 = vmatpush1.msra.mxu0 0.0
    %3057 = vmatprep.subr.mxu0 0.0
    %3058 = vmatpush1.msra.mxu0 0.0
    %3059 = vmatprep.subr.mxu0 0.0
    %3060 = vmatpush1.msra.mxu0 0.0
    %3061 = vmatprep.subr.mxu0 0.0
    %3062 = vmatpush1.msra.mxu0 0.0
    %3063 = vmatprep.subr.mxu0 0.0
    %3064 = vmatpush1.msra.mxu0 0.0
    %3065 = vmatprep.subr.mxu0 0.0
    %3066 = vmatpush1.msra.mxu0 0.0
    %3067 = vmatprep.subr.mxu0 0.0
    %3068 = vmatpush1.msra.mxu0 0.0
    %3069 = vmatprep.subr.mxu0 0.0
    %3070 = vmatpush1.msra.mxu0 0.0
    %3071 = vmatprep.subr.mxu0 0.0
    %3072 = vmatpush1.msra.mxu0 0.0
    %3073 = vmatprep.subr.mxu0 0.0
    %3074 = vmatpush1.msra.mxu0 %v2376
    %3075 = vmatprep.subr.mxu0 0.0
    %3076 = vmatpush2.msra.mxu0 0.0
    %3077 = vmatprep.subr.mxu0 0.0
    %3078 = vmatpush2.msra.mxu0 0.0
    %3079 = vmatprep.subr.mxu0 0.0
    %3080 = vmatpush2.msra.mxu0 0.0
    %3081 = vmatprep.subr.mxu0 0.0
    %3082 = vmatpush2.msra.mxu0 0.0
    %3083 = vmatprep.subr.mxu0 0.0
    %3084 = vmatpush2.msra.mxu0 0.0
    %3085 = vmatprep.subr.mxu0 0.0
    %3086 = vmatpush2.msra.mxu0 0.0
    %3087 = vmatprep.subr.mxu0 0.0
    %3088 = vmatpush2.msra.mxu0 0.0
    %3089 = vmatprep.subr.mxu0 0.0
    %3090 = vmatpush2.msra.mxu0 0.0
    %3091 = vmatprep.subr.mxu0 0.0
    %3092 = vmatpush2.msra.mxu0 0.0
    %3093 = vmatprep.subr.mxu0 0.0
    %3094 = vmatpush2.msra.mxu0 0.0
    %3095 = vmatprep.subr.mxu0 0.0
    %3096 = vmatpush2.msra.mxu0 0.0
    %3097 = vmatprep.subr.mxu0 0.0
    %3098 = vmatpush2.msra.mxu0 0.0
    %3099 = vmatprep.subr.mxu0 0.0
    %3100 = vmatpush2.msra.mxu0 0.0
    %3101 = vmatprep.subr.mxu0 0.0
    %3102 = vmatpush2.msra.mxu0 0.0
    %3103 = vmatprep.subr.mxu0 0.0
    %3104 = vmatpush2.msra.mxu0 0.0
    %3105 = vmatprep.subr.mxu0 0.0
    %3106 = vmatpush2.msra.mxu0 0.0
    %3107 = vmatprep.mubr.f32.mxu0 0.0
    %3108 = vmatmul.mubr.f32.gmra.mxu0 %v3038
    %v3109 = vpop.f32.mrf.mxu0
    %v3110 = vadd.f32 0.0, %v3109
    %v3111 = vpop.f32.mrf.mxu0
    %3112 = vmatprep.mubr.f32.mxu0 0.0
    %3113 = vmatmul.mubr.f32.gmra.mxu0 %v3041
    %v3114 = vpop.f32.mrf.mxu0
    %v3115 = vadd.f32 0.0, %v3114
    %v3116 = vpop.f32.mrf.mxu0
    %3117 = vdwg.mxu0
    %v3119 = vsel %vm325, %v2628, 0
    %v3122 = vsel %vm325, %v2704, 0
    %3124 = vmatprep.subr.mxu0 0.0
    %3125 = vmatpush1.msra.mxu0 0.0
    %3126 = vmatprep.subr.mxu0 0.0
    %3127 = vmatpush1.msra.mxu0 0.0
    %3128 = vmatprep.subr.mxu0 0.0
    %3129 = vmatpush1.msra.mxu0 0.0
    %3130 = vmatprep.subr.mxu0 0.0
    %3131 = vmatpush1.msra.mxu0 0.0
    %3132 = vmatprep.subr.mxu0 0.0
    %3133 = vmatpush1.msra.mxu0 0.0
    %3134 = vmatprep.subr.mxu0 0.0
    %3135 = vmatpush1.msra.mxu0 0.0
    %3136 = vmatprep.subr.mxu0 0.0
    %3137 = vmatpush1.msra.mxu0 0.0
    %3138 = vmatprep.subr.mxu0 0.0
    %3139 = vmatpush1.msra.mxu0 0.0
    %3140 = vmatprep.subr.mxu0 0.0
    %3141 = vmatpush1.msra.mxu0 0.0
    %3142 = vmatprep.subr.mxu0 0.0
    %3143 = vmatpush1.msra.mxu0 0.0
    %3144 = vmatprep.subr.mxu0 0.0
    %3145 = vmatpush1.msra.mxu0 0.0
    %3146 = vmatprep.subr.mxu0 0.0
    %3147 = vmatpush1.msra.mxu0 0.0
    %3148 = vmatprep.subr.mxu0 0.0
    %3149 = vmatpush1.msra.mxu0 0.0
    %3150 = vmatprep.subr.mxu0 0.0
    %3151 = vmatpush1.msra.mxu0 0.0
    %3152 = vmatprep.subr.mxu0 0.0
    %3153 = vmatpush1.msra.mxu0 0.0
    %3154 = vmatprep.subr.mxu0 0.0
    %3155 = vmatpush1.msra.mxu0 %v2375
    %3156 = vmatprep.subr.mxu0 0.0
    %3157 = vmatpush2.msra.mxu0 0.0
    %3158 = vmatprep.subr.mxu0 0.0
    %3159 = vmatpush2.msra.mxu0 0.0
    %3160 = vmatprep.subr.mxu0 0.0
    %3161 = vmatpush2.msra.mxu0 0.0
    %3162 = vmatprep.subr.mxu0 0.0
    %3163 = vmatpush2.msra.mxu0 0.0
    %3164 = vmatprep.subr.mxu0 0.0
    %3165 = vmatpush2.msra.mxu0 0.0
    %3166 = vmatprep.subr.mxu0 0.0
    %3167 = vmatpush2.msra.mxu0 0.0
    %3168 = vmatprep.subr.mxu0 0.0
    %3169 = vmatpush2.msra.mxu0 0.0
    %3170 = vmatprep.subr.mxu0 0.0
    %3171 = vmatpush2.msra.mxu0 0.0
    %3172 = vmatprep.subr.mxu0 0.0
    %3173 = vmatpush2.msra.mxu0 0.0
    %3174 = vmatprep.subr.mxu0 0.0
    %3175 = vmatpush2.msra.mxu0 0.0
    %3176 = vmatprep.subr.mxu0 0.0
    %3177 = vmatpush2.msra.mxu0 0.0
    %3178 = vmatprep.subr.mxu0 0.0
    %3179 = vmatpush2.msra.mxu0 0.0
    %3180 = vmatprep.subr.mxu0 0.0
    %3181 = vmatpush2.msra.mxu0 0.0
    %3182 = vmatprep.subr.mxu0 0.0
    %3183 = vmatpush2.msra.mxu0 0.0
    %3184 = vmatprep.subr.mxu0 0.0
    %3185 = vmatpush2.msra.mxu0 0.0
    %3186 = vmatprep.subr.mxu0 0.0
    %3187 = vmatpush2.msra.mxu0 0.0
    %3188 = vmatprep.mubr.f32.mxu0 0.0
    %3189 = vmatmul.mubr.f32.gmra.mxu0 %v3119
    %v3190 = vpop.f32.mrf.mxu0
    %v3191 = vadd.f32 %v3110, %v3190
    %v3192 = vpop.f32.mrf.mxu0
    %3193 = vmatprep.mubr.f32.mxu0 0.0
    %3194 = vmatmul.mubr.f32.gmra.mxu0 %v3122
    %v3195 = vpop.f32.mrf.mxu0
    %v3196 = vadd.f32 %v3115, %v3195
    %v3197 = vpop.f32.mrf.mxu0
    %3198 = vdwg.mxu0
    %3199 = vrot.lane.b32.xlu0 %v2366, 112
    %v3200 = vpop.permute.xlu0 %3199
    %3201 = vrot.lane.b32.xlu0 %v2366, 80
    %v3202 = vpop.permute.xlu0 %3201
    %v3203 = vsel %vm325, %v3200, 0
    %v3205 = vsel %vm325, %v3202, 0
    %3207 = vmatprep.subr.mxu0 0.0
    %3208 = vmatpush1.xpose.msra.mxu0 0.0
    %3209 = vmatprep.subr.mxu0 0.0
    %3210 = vmatpush1.xpose.msra.mxu0 0.0
    %3211 = vmatprep.subr.mxu0 0.0
    %3212 = vmatpush1.xpose.msra.mxu0 0.0
    %3213 = vmatprep.subr.mxu0 0.0
    %3214 = vmatpush1.xpose.msra.mxu0 0.0
    %3215 = vmatprep.subr.mxu0 0.0
    %3216 = vmatpush1.xpose.msra.mxu0 0.0
    %3217 = vmatprep.subr.mxu0 0.0
    %3218 = vmatpush1.xpose.msra.mxu0 0.0
    %3219 = vmatprep.subr.mxu0 0.0
    %3220 = vmatpush1.xpose.msra.mxu0 0.0
    %3221 = vmatprep.subr.mxu0 0.0
    %3222 = vmatpush1.xpose.msra.mxu0 0.0
    %3223 = vmatprep.subr.mxu0 0.0
    %3224 = vmatpush1.xpose.msra.mxu0 0.0
    %3225 = vmatprep.subr.mxu0 0.0
    %3226 = vmatpush1.xpose.msra.mxu0 0.0
    %3227 = vmatprep.subr.mxu0 0.0
    %3228 = vmatpush1.xpose.msra.mxu0 0.0
    %3229 = vmatprep.subr.mxu0 0.0
    %3230 = vmatpush1.xpose.msra.mxu0 0.0
    %3231 = vmatprep.subr.mxu0 0.0
    %3232 = vmatpush1.xpose.msra.mxu0 0.0
    %3233 = vmatprep.subr.mxu0 0.0
    %3234 = vmatpush1.xpose.msra.mxu0 0.0
    %3235 = vmatprep.subr.mxu0 0.0
    %3236 = vmatpush1.xpose.msra.mxu0 0.0
    %3237 = vmatprep.subr.mxu0 0.0
    %3238 = vmatpush1.xpose.msra.mxu0 %v3205
    %3239 = vmatprep.subr.mxu0 0.0
    %3240 = vmatpush2.xpose.msra.mxu0 0.0
    %3241 = vmatprep.subr.mxu0 0.0
    %3242 = vmatpush2.xpose.msra.mxu0 0.0
    %3243 = vmatprep.subr.mxu0 0.0
    %3244 = vmatpush2.xpose.msra.mxu0 0.0
    %3245 = vmatprep.subr.mxu0 0.0
    %3246 = vmatpush2.xpose.msra.mxu0 0.0
    %3247 = vmatprep.subr.mxu0 0.0
    %3248 = vmatpush2.xpose.msra.mxu0 0.0
    %3249 = vmatprep.subr.mxu0 0.0
    %3250 = vmatpush2.xpose.msra.mxu0 0.0
    %3251 = vmatprep.subr.mxu0 0.0
    %3252 = vmatpush2.xpose.msra.mxu0 0.0
    %3253 = vmatprep.subr.mxu0 0.0
    %3254 = vmatpush2.xpose.msra.mxu0 0.0
    %3255 = vmatprep.subr.mxu0 0.0
    %3256 = vmatpush2.xpose.msra.mxu0 0.0
    %3257 = vmatprep.subr.mxu0 0.0
    %3258 = vmatpush2.xpose.msra.mxu0 0.0
    %3259 = vmatprep.subr.mxu0 0.0
    %3260 = vmatpush2.xpose.msra.mxu0 0.0
    %3261 = vmatprep.subr.mxu0 0.0
    %3262 = vmatpush2.xpose.msra.mxu0 0.0
    %3263 = vmatprep.subr.mxu0 0.0
    %3264 = vmatpush2.xpose.msra.mxu0 0.0
    %3265 = vmatprep.subr.mxu0 0.0
    %3266 = vmatpush2.xpose.msra.mxu0 0.0
    %3267 = vmatprep.subr.mxu0 0.0
    %3268 = vmatpush2.xpose.msra.mxu0 0.0
    %3269 = vmatprep.subr.mxu0 0.0
    %3270 = vmatpush2.xpose.msra.mxu0 0.0
    %3271 = vmatprep.mubr.f32.mxu0 0.0
    %3272 = vmatmul.mubr.f32.gmra.mxu0 %v3203
    %v3273 = vpop.f32.mrf.mxu0
    %v3274 = vadd.f32 0.0, %v3273
    %v3275 = vpop.f32.mrf.mxu0
    %3276 = vdwg.mxu0
    %3277 = vrot.lane.b32.xlu0 %v2371, 112
    %v3278 = vpop.permute.xlu0 %3277
    %3279 = vrot.lane.b32.xlu0 %v2371, 80
    %v3280 = vpop.permute.xlu0 %3279
    %v3281 = vsel %vm325, %v3278, 0
    %v3283 = vsel %vm325, %v3280, 0
    %3285 = vmatprep.subr.mxu0 0.0
    %3286 = vmatpush1.xpose.msra.mxu0 0.0
    %3287 = vmatprep.subr.mxu0 0.0
    %3288 = vmatpush1.xpose.msra.mxu0 0.0
    %3289 = vmatprep.subr.mxu0 0.0
    %3290 = vmatpush1.xpose.msra.mxu0 0.0
    %3291 = vmatprep.subr.mxu0 0.0
    %3292 = vmatpush1.xpose.msra.mxu0 0.0
    %3293 = vmatprep.subr.mxu0 0.0
    %3294 = vmatpush1.xpose.msra.mxu0 0.0
    %3295 = vmatprep.subr.mxu0 0.0
    %3296 = vmatpush1.xpose.msra.mxu0 0.0
    %3297 = vmatprep.subr.mxu0 0.0
    %3298 = vmatpush1.xpose.msra.mxu0 0.0
    %3299 = vmatprep.subr.mxu0 0.0
    %3300 = vmatpush1.xpose.msra.mxu0 0.0
    %3301 = vmatprep.subr.mxu0 0.0
    %3302 = vmatpush1.xpose.msra.mxu0 0.0
    %3303 = vmatprep.subr.mxu0 0.0
    %3304 = vmatpush1.xpose.msra.mxu0 0.0
    %3305 = vmatprep.subr.mxu0 0.0
    %3306 = vmatpush1.xpose.msra.mxu0 0.0
    %3307 = vmatprep.subr.mxu0 0.0
    %3308 = vmatpush1.xpose.msra.mxu0 0.0
    %3309 = vmatprep.subr.mxu0 0.0
    %3310 = vmatpush1.xpose.msra.mxu0 0.0
    %3311 = vmatprep.subr.mxu0 0.0
    %3312 = vmatpush1.xpose.msra.mxu0 0.0
    %3313 = vmatprep.subr.mxu0 0.0
    %3314 = vmatpush1.xpose.msra.mxu0 0.0
    %3315 = vmatprep.subr.mxu0 0.0
    %3316 = vmatpush1.xpose.msra.mxu0 %v3283
    %3317 = vmatprep.subr.mxu0 0.0
    %3318 = vmatpush2.xpose.msra.mxu0 0.0
    %3319 = vmatprep.subr.mxu0 0.0
    %3320 = vmatpush2.xpose.msra.mxu0 0.0
    %3321 = vmatprep.subr.mxu0 0.0
    %3322 = vmatpush2.xpose.msra.mxu0 0.0
    %3323 = vmatprep.subr.mxu0 0.0
    %3324 = vmatpush2.xpose.msra.mxu0 0.0
    %3325 = vmatprep.subr.mxu0 0.0
    %3326 = vmatpush2.xpose.msra.mxu0 0.0
    %3327 = vmatprep.subr.mxu0 0.0
    %3328 = vmatpush2.xpose.msra.mxu0 0.0
    %3329 = vmatprep.subr.mxu0 0.0
    %3330 = vmatpush2.xpose.msra.mxu0 0.0
    %3331 = vmatprep.subr.mxu0 0.0
    %3332 = vmatpush2.xpose.msra.mxu0 0.0
    %3333 = vmatprep.subr.mxu0 0.0
    %3334 = vmatpush2.xpose.msra.mxu0 0.0
    %3335 = vmatprep.subr.mxu0 0.0
    %3336 = vmatpush2.xpose.msra.mxu0 0.0
    %3337 = vmatprep.subr.mxu0 0.0
    %3338 = vmatpush2.xpose.msra.mxu0 0.0
    %3339 = vmatprep.subr.mxu0 0.0
    %3340 = vmatpush2.xpose.msra.mxu0 0.0
    %3341 = vmatprep.subr.mxu0 0.0
    %3342 = vmatpush2.xpose.msra.mxu0 0.0
    %3343 = vmatprep.subr.mxu0 0.0
    %3344 = vmatpush2.xpose.msra.mxu0 0.0
    %3345 = vmatprep.subr.mxu0 0.0
    %3346 = vmatpush2.xpose.msra.mxu0 0.0
    %3347 = vmatprep.subr.mxu0 0.0
    %3348 = vmatpush2.xpose.msra.mxu0 0.0
    %3349 = vmatprep.mubr.f32.mxu0 0.0
    %3350 = vmatmul.mubr.f32.gmra.mxu0 %v3281
    %v3351 = vpop.f32.mrf.mxu0
    %v3352 = vadd.f32 0.0, %v3351
    %v3353 = vpop.f32.mrf.mxu0
    %3354 = vdwg.mxu0
    %v3355 = vsel %vm325, %v3274, -inf
    %3356 = vmax.xlane.f32.xlu0 %v3355
    %v3357 = vpop.xlane.xlu0 %3356
    %v3358 = vsel %vm325, %v3352, -inf
    %3359 = vmax.xlane.f32.xlu0 %v3358
    %v3360 = vpop.xlane.xlu0 %3359
    %v3361 = vsub.f32 %v3274, %v3357
    %v3362 = vsub.f32 %v3352, %v3360
    %v3363 = vmul.f32 %v3361, 1.442695
    %v3364 = vpow.pop %v3363
    %v3365 = vmul.f32 %v3362, 1.442695
    %v3366 = vpow.pop %v3365
    %v3367 = vsel %vm325, %v3364, 0.0
    %3368 = vadd.xlane.f32.xlu0 %v3367
    %v3369 = vpop.xlane.xlu0 %3368
    %v3370 = vsel %vm325, %v3366, 0.0
    %3371 = vadd.xlane.f32.xlu0 %v3370
    %v3372 = vpop.xlane.xlu0 %3371
    %v3373 = vrcp.pop %v3369
    %v3374 = vrcp.pop %v3372
    %v3375 = vmul.f32 %v3364, %v3373
    %v3376 = vmul.f32 %v3366, %v3374
    %3377 = vrot.lane.b32.xlu0 %v2366, 48
    %v3378 = vpop.permute.xlu0 %3377
    %v3381 = vsel %vm325, %v3375, 0
    %3383 = vmatprep.subr.mxu0 0.0
    %3384 = vmatpush1.msra.mxu0 0.0
    %3385 = vmatprep.subr.mxu0 0.0
    %3386 = vmatpush1.msra.mxu0 0.0
    %3387 = vmatprep.subr.mxu0 0.0
    %3388 = vmatpush1.msra.mxu0 0.0
    %3389 = vmatprep.subr.mxu0 0.0
    %3390 = vmatpush1.msra.mxu0 0.0
    %3391 = vmatprep.subr.mxu0 0.0
    %3392 = vmatpush1.msra.mxu0 0.0
    %3393 = vmatprep.subr.mxu0 0.0
    %3394 = vmatpush1.msra.mxu0 0.0
    %3395 = vmatprep.subr.mxu0 0.0
    %3396 = vmatpush1.msra.mxu0 0.0
    %3397 = vmatprep.subr.mxu0 0.0
    %3398 = vmatpush1.msra.mxu0 0.0
    %3399 = vmatprep.subr.mxu0 0.0
    %3400 = vmatpush1.msra.mxu0 0.0
    %3401 = vmatprep.subr.mxu0 0.0
    %3402 = vmatpush1.msra.mxu0 0.0
    %3403 = vmatprep.subr.mxu0 0.0
    %3404 = vmatpush1.msra.mxu0 0.0
    %3405 = vmatprep.subr.mxu0 0.0
    %3406 = vmatpush1.msra.mxu0 0.0
    %3407 = vmatprep.subr.mxu0 0.0
    %3408 = vmatpush1.msra.mxu0 0.0
    %3409 = vmatprep.subr.mxu0 0.0
    %3410 = vmatpush1.msra.mxu0 0.0
    %3411 = vmatprep.subr.mxu0 0.0
    %3412 = vmatpush1.msra.mxu0 0.0
    %3413 = vmatprep.subr.mxu0 0.0
    %3414 = vmatpush1.msra.mxu0 %v3378
    %3415 = vmatprep.subr.mxu0 0.0
    %3416 = vmatpush2.msra.mxu0 0.0
    %3417 = vmatprep.subr.mxu0 0.0
    %3418 = vmatpush2.msra.mxu0 0.0
    %3419 = vmatprep.subr.mxu0 0.0
    %3420 = vmatpush2.msra.mxu0 0.0
    %3421 = vmatprep.subr.mxu0 0.0
    %3422 = vmatpush2.msra.mxu0 0.0
    %3423 = vmatprep.subr.mxu0 0.0
    %3424 = vmatpush2.msra.mxu0 0.0
    %3425 = vmatprep.subr.mxu0 0.0
    %3426 = vmatpush2.msra.mxu0 0.0
    %3427 = vmatprep.subr.mxu0 0.0
    %3428 = vmatpush2.msra.mxu0 0.0
    %3429 = vmatprep.subr.mxu0 0.0
    %3430 = vmatpush2.msra.mxu0 0.0
    %3431 = vmatprep.subr.mxu0 0.0
    %3432 = vmatpush2.msra.mxu0 0.0
    %3433 = vmatprep.subr.mxu0 0.0
    %3434 = vmatpush2.msra.mxu0 0.0
    %3435 = vmatprep.subr.mxu0 0.0
    %3436 = vmatpush2.msra.mxu0 0.0
    %3437 = vmatprep.subr.mxu0 0.0
    %3438 = vmatpush2.msra.mxu0 0.0
    %3439 = vmatprep.subr.mxu0 0.0
    %3440 = vmatpush2.msra.mxu0 0.0
    %3441 = vmatprep.subr.mxu0 0.0
    %3442 = vmatpush2.msra.mxu0 0.0
    %3443 = vmatprep.subr.mxu0 0.0
    %3444 = vmatpush2.msra.mxu0 0.0
    %3445 = vmatprep.subr.mxu0 0.0
    %3446 = vmatpush2.msra.mxu0 0.0
    %3447 = vmatprep.mubr.f32.mxu0 0.0
    %3448 = vmatmul.mubr.f32.gmra.mxu0 %v3381
    %v3449 = vpop.f32.mrf.mxu0
    %v3450 = vadd.f32 0.0, %v3449
    %v3451 = vpop.f32.mrf.mxu0
    %3452 = vdwg.mxu0
    %3453 = vrot.lane.b32.xlu0 %v2371, 48
    %v3454 = vpop.permute.xlu0 %3453
    %v3457 = vsel %vm325, %v3376, 0
    %3459 = vmatprep.subr.mxu0 0.0
    %3460 = vmatpush1.msra.mxu0 0.0
    %3461 = vmatprep.subr.mxu0 0.0
    %3462 = vmatpush1.msra.mxu0 0.0
    %3463 = vmatprep.subr.mxu0 0.0
    %3464 = vmatpush1.msra.mxu0 0.0
    %3465 = vmatprep.subr.mxu0 0.0
    %3466 = vmatpush1.msra.mxu0 0.0
    %3467 = vmatprep.subr.mxu0 0.0
    %3468 = vmatpush1.msra.mxu0 0.0
    %3469 = vmatprep.subr.mxu0 0.0
    %3470 = vmatpush1.msra.mxu0 0.0
    %3471 = vmatprep.subr.mxu0 0.0
    %3472 = vmatpush1.msra.mxu0 0.0
    %3473 = vmatprep.subr.mxu0 0.0
    %3474 = vmatpush1.msra.mxu0 0.0
    %3475 = vmatprep.subr.mxu0 0.0
    %3476 = vmatpush1.msra.mxu0 0.0
    %3477 = vmatprep.subr.mxu0 0.0
    %3478 = vmatpush1.msra.mxu0 0.0
    %3479 = vmatprep.subr.mxu0 0.0
    %3480 = vmatpush1.msra.mxu0 0.0
    %3481 = vmatprep.subr.mxu0 0.0
    %3482 = vmatpush1.msra.mxu0 0.0
    %3483 = vmatprep.subr.mxu0 0.0
    %3484 = vmatpush1.msra.mxu0 0.0
    %3485 = vmatprep.subr.mxu0 0.0
    %3486 = vmatpush1.msra.mxu0 0.0
    %3487 = vmatprep.subr.mxu0 0.0
    %3488 = vmatpush1.msra.mxu0 0.0
    %3489 = vmatprep.subr.mxu0 0.0
    %3490 = vmatpush1.msra.mxu0 %v3454
    %3491 = vmatprep.subr.mxu0 0.0
    %3492 = vmatpush2.msra.mxu0 0.0
    %3493 = vmatprep.subr.mxu0 0.0
    %3494 = vmatpush2.msra.mxu0 0.0
    %3495 = vmatprep.subr.mxu0 0.0
    %3496 = vmatpush2.msra.mxu0 0.0
    %3497 = vmatprep.subr.mxu0 0.0
    %3498 = vmatpush2.msra.mxu0 0.0
    %3499 = vmatprep.subr.mxu0 0.0
    %3500 = vmatpush2.msra.mxu0 0.0
    %3501 = vmatprep.subr.mxu0 0.0
    %3502 = vmatpush2.msra.mxu0 0.0
    %3503 = vmatprep.subr.mxu0 0.0
    %3504 = vmatpush2.msra.mxu0 0.0
    %3505 = vmatprep.subr.mxu0 0.0
    %3506 = vmatpush2.msra.mxu0 0.0
    %3507 = vmatprep.subr.mxu0 0.0
    %3508 = vmatpush2.msra.mxu0 0.0
    %3509 = vmatprep.subr.mxu0 0.0
    %3510 = vmatpush2.msra.mxu0 0.0
    %3511 = vmatprep.subr.mxu0 0.0
    %3512 = vmatpush2.msra.mxu0 0.0
    %3513 = vmatprep.subr.mxu0 0.0
    %3514 = vmatpush2.msra.mxu0 0.0
    %3515 = vmatprep.subr.mxu0 0.0
    %3516 = vmatpush2.msra.mxu0 0.0
    %3517 = vmatprep.subr.mxu0 0.0
    %3518 = vmatpush2.msra.mxu0 0.0
    %3519 = vmatprep.subr.mxu0 0.0
    %3520 = vmatpush2.msra.mxu0 0.0
    %3521 = vmatprep.subr.mxu0 0.0
    %3522 = vmatpush2.msra.mxu0 0.0
    %3523 = vmatprep.mubr.f32.mxu0 0.0
    %3524 = vmatmul.mubr.f32.gmra.mxu0 %v3457
    %v3525 = vpop.f32.mrf.mxu0
    %v3526 = vadd.f32 0.0, %v3525
    %v3527 = vpop.f32.mrf.mxu0
    %3528 = vdwg.mxu0
    %v3530 = vsel %vm325, %v3450, 0
    %v3533 = vsel %vm325, %v3526, 0
    %3535 = vmatprep.subr.mxu0 0.0
    %3536 = vmatpush1.msra.mxu0 0.0
    %3537 = vmatprep.subr.mxu0 0.0
    %3538 = vmatpush1.msra.mxu0 0.0
    %3539 = vmatprep.subr.mxu0 0.0
    %3540 = vmatpush1.msra.mxu0 0.0
    %3541 = vmatprep.subr.mxu0 0.0
    %3542 = vmatpush1.msra.mxu0 0.0
    %3543 = vmatprep.subr.mxu0 0.0
    %3544 = vmatpush1.msra.mxu0 0.0
    %3545 = vmatprep.subr.mxu0 0.0
    %3546 = vmatpush1.msra.mxu0 0.0
    %3547 = vmatprep.subr.mxu0 0.0
    %3548 = vmatpush1.msra.mxu0 0.0
    %3549 = vmatprep.subr.mxu0 0.0
    %3550 = vmatpush1.msra.mxu0 0.0
    %3551 = vmatprep.subr.mxu0 0.0
    %3552 = vmatpush1.msra.mxu0 0.0
    %3553 = vmatprep.subr.mxu0 0.0
    %3554 = vmatpush1.msra.mxu0 0.0
    %3555 = vmatprep.subr.mxu0 0.0
    %3556 = vmatpush1.msra.mxu0 0.0
    %3557 = vmatprep.subr.mxu0 0.0
    %3558 = vmatpush1.msra.mxu0 0.0
    %3559 = vmatprep.subr.mxu0 0.0
    %3560 = vmatpush1.msra.mxu0 0.0
    %3561 = vmatprep.subr.mxu0 0.0
    %3562 = vmatpush1.msra.mxu0 0.0
    %3563 = vmatprep.subr.mxu0 0.0
    %3564 = vmatpush1.msra.mxu0 0.0
    %3565 = vmatprep.subr.mxu0 0.0
    %3566 = vmatpush1.msra.mxu0 %v2377
    %3567 = vmatprep.subr.mxu0 0.0
    %3568 = vmatpush2.msra.mxu0 0.0
    %3569 = vmatprep.subr.mxu0 0.0
    %3570 = vmatpush2.msra.mxu0 0.0
    %3571 = vmatprep.subr.mxu0 0.0
    %3572 = vmatpush2.msra.mxu0 0.0
    %3573 = vmatprep.subr.mxu0 0.0
    %3574 = vmatpush2.msra.mxu0 0.0
    %3575 = vmatprep.subr.mxu0 0.0
    %3576 = vmatpush2.msra.mxu0 0.0
    %3577 = vmatprep.subr.mxu0 0.0
    %3578 = vmatpush2.msra.mxu0 0.0
    %3579 = vmatprep.subr.mxu0 0.0
    %3580 = vmatpush2.msra.mxu0 0.0
    %3581 = vmatprep.subr.mxu0 0.0
    %3582 = vmatpush2.msra.mxu0 0.0
    %3583 = vmatprep.subr.mxu0 0.0
    %3584 = vmatpush2.msra.mxu0 0.0
    %3585 = vmatprep.subr.mxu0 0.0
    %3586 = vmatpush2.msra.mxu0 0.0
    %3587 = vmatprep.subr.mxu0 0.0
    %3588 = vmatpush2.msra.mxu0 0.0
    %3589 = vmatprep.subr.mxu0 0.0
    %3590 = vmatpush2.msra.mxu0 0.0
    %3591 = vmatprep.subr.mxu0 0.0
    %3592 = vmatpush2.msra.mxu0 0.0
    %3593 = vmatprep.subr.mxu0 0.0
    %3594 = vmatpush2.msra.mxu0 0.0
    %3595 = vmatprep.subr.mxu0 0.0
    %3596 = vmatpush2.msra.mxu0 0.0
    %3597 = vmatprep.subr.mxu0 0.0
    %3598 = vmatpush2.msra.mxu0 0.0
    %3599 = vmatprep.mubr.f32.mxu0 0.0
    %3600 = vmatmul.mubr.f32.gmra.mxu0 %v3530
    %v3601 = vpop.f32.mrf.mxu0
    %v3602 = vadd.f32 0.0, %v3601
    %v3603 = vpop.f32.mrf.mxu0
    %3604 = vmatprep.mubr.f32.mxu0 0.0
    %3605 = vmatmul.mubr.f32.gmra.mxu0 %v3533
    %v3606 = vpop.f32.mrf.mxu0
    %v3607 = vadd.f32 0.0, %v3606
    %v3608 = vpop.f32.mrf.mxu0
    %3609 = vdwg.mxu0
    %v3610 = vadd.f32 %v3191, %v3602
    %v3611 = vadd.f32 %v3196, %v3607
    %3612 = vrot.lane.b32.xlu0 %v2366, 104
    %v3613 = vpop.permute.xlu0 %3612
    %3614 = vrot.lane.b32.xlu0 %v2366, 72
    %v3615 = vpop.permute.xlu0 %3614
    %v3616 = vsel %vm325, %v3613, 0
    %v3618 = vsel %vm325, %v3615, 0
    %3620 = vmatprep.subr.mxu0 0.0
    %3621 = vmatpush1.xpose.msra.mxu0 0.0
    %3622 = vmatprep.subr.mxu0 0.0
    %3623 = vmatpush1.xpose.msra.mxu0 0.0
    %3624 = vmatprep.subr.mxu0 0.0
    %3625 = vmatpush1.xpose.msra.mxu0 0.0
    %3626 = vmatprep.subr.mxu0 0.0
    %3627 = vmatpush1.xpose.msra.mxu0 0.0
    %3628 = vmatprep.subr.mxu0 0.0
    %3629 = vmatpush1.xpose.msra.mxu0 0.0
    %3630 = vmatprep.subr.mxu0 0.0
    %3631 = vmatpush1.xpose.msra.mxu0 0.0
    %3632 = vmatprep.subr.mxu0 0.0
    %3633 = vmatpush1.xpose.msra.mxu0 0.0
    %3634 = vmatprep.subr.mxu0 0.0
    %3635 = vmatpush1.xpose.msra.mxu0 0.0
    %3636 = vmatprep.subr.mxu0 0.0
    %3637 = vmatpush1.xpose.msra.mxu0 0.0
    %3638 = vmatprep.subr.mxu0 0.0
    %3639 = vmatpush1.xpose.msra.mxu0 0.0
    %3640 = vmatprep.subr.mxu0 0.0
    %3641 = vmatpush1.xpose.msra.mxu0 0.0
    %3642 = vmatprep.subr.mxu0 0.0
    %3643 = vmatpush1.xpose.msra.mxu0 0.0
    %3644 = vmatprep.subr.mxu0 0.0
    %3645 = vmatpush1.xpose.msra.mxu0 0.0
    %3646 = vmatprep.subr.mxu0 0.0
    %3647 = vmatpush1.xpose.msra.mxu0 0.0
    %3648 = vmatprep.subr.mxu0 0.0
    %3649 = vmatpush1.xpose.msra.mxu0 0.0
    %3650 = vmatprep.subr.mxu0 0.0
    %3651 = vmatpush1.xpose.msra.mxu0 %v3618
    %3652 = vmatprep.subr.mxu0 0.0
    %3653 = vmatpush2.xpose.msra.mxu0 0.0
    %3654 = vmatprep.subr.mxu0 0.0
    %3655 = vmatpush2.xpose.msra.mxu0 0.0
    %3656 = vmatprep.subr.mxu0 0.0
    %3657 = vmatpush2.xpose.msra.mxu0 0.0
    %3658 = vmatprep.subr.mxu0 0.0
    %3659 = vmatpush2.xpose.msra.mxu0 0.0
    %3660 = vmatprep.subr.mxu0 0.0
    %3661 = vmatpush2.xpose.msra.mxu0 0.0
    %3662 = vmatprep.subr.mxu0 0.0
    %3663 = vmatpush2.xpose.msra.mxu0 0.0
    %3664 = vmatprep.subr.mxu0 0.0
    %3665 = vmatpush2.xpose.msra.mxu0 0.0
    %3666 = vmatprep.subr.mxu0 0.0
    %3667 = vmatpush2.xpose.msra.mxu0 0.0
    %3668 = vmatprep.subr.mxu0 0.0
    %3669 = vmatpush2.xpose.msra.mxu0 0.0
    %3670 = vmatprep.subr.mxu0 0.0
    %3671 = vmatpush2.xpose.msra.mxu0 0.0
    %3672 = vmatprep.subr.mxu0 0.0
    %3673 = vmatpush2.xpose.msra.mxu0 0.0
    %3674 = vmatprep.subr.mxu0 0.0
    %3675 = vmatpush2.xpose.msra.mxu0 0.0
    %3676 = vmatprep.subr.mxu0 0.0
    %3677 = vmatpush2.xpose.msra.mxu0 0.0
    %3678 = vmatprep.subr.mxu0 0.0
    %3679 = vmatpush2.xpose.msra.mxu0 0.0
    %3680 = vmatprep.subr.mxu0 0.0
    %3681 = vmatpush2.xpose.msra.mxu0 0.0
    %3682 = vmatprep.subr.mxu0 0.0
    %3683 = vmatpush2.xpose.msra.mxu0 0.0
    %3684 = vmatprep.mubr.f32.mxu0 0.0
    %3685 = vmatmul.mubr.f32.gmra.mxu0 %v3616
    %v3686 = vpop.f32.mrf.mxu0
    %v3687 = vadd.f32 0.0, %v3686
    %v3688 = vpop.f32.mrf.mxu0
    %3689 = vdwg.mxu0
    %3690 = vrot.lane.b32.xlu0 %v2371, 104
    %v3691 = vpop.permute.xlu0 %3690
    %3692 = vrot.lane.b32.xlu0 %v2371, 72
    %v3693 = vpop.permute.xlu0 %3692
    %v3694 = vsel %vm325, %v3691, 0
    %v3696 = vsel %vm325, %v3693, 0
    %3698 = vmatprep.subr.mxu0 0.0
    %3699 = vmatpush1.xpose.msra.mxu0 0.0
    %3700 = vmatprep.subr.mxu0 0.0
    %3701 = vmatpush1.xpose.msra.mxu0 0.0
    %3702 = vmatprep.subr.mxu0 0.0
    %3703 = vmatpush1.xpose.msra.mxu0 0.0
    %3704 = vmatprep.subr.mxu0 0.0
    %3705 = vmatpush1.xpose.msra.mxu0 0.0
    %3706 = vmatprep.subr.mxu0 0.0
    %3707 = vmatpush1.xpose.msra.mxu0 0.0
    %3708 = vmatprep.subr.mxu0 0.0
    %3709 = vmatpush1.xpose.msra.mxu0 0.0
    %3710 = vmatprep.subr.mxu0 0.0
    %3711 = vmatpush1.xpose.msra.mxu0 0.0
    %3712 = vmatprep.subr.mxu0 0.0
    %3713 = vmatpush1.xpose.msra.mxu0 0.0
    %3714 = vmatprep.subr.mxu0 0.0
    %3715 = vmatpush1.xpose.msra.mxu0 0.0
    %3716 = vmatprep.subr.mxu0 0.0
    %3717 = vmatpush1.xpose.msra.mxu0 0.0
    %3718 = vmatprep.subr.mxu0 0.0
    %3719 = vmatpush1.xpose.msra.mxu0 0.0
    %3720 = vmatprep.subr.mxu0 0.0
    %3721 = vmatpush1.xpose.msra.mxu0 0.0
    %3722 = vmatprep.subr.mxu0 0.0
    %3723 = vmatpush1.xpose.msra.mxu0 0.0
    %3724 = vmatprep.subr.mxu0 0.0
    %3725 = vmatpush1.xpose.msra.mxu0 0.0
    %3726 = vmatprep.subr.mxu0 0.0
    %3727 = vmatpush1.xpose.msra.mxu0 0.0
    %3728 = vmatprep.subr.mxu0 0.0
    %3729 = vmatpush1.xpose.msra.mxu0 %v3696
    %3730 = vmatprep.subr.mxu0 0.0
    %3731 = vmatpush2.xpose.msra.mxu0 0.0
    %3732 = vmatprep.subr.mxu0 0.0
    %3733 = vmatpush2.xpose.msra.mxu0 0.0
    %3734 = vmatprep.subr.mxu0 0.0
    %3735 = vmatpush2.xpose.msra.mxu0 0.0
    %3736 = vmatprep.subr.mxu0 0.0
    %3737 = vmatpush2.xpose.msra.mxu0 0.0
    %3738 = vmatprep.subr.mxu0 0.0
    %3739 = vmatpush2.xpose.msra.mxu0 0.0
    %3740 = vmatprep.subr.mxu0 0.0
    %3741 = vmatpush2.xpose.msra.mxu0 0.0
    %3742 = vmatprep.subr.mxu0 0.0
    %3743 = vmatpush2.xpose.msra.mxu0 0.0
    %3744 = vmatprep.subr.mxu0 0.0
    %3745 = vmatpush2.xpose.msra.mxu0 0.0
    %3746 = vmatprep.subr.mxu0 0.0
    %3747 = vmatpush2.xpose.msra.mxu0 0.0
    %3748 = vmatprep.subr.mxu0 0.0
    %3749 = vmatpush2.xpose.msra.mxu0 0.0
    %3750 = vmatprep.subr.mxu0 0.0
    %3751 = vmatpush2.xpose.msra.mxu0 0.0
    %3752 = vmatprep.subr.mxu0 0.0
    %3753 = vmatpush2.xpose.msra.mxu0 0.0
    %3754 = vmatprep.subr.mxu0 0.0
    %3755 = vmatpush2.xpose.msra.mxu0 0.0
    %3756 = vmatprep.subr.mxu0 0.0
    %3757 = vmatpush2.xpose.msra.mxu0 0.0
    %3758 = vmatprep.subr.mxu0 0.0
    %3759 = vmatpush2.xpose.msra.mxu0 0.0
    %3760 = vmatprep.subr.mxu0 0.0
    %3761 = vmatpush2.xpose.msra.mxu0 0.0
    %3762 = vmatprep.mubr.f32.mxu0 0.0
    %3763 = vmatmul.mubr.f32.gmra.mxu0 %v3694
    %v3764 = vpop.f32.mrf.mxu0
    %v3765 = vadd.f32 0.0, %v3764
    %v3766 = vpop.f32.mrf.mxu0
    %3767 = vdwg.mxu0
    %v3768 = vsel %vm325, %v3687, -inf
    %3769 = vmax.xlane.f32.xlu0 %v3768
    %v3770 = vpop.xlane.xlu0 %3769
    %v3771 = vsel %vm325, %v3765, -inf
    %3772 = vmax.xlane.f32.xlu0 %v3771
    %v3773 = vpop.xlane.xlu0 %3772
    %v3774 = vsub.f32 %v3687, %v3770
    %v3775 = vsub.f32 %v3765, %v3773
    %v3776 = vmul.f32 %v3774, 1.442695
    %v3777 = vpow.pop %v3776
    %v3778 = vmul.f32 %v3775, 1.442695
    %v3779 = vpow.pop %v3778
    %v3780 = vsel %vm325, %v3777, 0.0
    %3781 = vadd.xlane.f32.xlu0 %v3780
    %v3782 = vpop.xlane.xlu0 %3781
    %v3783 = vsel %vm325, %v3779, 0.0
    %3784 = vadd.xlane.f32.xlu0 %v3783
    %v3785 = vpop.xlane.xlu0 %3784
    %v3786 = vrcp.pop %v3782
    %v3787 = vrcp.pop %v3785
    %v3788 = vmul.f32 %v3777, %v3786
    %v3789 = vmul.f32 %v3779, %v3787
    %3790 = vrot.lane.b32.xlu0 %v2366, 40
    %v3791 = vpop.permute.xlu0 %3790
    %v3794 = vsel %vm325, %v3788, 0
    %3796 = vmatprep.subr.mxu0 0.0
    %3797 = vmatpush1.msra.mxu0 0.0
    %3798 = vmatprep.subr.mxu0 0.0
    %3799 = vmatpush1.msra.mxu0 0.0
    %3800 = vmatprep.subr.mxu0 0.0
    %3801 = vmatpush1.msra.mxu0 0.0
    %3802 = vmatprep.subr.mxu0 0.0
    %3803 = vmatpush1.msra.mxu0 0.0
    %3804 = vmatprep.subr.mxu0 0.0
    %3805 = vmatpush1.msra.mxu0 0.0
    %3806 = vmatprep.subr.mxu0 0.0
    %3807 = vmatpush1.msra.mxu0 0.0
    %3808 = vmatprep.subr.mxu0 0.0
    %3809 = vmatpush1.msra.mxu0 0.0
    %3810 = vmatprep.subr.mxu0 0.0
    %3811 = vmatpush1.msra.mxu0 0.0
    %3812 = vmatprep.subr.mxu0 0.0
    %3813 = vmatpush1.msra.mxu0 0.0
    %3814 = vmatprep.subr.mxu0 0.0
    %3815 = vmatpush1.msra.mxu0 0.0
    %3816 = vmatprep.subr.mxu0 0.0
    %3817 = vmatpush1.msra.mxu0 0.0
    %3818 = vmatprep.subr.mxu0 0.0
    %3819 = vmatpush1.msra.mxu0 0.0
    %3820 = vmatprep.subr.mxu0 0.0
    %3821 = vmatpush1.msra.mxu0 0.0
    %3822 = vmatprep.subr.mxu0 0.0
    %3823 = vmatpush1.msra.mxu0 0.0
    %3824 = vmatprep.subr.mxu0 0.0
    %3825 = vmatpush1.msra.mxu0 0.0
    %3826 = vmatprep.subr.mxu0 0.0
    %3827 = vmatpush1.msra.mxu0 %v3791
    %3828 = vmatprep.subr.mxu0 0.0
    %3829 = vmatpush2.msra.mxu0 0.0
    %3830 = vmatprep.subr.mxu0 0.0
    %3831 = vmatpush2.msra.mxu0 0.0
    %3832 = vmatprep.subr.mxu0 0.0
    %3833 = vmatpush2.msra.mxu0 0.0
    %3834 = vmatprep.subr.mxu0 0.0
    %3835 = vmatpush2.msra.mxu0 0.0
    %3836 = vmatprep.subr.mxu0 0.0
    %3837 = vmatpush2.msra.mxu0 0.0
    %3838 = vmatprep.subr.mxu0 0.0
    %3839 = vmatpush2.msra.mxu0 0.0
    %3840 = vmatprep.subr.mxu0 0.0
    %3841 = vmatpush2.msra.mxu0 0.0
    %3842 = vmatprep.subr.mxu0 0.0
    %3843 = vmatpush2.msra.mxu0 0.0
    %3844 = vmatprep.subr.mxu0 0.0
    %3845 = vmatpush2.msra.mxu0 0.0
    %3846 = vmatprep.subr.mxu0 0.0
    %3847 = vmatpush2.msra.mxu0 0.0
    %3848 = vmatprep.subr.mxu0 0.0
    %3849 = vmatpush2.msra.mxu0 0.0
    %3850 = vmatprep.subr.mxu0 0.0
    %3851 = vmatpush2.msra.mxu0 0.0
    %3852 = vmatprep.subr.mxu0 0.0
    %3853 = vmatpush2.msra.mxu0 0.0
    %3854 = vmatprep.subr.mxu0 0.0
    %3855 = vmatpush2.msra.mxu0 0.0
    %3856 = vmatprep.subr.mxu0 0.0
    %3857 = vmatpush2.msra.mxu0 0.0
    %3858 = vmatprep.subr.mxu0 0.0
    %3859 = vmatpush2.msra.mxu0 0.0
    %3860 = vmatprep.mubr.f32.mxu0 0.0
    %3861 = vmatmul.mubr.f32.gmra.mxu0 %v3794
    %v3862 = vpop.f32.mrf.mxu0
    %v3863 = vadd.f32 0.0, %v3862
    %v3864 = vpop.f32.mrf.mxu0
    %3865 = vdwg.mxu0
    %3866 = vrot.lane.b32.xlu0 %v2371, 40
    %v3867 = vpop.permute.xlu0 %3866
    %v3870 = vsel %vm325, %v3789, 0
    %3872 = vmatprep.subr.mxu0 0.0
    %3873 = vmatpush1.msra.mxu0 0.0
    %3874 = vmatprep.subr.mxu0 0.0
    %3875 = vmatpush1.msra.mxu0 0.0
    %3876 = vmatprep.subr.mxu0 0.0
    %3877 = vmatpush1.msra.mxu0 0.0
    %3878 = vmatprep.subr.mxu0 0.0
    %3879 = vmatpush1.msra.mxu0 0.0
    %3880 = vmatprep.subr.mxu0 0.0
    %3881 = vmatpush1.msra.mxu0 0.0
    %3882 = vmatprep.subr.mxu0 0.0
    %3883 = vmatpush1.msra.mxu0 0.0
    %3884 = vmatprep.subr.mxu0 0.0
    %3885 = vmatpush1.msra.mxu0 0.0
    %3886 = vmatprep.subr.mxu0 0.0
    %3887 = vmatpush1.msra.mxu0 0.0
    %3888 = vmatprep.subr.mxu0 0.0
    %3889 = vmatpush1.msra.mxu0 0.0
    %3890 = vmatprep.subr.mxu0 0.0
    %3891 = vmatpush1.msra.mxu0 0.0
    %3892 = vmatprep.subr.mxu0 0.0
    %3893 = vmatpush1.msra.mxu0 0.0
    %3894 = vmatprep.subr.mxu0 0.0
    %3895 = vmatpush1.msra.mxu0 0.0
    %3896 = vmatprep.subr.mxu0 0.0
    %3897 = vmatpush1.msra.mxu0 0.0
    %3898 = vmatprep.subr.mxu0 0.0
    %3899 = vmatpush1.msra.mxu0 0.0
    %3900 = vmatprep.subr.mxu0 0.0
    %3901 = vmatpush1.msra.mxu0 0.0
    %3902 = vmatprep.subr.mxu0 0.0
    %3903 = vmatpush1.msra.mxu0 %v3867
    %3904 = vmatprep.subr.mxu0 0.0
    %3905 = vmatpush2.msra.mxu0 0.0
    %3906 = vmatprep.subr.mxu0 0.0
    %3907 = vmatpush2.msra.mxu0 0.0
    %3908 = vmatprep.subr.mxu0 0.0
    %3909 = vmatpush2.msra.mxu0 0.0
    %3910 = vmatprep.subr.mxu0 0.0
    %3911 = vmatpush2.msra.mxu0 0.0
    %3912 = vmatprep.subr.mxu0 0.0
    %3913 = vmatpush2.msra.mxu0 0.0
    %3914 = vmatprep.subr.mxu0 0.0
    %3915 = vmatpush2.msra.mxu0 0.0
    %3916 = vmatprep.subr.mxu0 0.0
    %3917 = vmatpush2.msra.mxu0 0.0
    %3918 = vmatprep.subr.mxu0 0.0
    %3919 = vmatpush2.msra.mxu0 0.0
    %3920 = vmatprep.subr.mxu0 0.0
    %3921 = vmatpush2.msra.mxu0 0.0
    %3922 = vmatprep.subr.mxu0 0.0
    %3923 = vmatpush2.msra.mxu0 0.0
    %3924 = vmatprep.subr.mxu0 0.0
    %3925 = vmatpush2.msra.mxu0 0.0
    %3926 = vmatprep.subr.mxu0 0.0
    %3927 = vmatpush2.msra.mxu0 0.0
    %3928 = vmatprep.subr.mxu0 0.0
    %3929 = vmatpush2.msra.mxu0 0.0
    %3930 = vmatprep.subr.mxu0 0.0
    %3931 = vmatpush2.msra.mxu0 0.0
    %3932 = vmatprep.subr.mxu0 0.0
    %3933 = vmatpush2.msra.mxu0 0.0
    %3934 = vmatprep.subr.mxu0 0.0
    %3935 = vmatpush2.msra.mxu0 0.0
    %3936 = vmatprep.mubr.f32.mxu0 0.0
    %3937 = vmatmul.mubr.f32.gmra.mxu0 %v3870
    %v3938 = vpop.f32.mrf.mxu0
    %v3939 = vadd.f32 0.0, %v3938
    %v3940 = vpop.f32.mrf.mxu0
    %3941 = vdwg.mxu0
    %v3943 = vsel %vm325, %v3863, 0
    %v3946 = vsel %vm325, %v3939, 0
    %3948 = vmatprep.subr.mxu0 0.0
    %3949 = vmatpush1.msra.mxu0 0.0
    %3950 = vmatprep.subr.mxu0 0.0
    %3951 = vmatpush1.msra.mxu0 0.0
    %3952 = vmatprep.subr.mxu0 0.0
    %3953 = vmatpush1.msra.mxu0 0.0
    %3954 = vmatprep.subr.mxu0 0.0
    %3955 = vmatpush1.msra.mxu0 0.0
    %3956 = vmatprep.subr.mxu0 0.0
    %3957 = vmatpush1.msra.mxu0 0.0
    %3958 = vmatprep.subr.mxu0 0.0
    %3959 = vmatpush1.msra.mxu0 0.0
    %3960 = vmatprep.subr.mxu0 0.0
    %3961 = vmatpush1.msra.mxu0 0.0
    %3962 = vmatprep.subr.mxu0 0.0
    %3963 = vmatpush1.msra.mxu0 0.0
    %3964 = vmatprep.subr.mxu0 0.0
    %3965 = vmatpush1.msra.mxu0 0.0
    %3966 = vmatprep.subr.mxu0 0.0
    %3967 = vmatpush1.msra.mxu0 0.0
    %3968 = vmatprep.subr.mxu0 0.0
    %3969 = vmatpush1.msra.mxu0 0.0
    %3970 = vmatprep.subr.mxu0 0.0
    %3971 = vmatpush1.msra.mxu0 0.0
    %3972 = vmatprep.subr.mxu0 0.0
    %3973 = vmatpush1.msra.mxu0 0.0
    %3974 = vmatprep.subr.mxu0 0.0
    %3975 = vmatpush1.msra.mxu0 0.0
    %3976 = vmatprep.subr.mxu0 0.0
    %3977 = vmatpush1.msra.mxu0 0.0
    %3978 = vmatprep.subr.mxu0 0.0
    %3979 = vmatpush1.msra.mxu0 %v2378
    %3980 = vmatprep.subr.mxu0 0.0
    %3981 = vmatpush2.msra.mxu0 0.0
    %3982 = vmatprep.subr.mxu0 0.0
    %3983 = vmatpush2.msra.mxu0 0.0
    %3984 = vmatprep.subr.mxu0 0.0
    %3985 = vmatpush2.msra.mxu0 0.0
    %3986 = vmatprep.subr.mxu0 0.0
    %3987 = vmatpush2.msra.mxu0 0.0
    %3988 = vmatprep.subr.mxu0 0.0
    %3989 = vmatpush2.msra.mxu0 0.0
    %3990 = vmatprep.subr.mxu0 0.0
    %3991 = vmatpush2.msra.mxu0 0.0
    %3992 = vmatprep.subr.mxu0 0.0
    %3993 = vmatpush2.msra.mxu0 0.0
    %3994 = vmatprep.subr.mxu0 0.0
    %3995 = vmatpush2.msra.mxu0 0.0
    %3996 = vmatprep.subr.mxu0 0.0
    %3997 = vmatpush2.msra.mxu0 0.0
    %3998 = vmatprep.subr.mxu0 0.0
    %3999 = vmatpush2.msra.mxu0 0.0
    %4000 = vmatprep.subr.mxu0 0.0
    %4001 = vmatpush2.msra.mxu0 0.0
    %4002 = vmatprep.subr.mxu0 0.0
    %4003 = vmatpush2.msra.mxu0 0.0
    %4004 = vmatprep.subr.mxu0 0.0
    %4005 = vmatpush2.msra.mxu0 0.0
    %4006 = vmatprep.subr.mxu0 0.0
    %4007 = vmatpush2.msra.mxu0 0.0
    %4008 = vmatprep.subr.mxu0 0.0
    %4009 = vmatpush2.msra.mxu0 0.0
    %4010 = vmatprep.subr.mxu0 0.0
    %4011 = vmatpush2.msra.mxu0 0.0
    %4012 = vmatprep.mubr.f32.mxu0 0.0
    %4013 = vmatmul.mubr.f32.gmra.mxu0 %v3943
    %v4014 = vpop.f32.mrf.mxu0
    %v4015 = vadd.f32 0.0, %v4014
    %v4016 = vpop.f32.mrf.mxu0
    %4017 = vmatprep.mubr.f32.mxu0 0.0
    %4018 = vmatmul.mubr.f32.gmra.mxu0 %v3946
    %v4019 = vpop.f32.mrf.mxu0
    %v4020 = vadd.f32 0.0, %v4019
    %v4021 = vpop.f32.mrf.mxu0
    %4022 = vdwg.mxu0
    %v4023 = vadd.f32 %v3610, %v4015
    %v4024 = vadd.f32 %v3611, %v4020
    %v4025 = vadd.f32 %v2232, %v4023
    %v4026 = vadd.f32 %v2233, %v4024
    %s4027 = scalar_lea.vmem %s8, 1
    %v4028 = vld [vmem:[%s4027] sm:$0x1]
    %v4030 = vlaneseq
    %v4031 = vshrl.u32 %v4030, 7
    %v4032 = vsub.s32 0, %v4031
    %v4033 = vrot.slane %v4028, %v4032
    %v4035 = vadd.f32 %v4025, %v4033
    %v4036 = vadd.f32 %v4026, %v4033
    %s4037 = scalar_lea.vmem %s9, 1
    %v4038 = vld [vmem:[%s4037] sm:$0x1]
    %s4039 = scalar_lea.vmem %s10, 1
    %v4040 = vld [vmem:[%s4039] sm:$0x1]
    %v4041 = vsel %vm182, %v4035, 0.0
    %4042 = vadd.xlane.f32.xlu0 %v4041
    %v4043 = vpop.xlane.xlu0 %4042
    %v4044 = vsel %vm182, %v4036, 0.0
    %4045 = vadd.xlane.f32.xlu0 %v4044
    %v4046 = vpop.xlane.xlu0 %4045
    %v4047 = vmul.f32 %v4043, %v189
    %v4048 = vmul.f32 %v4046, %v189
    %v4049 = vsub.f32 %v4035, %v4047
    %v4050 = vsub.f32 %v4036, %v4048
    %v4051 = vmul.f32 %v4049, %v4049
    %v4052 = vmul.f32 %v4050, %v4050
    %v4053 = vsel %vm182, %v4051, 0.0
    %4054 = vadd.xlane.f32.xlu0 %v4053
    %v4055 = vpop.xlane.xlu0 %4054
    %v4056 = vsel %vm182, %v4052, 0.0
    %4057 = vadd.xlane.f32.xlu0 %v4056
    %v4058 = vpop.xlane.xlu0 %4057
    %v4059 = vmul.f32 %v4055, %v189
    %v4060 = vmul.f32 %v4058, %v189
    %v4061 = vadd.f32 %v4059, 1e-06
    %v4062 = vadd.f32 %v4060, 1e-06
    %v4063 = vrsqrt.pop %v4061
    %v4064 = vrsqrt.pop %v4062
    %v4065 = vmul.f32 %v4049, %v4063
    %v4066 = vmul.f32 %v4050, %v4064
    %v4068 = vlaneseq
    %v4069 = vshrl.u32 %v4068, 7
    %v4070 = vsub.s32 0, %v4069
    %v4071 = vrot.slane %v4038, %v4070
    %v4073 = vmul.f32 %v4065, %v4071
    %v4074 = vmul.f32 %v4066, %v4071
    %v4076 = vlaneseq
    %v4077 = vshrl.u32 %v4076, 7
    %v4078 = vsub.s32 0, %v4077
    %v4079 = vrot.slane %v4040, %v4078
    %v4081 = vadd.f32 %v4073, %v4079
    %v4082 = vadd.f32 %v4074, %v4079
    %s4083 = scalar_lea.vmem [#allocation5], 32
    %v4084 = vld [vmem:[%s4083] sm:$0xff]
    %v4085 = vld [vmem:[%s4083 + $0x8] sm:$0xff]
    %v4086 = vld [vmem:[%s4083 + $0x10] sm:$0xff]
    %v4087 = vld [vmem:[%s4083 + $0x18] sm:$0xff]
    %s4088 = scalar_lea.vmem %s12, 1
    %v4089 = vld [vmem:[%s4088] sm:$0x1]
    %v4091 = vlaneseq
    %v4092 = vshrl.u32 %v4091, 7
    %v4093 = vsub.s32 0, %v4092
    %v4094 = vrot.slane %v4089, %v4093
    %v4097 = vsel %vm182, %v4081, 0
    %v4100 = vsel %vm182, %v4082, 0
    %4102 = vmatprep.subr.mxu0 0.0
    %4103 = vmatpush1.msra.mxu0 0.0
    %4104 = vmatprep.subr.mxu0 0.0
    %4105 = vmatpush1.msra.mxu0 0.0
    %4106 = vmatprep.subr.mxu0 0.0
    %4107 = vmatpush1.msra.mxu0 0.0
    %4108 = vmatprep.subr.mxu0 0.0
    %4109 = vmatpush1.msra.mxu0 0.0
    %4110 = vmatprep.subr.mxu0 0.0
    %4111 = vmatpush1.msra.mxu0 0.0
    %4112 = vmatprep.subr.mxu0 0.0
    %4113 = vmatpush1.msra.mxu0 0.0
    %4114 = vmatprep.subr.mxu0 0.0
    %4115 = vmatpush1.msra.mxu0 0.0
    %4116 = vmatprep.subr.mxu0 0.0
    %4117 = vmatpush1.msra.mxu0 0.0
    %4118 = vmatprep.subr.mxu0 0.0
    %4119 = vmatpush1.msra.mxu0 0.0
    %4120 = vmatprep.subr.mxu0 0.0
    %4121 = vmatpush1.msra.mxu0 0.0
    %4122 = vmatprep.subr.mxu0 0.0
    %4123 = vmatpush1.msra.mxu0 0.0
    %4124 = vmatprep.subr.mxu0 0.0
    %4125 = vmatpush1.msra.mxu0 0.0
    %4126 = vmatprep.subr.mxu0 0.0
    %4127 = vmatpush1.msra.mxu0 %v4087
    %4128 = vmatprep.subr.mxu0 0.0
    %4129 = vmatpush1.msra.mxu0 %v4086
    %4130 = vmatprep.subr.mxu0 0.0
    %4131 = vmatpush1.msra.mxu0 %v4085
    %4132 = vmatprep.subr.mxu0 0.0
    %4133 = vmatpush1.msra.mxu0 %v4084
    %4134 = vmatprep.subr.mxu0 0.0
    %4135 = vmatpush2.msra.mxu0 0.0
    %4136 = vmatprep.subr.mxu0 0.0
    %4137 = vmatpush2.msra.mxu0 0.0
    %4138 = vmatprep.subr.mxu0 0.0
    %4139 = vmatpush2.msra.mxu0 0.0
    %4140 = vmatprep.subr.mxu0 0.0
    %4141 = vmatpush2.msra.mxu0 0.0
    %4142 = vmatprep.subr.mxu0 0.0
    %4143 = vmatpush2.msra.mxu0 0.0
    %4144 = vmatprep.subr.mxu0 0.0
    %4145 = vmatpush2.msra.mxu0 0.0
    %4146 = vmatprep.subr.mxu0 0.0
    %4147 = vmatpush2.msra.mxu0 0.0
    %4148 = vmatprep.subr.mxu0 0.0
    %4149 = vmatpush2.msra.mxu0 0.0
    %4150 = vmatprep.subr.mxu0 0.0
    %4151 = vmatpush2.msra.mxu0 0.0
    %4152 = vmatprep.subr.mxu0 0.0
    %4153 = vmatpush2.msra.mxu0 0.0
    %4154 = vmatprep.subr.mxu0 0.0
    %4155 = vmatpush2.msra.mxu0 0.0
    %4156 = vmatprep.subr.mxu0 0.0
    %4157 = vmatpush2.msra.mxu0 0.0
    %4158 = vmatprep.subr.mxu0 0.0
    %4159 = vmatpush2.msra.mxu0 0.0
    %4160 = vmatprep.subr.mxu0 0.0
    %4161 = vmatpush2.msra.mxu0 0.0
    %4162 = vmatprep.subr.mxu0 0.0
    %4163 = vmatpush2.msra.mxu0 0.0
    %4164 = vmatprep.subr.mxu0 0.0
    %4165 = vmatpush2.msra.mxu0 0.0
    %4166 = vmatprep.mubr.f32.mxu0 0.0
    %4167 = vmatmul.mubr.f32.gmra.mxu0 %v4097
    %v4168 = vpop.f32.mrf.mxu0
    %v4169 = vadd.f32 %v4094, %v4168
    %v4170 = vpop.f32.mrf.mxu0
    %4171 = vmatprep.mubr.f32.mxu0 0.0
    %4172 = vmatmul.mubr.f32.gmra.mxu0 %v4100
    %v4173 = vpop.f32.mrf.mxu0
    %v4174 = vadd.f32 %v4094, %v4173
    %v4175 = vpop.f32.mrf.mxu0
    %4176 = vdwg.mxu0
    %v4177 = vmul.f32 %v4169, 0.5
    %v4178 = vmul.f32 %v4174, 0.5
    %v4179 = vmul.f32 %v4169, 0.044715
    %v4180 = vmul.f32 %v4174, 0.044715
    %v4181 = vmul.f32 %v4179, %v4169
    %v4182 = vmul.f32 %v4180, %v4174
    %v4183 = vmul.f32 %v4181, %v4169
    %v4184 = vmul.f32 %v4182, %v4174
    %v4185 = vadd.f32 %v4169, %v4183
    %v4186 = vadd.f32 %v4174, %v4184
    %v4187 = vmul.f32 %v4185, 0.7978846
    %v4188 = vmul.f32 %v4186, 0.7978846
    %v4189 = vtanh.pop %v4187
    %v4190 = vtanh.pop %v4188
    %v4191 = vadd.f32 %v4189, 1.0
    %v4192 = vadd.f32 %v4190, 1.0
    %v4193 = vmul.f32 %v4177, %v4191
    %v4194 = vmul.f32 %v4178, %v4192
    %s4195 = scalar_lea.vmem %s13, 128
    %v4196 = vld [vmem:[%s4195] sm:$0xff]
    %v4197 = vld [vmem:[%s4195 + $0x8] sm:$0xff]
    %v4198 = vld [vmem:[%s4195 + $0x10] sm:$0xff]
    %v4199 = vld [vmem:[%s4195 + $0x18] sm:$0xff]
    %v4200 = vld [vmem:[%s4195 + $0x20] sm:$0xff]
    %v4201 = vld [vmem:[%s4195 + $0x28] sm:$0xff]
    %v4202 = vld [vmem:[%s4195 + $0x30] sm:$0xff]
    %v4203 = vld [vmem:[%s4195 + $0x38] sm:$0xff]
    %v4204 = vld [vmem:[%s4195 + $0x40] sm:$0xff]
    %v4205 = vld [vmem:[%s4195 + $0x48] sm:$0xff]
    %v4206 = vld [vmem:[%s4195 + $0x50] sm:$0xff]
    %v4207 = vld [vmem:[%s4195 + $0x58] sm:$0xff]
    %v4208 = vld [vmem:[%s4195 + $0x60] sm:$0xff]
    %v4209 = vld [vmem:[%s4195 + $0x68] sm:$0xff]
    %v4210 = vld [vmem:[%s4195 + $0x70] sm:$0xff]
    %v4211 = vld [vmem:[%s4195 + $0x78] sm:$0xff]
    %s4212 = scalar_lea.vmem %s14, 1
    %v4213 = vld [vmem:[%s4212] sm:$0x1]
    %v4215 = vlaneseq
    %v4216 = vshrl.u32 %v4215, 7
    %v4217 = vsub.s32 0, %v4216
    %v4218 = vrot.slane %v4213, %v4217
    %4220 = vmatprep.subr.mxu0 0.0
    %4221 = vmatpush1.msra.mxu0 %v4211
    %4222 = vmatprep.subr.mxu0 0.0
    %4223 = vmatpush1.msra.mxu0 %v4210
    %4224 = vmatprep.subr.mxu0 0.0
    %4225 = vmatpush1.msra.mxu0 %v4209
    %4226 = vmatprep.subr.mxu0 0.0
    %4227 = vmatpush1.msra.mxu0 %v4208
    %4228 = vmatprep.subr.mxu0 0.0
    %4229 = vmatpush1.msra.mxu0 %v4207
    %4230 = vmatprep.subr.mxu0 0.0
    %4231 = vmatpush1.msra.mxu0 %v4206
    %4232 = vmatprep.subr.mxu0 0.0
    %4233 = vmatpush1.msra.mxu0 %v4205
    %4234 = vmatprep.subr.mxu0 0.0
    %4235 = vmatpush1.msra.mxu0 %v4204
    %4236 = vmatprep.subr.mxu0 0.0
    %4237 = vmatpush1.msra.mxu0 %v4203
    %4238 = vmatprep.subr.mxu0 0.0
    %4239 = vmatpush1.msra.mxu0 %v4202
    %4240 = vmatprep.subr.mxu0 0.0
    %4241 = vmatpush1.msra.mxu0 %v4201
    %4242 = vmatprep.subr.mxu0 0.0
    %4243 = vmatpush1.msra.mxu0 %v4200
    %4244 = vmatprep.subr.mxu0 0.0
    %4245 = vmatpush1.msra.mxu0 %v4199
    %4246 = vmatprep.subr.mxu0 0.0
    %4247 = vmatpush1.msra.mxu0 %v4198
    %4248 = vmatprep.subr.mxu0 0.0
    %4249 = vmatpush1.msra.mxu0 %v4197
    %4250 = vmatprep.subr.mxu0 0.0
    %4251 = vmatpush1.msra.mxu0 %v4196
    %4252 = vmatprep.subr.mxu0 0.0
    %4253 = vmatpush2.msra.mxu0 0.0
    %4254 = vmatprep.subr.mxu0 0.0
    %4255 = vmatpush2.msra.mxu0 0.0
    %4256 = vmatprep.subr.mxu0 0.0
    %4257 = vmatpush2.msra.mxu0 0.0
    %4258 = vmatprep.subr.mxu0 0.0
    %4259 = vmatpush2.msra.mxu0 0.0
    %4260 = vmatprep.subr.mxu0 0.0
    %4261 = vmatpush2.msra.mxu0 0.0
    %4262 = vmatprep.subr.mxu0 0.0
    %4263 = vmatpush2.msra.mxu0 0.0
    %4264 = vmatprep.subr.mxu0 0.0
    %4265 = vmatpush2.msra.mxu0 0.0
    %4266 = vmatprep.subr.mxu0 0.0
    %4267 = vmatpush2.msra.mxu0 0.0
    %4268 = vmatprep.subr.mxu0 0.0
    %4269 = vmatpush2.msra.mxu0 0.0
    %4270 = vmatprep.subr.mxu0 0.0
    %4271 = vmatpush2.msra.mxu0 0.0
    %4272 = vmatprep.subr.mxu0 0.0
    %4273 = vmatpush2.msra.mxu0 0.0
    %4274 = vmatprep.subr.mxu0 0.0
    %4275 = vmatpush2.msra.mxu0 0.0
    %4276 = vmatprep.subr.mxu0 0.0
    %4277 = vmatpush2.msra.mxu0 0.0
    %4278 = vmatprep.subr.mxu0 0.0
    %4279 = vmatpush2.msra.mxu0 0.0
    %4280 = vmatprep.subr.mxu0 0.0
    %4281 = vmatpush2.msra.mxu0 0.0
    %4282 = vmatprep.subr.mxu0 0.0
    %4283 = vmatpush2.msra.mxu0 0.0
    %4284 = vmatprep.mubr.f32.mxu0 0.0
    %4285 = vmatmul.mubr.f32.gmra.mxu0 %v4193
    %v4286 = vpop.f32.mrf.mxu0
    %v4287 = vadd.f32 %v4218, %v4286
    %v4288 = vpop.f32.mrf.mxu0
    %4289 = vmatprep.mubr.f32.mxu0 0.0
    %4290 = vmatmul.mubr.f32.gmra.mxu0 %v4194
    %v4291 = vpop.f32.mrf.mxu0
    %v4292 = vadd.f32 %v4218, %v4291
    %v4293 = vpop.f32.mrf.mxu0
    %4294 = vdwg.mxu0
    %v4295 = vadd.f32 %v4035, %v4287
    %v4296 = vadd.f32 %v4036, %v4292
    %4297 = vst.msk [vmem:[#allocation7] sm:$0xff] %vm182, %v4295
    %4298 = vst.msk [vmem:[#allocation7 + $0x8] sm:$0xff] %vm182, %v4296
    %v4299 = vld [vmem:[%s15] sm:$0xff]
    %v4300 = vld [vmem:[%s15 + $0x8] sm:$0xff]
    %v4301 = vld [vmem:[%s15 + $0x10] sm:$0xff]
    %v4302 = vld [vmem:[%s15 + $0x18] sm:$0xff]
    %s4303 = scalar_lea.vmem %s15, 32
    %v4304 = vld [vmem:[%s4303] sm:$0xff]
    %v4305 = vld [vmem:[%s4303 + $0x8] sm:$0xff]
    %v4306 = vld [vmem:[%s4303 + $0x10] sm:$0xff]
    %v4307 = vld [vmem:[%s4303 + $0x18] sm:$0xff]
    %v4310 = vrot.slane %v4295, 1
    %vm4311 = vcmask 1041409
    %v4312 = vsel %vm4311, %v4296, %v4310
    %v4313 = vsel %vm182, %v4312, 0
    %4315 = vmatprep.subr.mxu0 0.0
    %4316 = vmatpush1.msra.mxu0 0.0
    %4317 = vmatprep.subr.mxu0 0.0
    %4318 = vmatpush1.msra.mxu0 0.0
    %4319 = vmatprep.subr.mxu0 0.0
    %4320 = vmatpush1.msra.mxu0 0.0
    %4321 = vmatprep.subr.mxu0 0.0
    %4322 = vmatpush1.msra.mxu0 0.0
    %4323 = vmatprep.subr.mxu0 0.0
    %4324 = vmatpush1.msra.mxu0 0.0
    %4325 = vmatprep.subr.mxu0 0.0
    %4326 = vmatpush1.msra.mxu0 0.0
    %4327 = vmatprep.subr.mxu0 0.0
    %4328 = vmatpush1.msra.mxu0 0.0
    %4329 = vmatprep.subr.mxu0 0.0
    %4330 = vmatpush1.msra.mxu0 0.0
    %4331 = vmatprep.subr.mxu0 0.0
    %4332 = vmatpush1.msra.mxu0 0.0
    %4333 = vmatprep.subr.mxu0 0.0
    %4334 = vmatpush1.msra.mxu0 0.0
    %4335 = vmatprep.subr.mxu0 0.0
    %4336 = vmatpush1.msra.mxu0 0.0
    %4337 = vmatprep.subr.mxu0 0.0
    %4338 = vmatpush1.msra.mxu0 0.0
    %4339 = vmatprep.subr.mxu0 0.0
    %4340 = vmatpush1.msra.mxu0 %v4307
    %4341 = vmatprep.subr.mxu0 0.0
    %4342 = vmatpush1.msra.mxu0 %v4306
    %4343 = vmatprep.subr.mxu0 0.0
    %4344 = vmatpush1.msra.mxu0 %v4305
    %4345 = vmatprep.subr.mxu0 0.0
    %4346 = vmatpush1.msra.mxu0 %v4304
    %4347 = vmatprep.subr.mxu0 0.0
    %4348 = vmatpush2.msra.mxu0 0.0
    %4349 = vmatprep.subr.mxu0 0.0
    %4350 = vmatpush2.msra.mxu0 0.0
    %4351 = vmatprep.subr.mxu0 0.0
    %4352 = vmatpush2.msra.mxu0 0.0
    %4353 = vmatprep.subr.mxu0 0.0
    %4354 = vmatpush2.msra.mxu0 0.0
    %4355 = vmatprep.subr.mxu0 0.0
    %4356 = vmatpush2.msra.mxu0 0.0
    %4357 = vmatprep.subr.mxu0 0.0
    %4358 = vmatpush2.msra.mxu0 0.0
    %4359 = vmatprep.subr.mxu0 0.0
    %4360 = vmatpush2.msra.mxu0 0.0
    %4361 = vmatprep.subr.mxu0 0.0
    %4362 = vmatpush2.msra.mxu0 0.0
    %4363 = vmatprep.subr.mxu0 0.0
    %4364 = vmatpush2.msra.mxu0 0.0
    %4365 = vmatprep.subr.mxu0 0.0
    %4366 = vmatpush2.msra.mxu0 0.0
    %4367 = vmatprep.subr.mxu0 0.0
    %4368 = vmatpush2.msra.mxu0 0.0
    %4369 = vmatprep.subr.mxu0 0.0
    %4370 = vmatpush2.msra.mxu0 0.0
    %4371 = vmatprep.subr.mxu0 0.0
    %4372 = vmatpush2.msra.mxu0 0.0
    %4373 = vmatprep.subr.mxu0 0.0
    %4374 = vmatpush2.msra.mxu0 0.0
    %4375 = vmatprep.subr.mxu0 0.0
    %4376 = vmatpush2.msra.mxu0 0.0
    %4377 = vmatprep.subr.mxu0 0.0
    %4378 = vmatpush2.msra.mxu0 0.0
    %4379 = vmatprep.mubr.f32.mxu0 0.0
    %4380 = vmatmul.mubr.f32.gmra.mxu0 %v4313
    %v4381 = vpop.f32.mrf.mxu0
    %v4382 = vadd.f32 0.0, %v4381
    %v4383 = vpop.f32.mrf.mxu0
    %4384 = vdwg.mxu0
    %v4385 = vrot.slane %v4296, 7
    %v4386 = vsel %vm4311, %v4385, %v4295
    %v4387 = vsel %vm182, %v4386, 0
    %4389 = vmatprep.subr.mxu0 0.0
    %4390 = vmatpush1.msra.mxu0 0.0
    %4391 = vmatprep.subr.mxu0 0.0
    %4392 = vmatpush1.msra.mxu0 0.0
    %4393 = vmatprep.subr.mxu0 0.0
    %4394 = vmatpush1.msra.mxu0 0.0
    %4395 = vmatprep.subr.mxu0 0.0
    %4396 = vmatpush1.msra.mxu0 0.0
    %4397 = vmatprep.subr.mxu0 0.0
    %4398 = vmatpush1.msra.mxu0 0.0
    %4399 = vmatprep.subr.mxu0 0.0
    %4400 = vmatpush1.msra.mxu0 0.0
    %4401 = vmatprep.subr.mxu0 0.0
    %4402 = vmatpush1.msra.mxu0 0.0
    %4403 = vmatprep.subr.mxu0 0.0
    %4404 = vmatpush1.msra.mxu0 0.0
    %4405 = vmatprep.subr.mxu0 0.0
    %4406 = vmatpush1.msra.mxu0 0.0
    %4407 = vmatprep.subr.mxu0 0.0
    %4408 = vmatpush1.msra.mxu0 0.0
    %4409 = vmatprep.subr.mxu0 0.0
    %4410 = vmatpush1.msra.mxu0 0.0
    %4411 = vmatprep.subr.mxu0 0.0
    %4412 = vmatpush1.msra.mxu0 0.0
    %4413 = vmatprep.subr.mxu0 0.0
    %4414 = vmatpush1.msra.mxu0 %v4302
    %4415 = vmatprep.subr.mxu0 0.0
    %4416 = vmatpush1.msra.mxu0 %v4301
    %4417 = vmatprep.subr.mxu0 0.0
    %4418 = vmatpush1.msra.mxu0 %v4300
    %4419 = vmatprep.subr.mxu0 0.0
    %4420 = vmatpush1.msra.mxu0 %v4299
    %4421 = vmatprep.subr.mxu0 0.0
    %4422 = vmatpush2.msra.mxu0 0.0
    %4423 = vmatprep.subr.mxu0 0.0
    %4424 = vmatpush2.msra.mxu0 0.0
    %4425 = vmatprep.subr.mxu0 0.0
    %4426 = vmatpush2.msra.mxu0 0.0
    %4427 = vmatprep.subr.mxu0 0.0
    %4428 = vmatpush2.msra.mxu0 0.0
    %4429 = vmatprep.subr.mxu0 0.0
    %4430 = vmatpush2.msra.mxu0 0.0
    %4431 = vmatprep.subr.mxu0 0.0
    %4432 = vmatpush2.msra.mxu0 0.0
    %4433 = vmatprep.subr.mxu0 0.0
    %4434 = vmatpush2.msra.mxu0 0.0
    %4435 = vmatprep.subr.mxu0 0.0
    %4436 = vmatpush2.msra.mxu0 0.0
    %4437 = vmatprep.subr.mxu0 0.0
    %4438 = vmatpush2.msra.mxu0 0.0
    %4439 = vmatprep.subr.mxu0 0.0
    %4440 = vmatpush2.msra.mxu0 0.0
    %4441 = vmatprep.subr.mxu0 0.0
    %4442 = vmatpush2.msra.mxu0 0.0
    %4443 = vmatprep.subr.mxu0 0.0
    %4444 = vmatpush2.msra.mxu0 0.0
    %4445 = vmatprep.subr.mxu0 0.0
    %4446 = vmatpush2.msra.mxu0 0.0
    %4447 = vmatprep.subr.mxu0 0.0
    %4448 = vmatpush2.msra.mxu0 0.0
    %4449 = vmatprep.subr.mxu0 0.0
    %4450 = vmatpush2.msra.mxu0 0.0
    %4451 = vmatprep.subr.mxu0 0.0
    %4452 = vmatpush2.msra.mxu0 0.0
    %4453 = vmatprep.mubr.f32.mxu0 0.0
    %4454 = vmatmul.mubr.f32.gmra.mxu0 %v4387
    %v4455 = vpop.f32.mrf.mxu0
    %v4456 = vadd.f32 %v4382, %v4455
    %v4457 = vpop.f32.mrf.mxu0
    %4458 = vdwg.mxu0
    %s4459 = scalar_lea.vmem %s15, 64
    %v4460 = vld [vmem:[%s4459] sm:$0xff]
    %v4461 = vld [vmem:[%s4459 + $0x8] sm:$0xff]
    %v4462 = vld [vmem:[%s4459 + $0x10] sm:$0xff]
    %v4463 = vld [vmem:[%s4459 + $0x18] sm:$0xff]
    %v4464 = vrot.slane %v4295, 2
    %v4465 = vrot.slane %v4296, 1
    %v4466 = vsel %vm4311, %v4465, %v4464
    %v4467 = vsel %vm182, %v4466, 0
    %4469 = vmatprep.subr.mxu0 0.0
    %4470 = vmatpush1.msra.mxu0 0.0
    %4471 = vmatprep.subr.mxu0 0.0
    %4472 = vmatpush1.msra.mxu0 0.0
    %4473 = vmatprep.subr.mxu0 0.0
    %4474 = vmatpush1.msra.mxu0 0.0
    %4475 = vmatprep.subr.mxu0 0.0
    %4476 = vmatpush1.msra.mxu0 0.0
    %4477 = vmatprep.subr.mxu0 0.0
    %4478 = vmatpush1.msra.mxu0 0.0
    %4479 = vmatprep.subr.mxu0 0.0
    %4480 = vmatpush1.msra.mxu0 0.0
    %4481 = vmatprep.subr.mxu0 0.0
    %4482 = vmatpush1.msra.mxu0 0.0
    %4483 = vmatprep.subr.mxu0 0.0
    %4484 = vmatpush1.msra.mxu0 0.0
    %4485 = vmatprep.subr.mxu0 0.0
    %4486 = vmatpush1.msra.mxu0 0.0
    %4487 = vmatprep.subr.mxu0 0.0
    %4488 = vmatpush1.msra.mxu0 0.0
    %4489 = vmatprep.subr.mxu0 0.0
    %4490 = vmatpush1.msra.mxu0 0.0
    %4491 = vmatprep.subr.mxu0 0.0
    %4492 = vmatpush1.msra.mxu0 0.0
    %4493 = vmatprep.subr.mxu0 0.0
    %4494 = vmatpush1.msra.mxu0 %v4463
    %4495 = vmatprep.subr.mxu0 0.0
    %4496 = vmatpush1.msra.mxu0 %v4462
    %4497 = vmatprep.subr.mxu0 0.0
    %4498 = vmatpush1.msra.mxu0 %v4461
    %4499 = vmatprep.subr.mxu0 0.0
    %4500 = vmatpush1.msra.mxu0 %v4460
    %4501 = vmatprep.subr.mxu0 0.0
    %4502 = vmatpush2.msra.mxu0 0.0
    %4503 = vmatprep.subr.mxu0 0.0
    %4504 = vmatpush2.msra.mxu0 0.0
    %4505 = vmatprep.subr.mxu0 0.0
    %4506 = vmatpush2.msra.mxu0 0.0
    %4507 = vmatprep.subr.mxu0 0.0
    %4508 = vmatpush2.msra.mxu0 0.0
    %4509 = vmatprep.subr.mxu0 0.0
    %4510 = vmatpush2.msra.mxu0 0.0
    %4511 = vmatprep.subr.mxu0 0.0
    %4512 = vmatpush2.msra.mxu0 0.0
    %4513 = vmatprep.subr.mxu0 0.0
    %4514 = vmatpush2.msra.mxu0 0.0
    %4515 = vmatprep.subr.mxu0 0.0
    %4516 = vmatpush2.msra.mxu0 0.0
    %4517 = vmatprep.subr.mxu0 0.0
    %4518 = vmatpush2.msra.mxu0 0.0
    %4519 = vmatprep.subr.mxu0 0.0
    %4520 = vmatpush2.msra.mxu0 0.0
    %4521 = vmatprep.subr.mxu0 0.0
    %4522 = vmatpush2.msra.mxu0 0.0
    %4523 = vmatprep.subr.mxu0 0.0
    %4524 = vmatpush2.msra.mxu0 0.0
    %4525 = vmatprep.subr.mxu0 0.0
    %4526 = vmatpush2.msra.mxu0 0.0
    %4527 = vmatprep.subr.mxu0 0.0
    %4528 = vmatpush2.msra.mxu0 0.0
    %4529 = vmatprep.subr.mxu0 0.0
    %4530 = vmatpush2.msra.mxu0 0.0
    %4531 = vmatprep.subr.mxu0 0.0
    %4532 = vmatpush2.msra.mxu0 0.0
    %4533 = vmatprep.mubr.f32.mxu0 0.0
    %4534 = vmatmul.mubr.f32.gmra.mxu0 %v4467
    %v4535 = vpop.f32.mrf.mxu0
    %v4536 = vadd.f32 0.0, %v4535
    %v4537 = vpop.f32.mrf.mxu0
    %4538 = vdwg.mxu0
    %v4539 = vadd.f32 %v4456, %v4536
    %s4540 = scalar_lea.vmem %s15, 96
    %v4541 = vld [vmem:[%s4540] sm:$0xff]
    %v4542 = vld [vmem:[%s4540 + $0x8] sm:$0xff]
    %v4543 = vld [vmem:[%s4540 + $0x10] sm:$0xff]
    %v4544 = vld [vmem:[%s4540 + $0x18] sm:$0xff]
    %v4545 = vrot.slane %v4295, 3
    %v4546 = vrot.slane %v4296, 2
    %v4547 = vsel %vm4311, %v4546, %v4545
    %v4548 = vsel %vm182, %v4547, 0
    %4550 = vmatprep.subr.mxu0 0.0
    %4551 = vmatpush1.msra.mxu0 0.0
    %4552 = vmatprep.subr.mxu0 0.0
    %4553 = vmatpush1.msra.mxu0 0.0
    %4554 = vmatprep.subr.mxu0 0.0
    %4555 = vmatpush1.msra.mxu0 0.0
    %4556 = vmatprep.subr.mxu0 0.0
    %4557 = vmatpush1.msra.mxu0 0.0
    %4558 = vmatprep.subr.mxu0 0.0
    %4559 = vmatpush1.msra.mxu0 0.0
    %4560 = vmatprep.subr.mxu0 0.0
    %4561 = vmatpush1.msra.mxu0 0.0
    %4562 = vmatprep.subr.mxu0 0.0
    %4563 = vmatpush1.msra.mxu0 0.0
    %4564 = vmatprep.subr.mxu0 0.0
    %4565 = vmatpush1.msra.mxu0 0.0
    %4566 = vmatprep.subr.mxu0 0.0
    %4567 = vmatpush1.msra.mxu0 0.0
    %4568 = vmatprep.subr.mxu0 0.0
    %4569 = vmatpush1.msra.mxu0 0.0
    %4570 = vmatprep.subr.mxu0 0.0
    %4571 = vmatpush1.msra.mxu0 0.0
    %4572 = vmatprep.subr.mxu0 0.0
    %4573 = vmatpush1.msra.mxu0 0.0
    %4574 = vmatprep.subr.mxu0 0.0
    %4575 = vmatpush1.msra.mxu0 %v4544
    %4576 = vmatprep.subr.mxu0 0.0
    %4577 = vmatpush1.msra.mxu0 %v4543
    %4578 = vmatprep.subr.mxu0 0.0
    %4579 = vmatpush1.msra.mxu0 %v4542
    %4580 = vmatprep.subr.mxu0 0.0
    %4581 = vmatpush1.msra.mxu0 %v4541
    %4582 = vmatprep.subr.mxu0 0.0
    %4583 = vmatpush2.msra.mxu0 0.0
    %4584 = vmatprep.subr.mxu0 0.0
    %4585 = vmatpush2.msra.mxu0 0.0
    %4586 = vmatprep.subr.mxu0 0.0
    %4587 = vmatpush2.msra.mxu0 0.0
    %4588 = vmatprep.subr.mxu0 0.0
    %4589 = vmatpush2.msra.mxu0 0.0
    %4590 = vmatprep.subr.mxu0 0.0
    %4591 = vmatpush2.msra.mxu0 0.0
    %4592 = vmatprep.subr.mxu0 0.0
    %4593 = vmatpush2.msra.mxu0 0.0
    %4594 = vmatprep.subr.mxu0 0.0
    %4595 = vmatpush2.msra.mxu0 0.0
    %4596 = vmatprep.subr.mxu0 0.0
    %4597 = vmatpush2.msra.mxu0 0.0
    %4598 = vmatprep.subr.mxu0 0.0
    %4599 = vmatpush2.msra.mxu0 0.0
    %4600 = vmatprep.subr.mxu0 0.0
    %4601 = vmatpush2.msra.mxu0 0.0
    %4602 = vmatprep.subr.mxu0 0.0
    %4603 = vmatpush2.msra.mxu0 0.0
    %4604 = vmatprep.subr.mxu0 0.0
    %4605 = vmatpush2.msra.mxu0 0.0
    %4606 = vmatprep.subr.mxu0 0.0
    %4607 = vmatpush2.msra.mxu0 0.0
    %4608 = vmatprep.subr.mxu0 0.0
    %4609 = vmatpush2.msra.mxu0 0.0
    %4610 = vmatprep.subr.mxu0 0.0
    %4611 = vmatpush2.msra.mxu0 0.0
    %4612 = vmatprep.subr.mxu0 0.0
    %4613 = vmatpush2.msra.mxu0 0.0
    %4614 = vmatprep.mubr.f32.mxu0 0.0
    %4615 = vmatmul.mubr.f32.gmra.mxu0 %v4548
    %v4616 = vpop.f32.mrf.mxu0
    %v4617 = vadd.f32 0.0, %v4616
    %v4618 = vpop.f32.mrf.mxu0
    %4619 = vdwg.mxu0
    %v4620 = vadd.f32 %v4539, %v4617
    %s4621 = scalar_lea.vmem %s15, 128
    %v4622 = vld [vmem:[%s4621] sm:$0xff]
    %v4623 = vld [vmem:[%s4621 + $0x8] sm:$0xff]
    %v4624 = vld [vmem:[%s4621 + $0x10] sm:$0xff]
    %v4625 = vld [vmem:[%s4621 + $0x18] sm:$0xff]
    %v4626 = vrot.slane %v4295, 4
    %v4627 = vrot.slane %v4296, 3
    %v4628 = vsel %vm4311, %v4627, %v4626
    %v4629 = vsel %vm182, %v4628, 0
    %4631 = vmatprep.subr.mxu0 0.0
    %4632 = vmatpush1.msra.mxu0 0.0
    %4633 = vmatprep.subr.mxu0 0.0
    %4634 = vmatpush1.msra.mxu0 0.0
    %4635 = vmatprep.subr.mxu0 0.0
    %4636 = vmatpush1.msra.mxu0 0.0
    %4637 = vmatprep.subr.mxu0 0.0
    %4638 = vmatpush1.msra.mxu0 0.0
    %4639 = vmatprep.subr.mxu0 0.0
    %4640 = vmatpush1.msra.mxu0 0.0
    %4641 = vmatprep.subr.mxu0 0.0
    %4642 = vmatpush1.msra.mxu0 0.0
    %4643 = vmatprep.subr.mxu0 0.0
    %4644 = vmatpush1.msra.mxu0 0.0
    %4645 = vmatprep.subr.mxu0 0.0
    %4646 = vmatpush1.msra.mxu0 0.0
    %4647 = vmatprep.subr.mxu0 0.0
    %4648 = vmatpush1.msra.mxu0 0.0
    %4649 = vmatprep.subr.mxu0 0.0
    %4650 = vmatpush1.msra.mxu0 0.0
    %4651 = vmatprep.subr.mxu0 0.0
    %4652 = vmatpush1.msra.mxu0 0.0
    %4653 = vmatprep.subr.mxu0 0.0
    %4654 = vmatpush1.msra.mxu0 0.0
    %4655 = vmatprep.subr.mxu0 0.0
    %4656 = vmatpush1.msra.mxu0 %v4625
    %4657 = vmatprep.subr.mxu0 0.0
    %4658 = vmatpush1.msra.mxu0 %v4624
    %4659 = vmatprep.subr.mxu0 0.0
    %4660 = vmatpush1.msra.mxu0 %v4623
    %4661 = vmatprep.subr.mxu0 0.0
    %4662 = vmatpush1.msra.mxu0 %v4622
    %4663 = vmatprep.subr.mxu0 0.0
    %4664 = vmatpush2.msra.mxu0 0.0
    %4665 = vmatprep.subr.mxu0 0.0
    %4666 = vmatpush2.msra.mxu0 0.0
    %4667 = vmatprep.subr.mxu0 0.0
    %4668 = vmatpush2.msra.mxu0 0.0
    %4669 = vmatprep.subr.mxu0 0.0
    %4670 = vmatpush2.msra.mxu0 0.0
    %4671 = vmatprep.subr.mxu0 0.0
    %4672 = vmatpush2.msra.mxu0 0.0
    %4673 = vmatprep.subr.mxu0 0.0
    %4674 = vmatpush2.msra.mxu0 0.0
    %4675 = vmatprep.subr.mxu0 0.0
    %4676 = vmatpush2.msra.mxu0 0.0
    %4677 = vmatprep.subr.mxu0 0.0
    %4678 = vmatpush2.msra.mxu0 0.0
    %4679 = vmatprep.subr.mxu0 0.0
    %4680 = vmatpush2.msra.mxu0 0.0
    %4681 = vmatprep.subr.mxu0 0.0
    %4682 = vmatpush2.msra.mxu0 0.0
    %4683 = vmatprep.subr.mxu0 0.0
    %4684 = vmatpush2.msra.mxu0 0.0
    %4685 = vmatprep.subr.mxu0 0.0
    %4686 = vmatpush2.msra.mxu0 0.0
    %4687 = vmatprep.subr.mxu0 0.0
    %4688 = vmatpush2.msra.mxu0 0.0
    %4689 = vmatprep.subr.mxu0 0.0
    %4690 = vmatpush2.msra.mxu0 0.0
    %4691 = vmatprep.subr.mxu0 0.0
    %4692 = vmatpush2.msra.mxu0 0.0
    %4693 = vmatprep.subr.mxu0 0.0
    %4694 = vmatpush2.msra.mxu0 0.0
    %4695 = vmatprep.mubr.f32.mxu0 0.0
    %4696 = vmatmul.mubr.f32.gmra.mxu0 %v4629
    %v4697 = vpop.f32.mrf.mxu0
    %v4698 = vadd.f32 0.0, %v4697
    %v4699 = vpop.f32.mrf.mxu0
    %4700 = vdwg.mxu0
    %v4701 = vadd.f32 %v4620, %v4698
    %s4702 = scalar_lea.vmem %s15, 160
    %v4703 = vld [vmem:[%s4702] sm:$0xff]
    %v4704 = vld [vmem:[%s4702 + $0x8] sm:$0xff]
    %v4705 = vld [vmem:[%s4702 + $0x10] sm:$0xff]
    %v4706 = vld [vmem:[%s4702 + $0x18] sm:$0xff]
    %v4707 = vrot.slane %v4295, 5
    %v4708 = vrot.slane %v4296, 4
    %v4709 = vsel %vm4311, %v4708, %v4707
    %v4710 = vsel %vm182, %v4709, 0
    %4712 = vmatprep.subr.mxu0 0.0
    %4713 = vmatpush1.msra.mxu0 0.0
    %4714 = vmatprep.subr.mxu0 0.0
    %4715 = vmatpush1.msra.mxu0 0.0
    %4716 = vmatprep.subr.mxu0 0.0
    %4717 = vmatpush1.msra.mxu0 0.0
    %4718 = vmatprep.subr.mxu0 0.0
    %4719 = vmatpush1.msra.mxu0 0.0
    %4720 = vmatprep.subr.mxu0 0.0
    %4721 = vmatpush1.msra.mxu0 0.0
    %4722 = vmatprep.subr.mxu0 0.0
    %4723 = vmatpush1.msra.mxu0 0.0
    %4724 = vmatprep.subr.mxu0 0.0
    %4725 = vmatpush1.msra.mxu0 0.0
    %4726 = vmatprep.subr.mxu0 0.0
    %4727 = vmatpush1.msra.mxu0 0.0
    %4728 = vmatprep.subr.mxu0 0.0
    %4729 = vmatpush1.msra.mxu0 0.0
    %4730 = vmatprep.subr.mxu0 0.0
    %4731 = vmatpush1.msra.mxu0 0.0
    %4732 = vmatprep.subr.mxu0 0.0
    %4733 = vmatpush1.msra.mxu0 0.0
    %4734 = vmatprep.subr.mxu0 0.0
    %4735 = vmatpush1.msra.mxu0 0.0
    %4736 = vmatprep.subr.mxu0 0.0
    %4737 = vmatpush1.msra.mxu0 %v4706
    %4738 = vmatprep.subr.mxu0 0.0
    %4739 = vmatpush1.msra.mxu0 %v4705
    %4740 = vmatprep.subr.mxu0 0.0
    %4741 = vmatpush1.msra.mxu0 %v4704
    %4742 = vmatprep.subr.mxu0 0.0
    %4743 = vmatpush1.msra.mxu0 %v4703
    %4744 = vmatprep.subr.mxu0 0.0
    %4745 = vmatpush2.msra.mxu0 0.0
    %4746 = vmatprep.subr.mxu0 0.0
    %4747 = vmatpush2.msra.mxu0 0.0
    %4748 = vmatprep.subr.mxu0 0.0
    %4749 = vmatpush2.msra.mxu0 0.0
    %4750 = vmatprep.subr.mxu0 0.0
    %4751 = vmatpush2.msra.mxu0 0.0
    %4752 = vmatprep.subr.mxu0 0.0
    %4753 = vmatpush2.msra.mxu0 0.0
    %4754 = vmatprep.subr.mxu0 0.0
    %4755 = vmatpush2.msra.mxu0 0.0
    %4756 = vmatprep.subr.mxu0 0.0
    %4757 = vmatpush2.msra.mxu0 0.0
    %4758 = vmatprep.subr.mxu0 0.0
    %4759 = vmatpush2.msra.mxu0 0.0
    %4760 = vmatprep.subr.mxu0 0.0
    %4761 = vmatpush2.msra.mxu0 0.0
    %4762 = vmatprep.subr.mxu0 0.0
    %4763 = vmatpush2.msra.mxu0 0.0
    %4764 = vmatprep.subr.mxu0 0.0
    %4765 = vmatpush2.msra.mxu0 0.0
    %4766 = vmatprep.subr.mxu0 0.0
    %4767 = vmatpush2.msra.mxu0 0.0
    %4768 = vmatprep.subr.mxu0 0.0
    %4769 = vmatpush2.msra.mxu0 0.0
    %4770 = vmatprep.subr.mxu0 0.0
    %4771 = vmatpush2.msra.mxu0 0.0
    %4772 = vmatprep.subr.mxu0 0.0
    %4773 = vmatpush2.msra.mxu0 0.0
    %4774 = vmatprep.subr.mxu0 0.0
    %4775 = vmatpush2.msra.mxu0 0.0
    %4776 = vmatprep.mubr.f32.mxu0 0.0
    %4777 = vmatmul.mubr.f32.gmra.mxu0 %v4710
    %v4778 = vpop.f32.mrf.mxu0
    %v4779 = vadd.f32 0.0, %v4778
    %v4780 = vpop.f32.mrf.mxu0
    %4781 = vdwg.mxu0
    %v4782 = vadd.f32 %v4701, %v4779
    %s4783 = scalar_lea.vmem %s15, 192
    %v4784 = vld [vmem:[%s4783] sm:$0xff]
    %v4785 = vld [vmem:[%s4783 + $0x8] sm:$0xff]
    %v4786 = vld [vmem:[%s4783 + $0x10] sm:$0xff]
    %v4787 = vld [vmem:[%s4783 + $0x18] sm:$0xff]
    %v4788 = vrot.slane %v4295, 6
    %v4789 = vrot.slane %v4296, 5
    %v4790 = vsel %vm4311, %v4789, %v4788
    %v4791 = vsel %vm182, %v4790, 0
    %4793 = vmatprep.subr.mxu0 0.0
    %4794 = vmatpush1.msra.mxu0 0.0
    %4795 = vmatprep.subr.mxu0 0.0
    %4796 = vmatpush1.msra.mxu0 0.0
    %4797 = vmatprep.subr.mxu0 0.0
    %4798 = vmatpush1.msra.mxu0 0.0
    %4799 = vmatprep.subr.mxu0 0.0
    %4800 = vmatpush1.msra.mxu0 0.0
    %4801 = vmatprep.subr.mxu0 0.0
    %4802 = vmatpush1.msra.mxu0 0.0
    %4803 = vmatprep.subr.mxu0 0.0
    %4804 = vmatpush1.msra.mxu0 0.0
    %4805 = vmatprep.subr.mxu0 0.0
    %4806 = vmatpush1.msra.mxu0 0.0
    %4807 = vmatprep.subr.mxu0 0.0
    %4808 = vmatpush1.msra.mxu0 0.0
    %4809 = vmatprep.subr.mxu0 0.0
    %4810 = vmatpush1.msra.mxu0 0.0
    %4811 = vmatprep.subr.mxu0 0.0
    %4812 = vmatpush1.msra.mxu0 0.0
    %4813 = vmatprep.subr.mxu0 0.0
    %4814 = vmatpush1.msra.mxu0 0.0
    %4815 = vmatprep.subr.mxu0 0.0
    %4816 = vmatpush1.msra.mxu0 0.0
    %4817 = vmatprep.subr.mxu0 0.0
    %4818 = vmatpush1.msra.mxu0 %v4787
    %4819 = vmatprep.subr.mxu0 0.0
    %4820 = vmatpush1.msra.mxu0 %v4786
    %4821 = vmatprep.subr.mxu0 0.0
    %4822 = vmatpush1.msra.mxu0 %v4785
    %4823 = vmatprep.subr.mxu0 0.0
    %4824 = vmatpush1.msra.mxu0 %v4784
    %4825 = vmatprep.subr.mxu0 0.0
    %4826 = vmatpush2.msra.mxu0 0.0
    %4827 = vmatprep.subr.mxu0 0.0
    %4828 = vmatpush2.msra.mxu0 0.0
    %4829 = vmatprep.subr.mxu0 0.0
    %4830 = vmatpush2.msra.mxu0 0.0
    %4831 = vmatprep.subr.mxu0 0.0
    %4832 = vmatpush2.msra.mxu0 0.0
    %4833 = vmatprep.subr.mxu0 0.0
    %4834 = vmatpush2.msra.mxu0 0.0
    %4835 = vmatprep.subr.mxu0 0.0
    %4836 = vmatpush2.msra.mxu0 0.0
    %4837 = vmatprep.subr.mxu0 0.0
    %4838 = vmatpush2.msra.mxu0 0.0
    %4839 = vmatprep.subr.mxu0 0.0
    %4840 = vmatpush2.msra.mxu0 0.0
    %4841 = vmatprep.subr.mxu0 0.0
    %4842 = vmatpush2.msra.mxu0 0.0
    %4843 = vmatprep.subr.mxu0 0.0
    %4844 = vmatpush2.msra.mxu0 0.0
    %4845 = vmatprep.subr.mxu0 0.0
    %4846 = vmatpush2.msra.mxu0 0.0
    %4847 = vmatprep.subr.mxu0 0.0
    %4848 = vmatpush2.msra.mxu0 0.0
    %4849 = vmatprep.subr.mxu0 0.0
    %4850 = vmatpush2.msra.mxu0 0.0
    %4851 = vmatprep.subr.mxu0 0.0
    %4852 = vmatpush2.msra.mxu0 0.0
    %4853 = vmatprep.subr.mxu0 0.0
    %4854 = vmatpush2.msra.mxu0 0.0
    %4855 = vmatprep.subr.mxu0 0.0
    %4856 = vmatpush2.msra.mxu0 0.0
    %4857 = vmatprep.mubr.f32.mxu0 0.0
    %4858 = vmatmul.mubr.f32.gmra.mxu0 %v4791
    %v4859 = vpop.f32.mrf.mxu0
    %v4860 = vadd.f32 0.0, %v4859
    %v4861 = vpop.f32.mrf.mxu0
    %4862 = vdwg.mxu0
    %v4863 = vadd.f32 %v4782, %v4860
    %s4864 = scalar_lea.vmem %s15, 224
    %v4865 = vld [vmem:[%s4864] sm:$0xff]
    %v4866 = vld [vmem:[%s4864 + $0x8] sm:$0xff]
    %v4867 = vld [vmem:[%s4864 + $0x10] sm:$0xff]
    %v4868 = vld [vmem:[%s4864 + $0x18] sm:$0xff]
    %v4869 = vrot.slane %v4295, 7
    %v4870 = vrot.slane %v4296, 6
    %v4871 = vsel %vm4311, %v4870, %v4869
    %v4872 = vsel %vm182, %v4871, 0
    %4874 = vmatprep.subr.mxu0 0.0
    %4875 = vmatpush1.msra.mxu0 0.0
    %4876 = vmatprep.subr.mxu0 0.0
    %4877 = vmatpush1.msra.mxu0 0.0
    %4878 = vmatprep.subr.mxu0 0.0
    %4879 = vmatpush1.msra.mxu0 0.0
    %4880 = vmatprep.subr.mxu0 0.0
    %4881 = vmatpush1.msra.mxu0 0.0
    %4882 = vmatprep.subr.mxu0 0.0
    %4883 = vmatpush1.msra.mxu0 0.0
    %4884 = vmatprep.subr.mxu0 0.0
    %4885 = vmatpush1.msra.mxu0 0.0
    %4886 = vmatprep.subr.mxu0 0.0
    %4887 = vmatpush1.msra.mxu0 0.0
    %4888 = vmatprep.subr.mxu0 0.0
    %4889 = vmatpush1.msra.mxu0 0.0
    %4890 = vmatprep.subr.mxu0 0.0
    %4891 = vmatpush1.msra.mxu0 0.0
    %4892 = vmatprep.subr.mxu0 0.0
    %4893 = vmatpush1.msra.mxu0 0.0
    %4894 = vmatprep.subr.mxu0 0.0
    %4895 = vmatpush1.msra.mxu0 0.0
    %4896 = vmatprep.subr.mxu0 0.0
    %4897 = vmatpush1.msra.mxu0 0.0
    %4898 = vmatprep.subr.mxu0 0.0
    %4899 = vmatpush1.msra.mxu0 %v4868
    %4900 = vmatprep.subr.mxu0 0.0
    %4901 = vmatpush1.msra.mxu0 %v4867
    %4902 = vmatprep.subr.mxu0 0.0
    %4903 = vmatpush1.msra.mxu0 %v4866
    %4904 = vmatprep.subr.mxu0 0.0
    %4905 = vmatpush1.msra.mxu0 %v4865
    %4906 = vmatprep.subr.mxu0 0.0
    %4907 = vmatpush2.msra.mxu0 0.0
    %4908 = vmatprep.subr.mxu0 0.0
    %4909 = vmatpush2.msra.mxu0 0.0
    %4910 = vmatprep.subr.mxu0 0.0
    %4911 = vmatpush2.msra.mxu0 0.0
    %4912 = vmatprep.subr.mxu0 0.0
    %4913 = vmatpush2.msra.mxu0 0.0
    %4914 = vmatprep.subr.mxu0 0.0
    %4915 = vmatpush2.msra.mxu0 0.0
    %4916 = vmatprep.subr.mxu0 0.0
    %4917 = vmatpush2.msra.mxu0 0.0
    %4918 = vmatprep.subr.mxu0 0.0
    %4919 = vmatpush2.msra.mxu0 0.0
    %4920 = vmatprep.subr.mxu0 0.0
    %4921 = vmatpush2.msra.mxu0 0.0
    %4922 = vmatprep.subr.mxu0 0.0
    %4923 = vmatpush2.msra.mxu0 0.0
    %4924 = vmatprep.subr.mxu0 0.0
    %4925 = vmatpush2.msra.mxu0 0.0
    %4926 = vmatprep.subr.mxu0 0.0
    %4927 = vmatpush2.msra.mxu0 0.0
    %4928 = vmatprep.subr.mxu0 0.0
    %4929 = vmatpush2.msra.mxu0 0.0
    %4930 = vmatprep.subr.mxu0 0.0
    %4931 = vmatpush2.msra.mxu0 0.0
    %4932 = vmatprep.subr.mxu0 0.0
    %4933 = vmatpush2.msra.mxu0 0.0
    %4934 = vmatprep.subr.mxu0 0.0
    %4935 = vmatpush2.msra.mxu0 0.0
    %4936 = vmatprep.subr.mxu0 0.0
    %4937 = vmatpush2.msra.mxu0 0.0
    %4938 = vmatprep.mubr.f32.mxu0 0.0
    %4939 = vmatmul.mubr.f32.gmra.mxu0 %v4872
    %v4940 = vpop.f32.mrf.mxu0
    %v4941 = vadd.f32 0.0, %v4940
    %v4942 = vpop.f32.mrf.mxu0
    %4943 = vdwg.mxu0
    %v4944 = vadd.f32 %v4863, %v4941
    %v4945 = vld [vmem:[%s16] sm:$0x1]
    %v4947 = vlaneseq
    %v4948 = vshrl.u32 %v4947, 7
    %v4949 = vsub.s32 0, %v4948
    %v4950 = vrot.slane %v4945, %v4949
    %v4952 = vadd.f32 %v4944, %v4950
    %4953 = vst [vmem:[#allocation8] sm:$0x3] %v4952
    // Predicated region
    $region78: #{tpu_custom_call.1} parent=1 // pred_check
      _
    $region79: #{tpu_custom_call.1} parent=1 // pred_check_branch
      %4955 = sbr.rel (0) target = $region81
    $region80: #{tpu_custom_call.1} parent=1 // pred_region
      %s4957 = ssub.s32 256, 256
      %4958 = vsyncadd [#allocation4], %s4957
      %s4959 = sshll.u32 [#allocation7], 4
      %s4960 = int_to_ptr.vmem [resolvable:$true] %s4959
      %4965 = dma.vmem_to_hbm [thread:$0]  %s4960, 256, %s17, [#allocation4], 128, 128, 8
    $region81: #{tpu_custom_call.1} parent=1 // pred_fallthru
      _
    // Predicated region
    $region82: #{tpu_custom_call.1} parent=1 // pred_check
      _
    $region83: #{tpu_custom_call.1} parent=1 // pred_check_branch
      %4967 = sbr.rel (0) target = $region85
    $region84: #{tpu_custom_call.1} parent=1 // pred_region
      %s4969 = ssub.s32 32, 32
      %4970 = vsyncadd [#allocation9], %s4969
      %s4972 = sshll.u32 [#allocation8], 4
      %s4973 = int_to_ptr.vmem [resolvable:$true] %s4972
      %4975 = dma.vmem_to_hbm [thread:$0]  %s4973, 32, %s18, [#allocation9]
    $region85: #{tpu_custom_call.1} parent=1 // pred_fallthru
      _
    // Predicated region
    $region86: #{tpu_custom_call.1} parent=1 // pred_check
      _
    $region87: #{tpu_custom_call.1} parent=1 // pred_check_branch
      %4977 = sbr.rel (0) target = $region89
    $region88: #{tpu_custom_call.1} parent=1 // pred_region
      %4978 = dma.done [#allocation4], 256
    $region89: #{tpu_custom_call.1} parent=1 // pred_fallthru
      _
    // Predicated region
    $region90: #{tpu_custom_call.1} parent=1 // pred_check
      _
    $region91: #{tpu_custom_call.1} parent=1 // pred_check_branch
      %4980 = sbr.rel (0) target = $region93
    $region92: #{tpu_custom_call.1} parent=1 // pred_region
      %4981 = dma.done [#allocation9], 32
    $region93: #{tpu_custom_call.1} parent=1 // pred_fallthru
      _
    %4982 = vsyncpa [#allocation3], 1
    %4983 = vsyncpa [#allocation6], 1
    %4984 = vsyncpa [#allocation4], 1
    %4985 = vsyncpa [#allocation9], 1

</llo_original>
